<compile_context>
chip_gen: v7x
topology: tpu7x:2x2x1
jax: 0.10.0
libtpu: 0.0.40
codegen_flags: <defaults>
</compile_context>

<pallas_src>
import jax
import jax.numpy as jnp
from jax.experimental import pallas as pl
from jax.experimental.pallas import tpu as pltpu

IN_FEATURES = 3072
OUT_FEATURES = 768


def _round_up(x, m):
    return ((x + m - 1) // m) * m


def _linear_kernel(x_ref, w_ref, b_ref, o_ref):
    # Single-shot GEMM tile: (tm, K) @ (K, tn) + (1, tn) bias.
    # Weight tile is VMEM-resident (constant block index across the M axis),
    # so there is no K reduction loop and no accumulator scratch.
    o_ref[...] = (
        jnp.dot(x_ref[...], w_ref[...], preferred_element_type=jnp.float32)
        + b_ref[...]
    )


def prepare_linear2_params(weight, bias):
    """One-time (outside the hot path) parameter layout prep.

    weight: (768, 3072) PyTorch nn.Linear layout -> returned as (3072, 768)
    so the kernel can use the standard lane-dense contraction with no
    in-kernel transpose.  bias -> (1, 768) f32.
    """
    assert weight.shape == (OUT_FEATURES, IN_FEATURES)
    assert bias.shape == (OUT_FEATURES,)
    w_t = jnp.asarray(weight.T, dtype=jnp.float32)          # (K, N)
    b2d = jnp.asarray(bias, dtype=jnp.float32).reshape(1, OUT_FEATURES)
    return w_t, b2d


def linear2_pallas(x, w_t, b2d):
    """y = x @ W.T + b, matching nn.Linear(3072, 768).

    x:   (..., 3072) float32
    w_t: (3072, 768) float32  -- pre-transposed weight from prepare_linear2_params
    b2d: (1, 768)    float32
    returns (..., 768) float32
    """
    *lead, K = x.shape
    assert K == IN_FEATURES, f"expected last dim {IN_FEATURES}, got {K}"
    N = OUT_FEATURES
    assert w_t.shape == (K, N)
    assert b2d.shape == (1, N)

    M = 1
    for d in lead:
        M *= d

    x2d = x.reshape(M, K).astype(jnp.float32)

    # --- M tiling -----------------------------------------------------------
    # Small M: one tile, padded to a sublane multiple (8 for f32).
    # Large M: tm=512 (multiple of 128, keeps VMEM bounded incl. on v7x's
    # 64 MiB part), M padded up to a tile multiple, M axis marked "parallel".
    if M <= 512:
        tm = _round_up(max(M, 1), 8)
        M_pad = tm
    else:
        tm = 512
        M_pad = _round_up(M, tm)
    if M_pad != M:
        x2d = jnp.pad(x2d, ((0, M_pad - M), (0, 0)))
    m_tiles = M_pad // tm

    # --- N tiling -----------------------------------------------------------
    # When M collapses to a single tile, split N in two lane-dense halves
    # (384 = 3*128) so the second TensorCore on v7x has independent work.
    # When M has many tiles, keep N whole so x is streamed exactly once and
    # megacore parallelism comes from the M axis.
    n_tiles = 2 if m_tiles == 1 else 1
    tn = N // n_tiles
    assert tn % 128 == 0

    grid = (n_tiles, m_tiles)  # N outer, M inner -> weight DMA'd once per N tile

    out = pl.pallas_call(
        _linear_kernel,
        out_shape=jax.ShapeDtypeStruct((M_pad, N), jnp.float32),
        grid_spec=pltpu.PrefetchScalarGridSpec(
            num_scalar_prefetch=0,
            grid=grid,
            in_specs=[
                pl.BlockSpec((tm, K), lambda n, m: (m, 0)),   # x tile (full K)
                pl.BlockSpec((K, tn), lambda n, m: (0, n)),   # resident weight tile
                pl.BlockSpec((1, tn), lambda n, m: (0, n)),   # bias tile
            ],
            out_specs=pl.BlockSpec((tm, tn), lambda n, m: (m, n)),
        ),
        compiler_params=pltpu.CompilerParams(
            dimension_semantics=("parallel", "parallel"),
            vmem_limit_bytes=48 * 1024 * 1024,
        ),
    )(x2d, w_t, b2d)

    if M_pad != M:
        out = out[:M]
    return out.reshape(*lead, N)


if __name__ == "__main__":
    key = jax.random.PRNGKey(0)
    kx, kw, kb = jax.random.split(key, 3)

    # Small leading dims (batch=2, seq=8); feature dims fixed by the module.
    x = jax.random.normal(kx, (2, 8, IN_FEATURES), dtype=jnp.float32)

    # Deterministic param init mimicking PyTorch's default uniform(-1/sqrt(K), 1/sqrt(K)).
    bound = 1.0 / (IN_FEATURES ** 0.5)
    weight = jax.random.uniform(
        kw, (OUT_FEATURES, IN_FEATURES), dtype=jnp.float32,
        minval=-bound, maxval=bound)
    bias = jax.random.uniform(
        kb, (OUT_FEATURES,), dtype=jnp.float32, minval=-bound, maxval=bound)

    # One-time parameter layout prep (outside the per-call hot path).
    w_t, b2d = prepare_linear2_params(weight, bias)
    w_t, b2d = jax.block_until_ready((w_t, b2d))

    y = linear2_pallas(x, w_t, b2d)
    y = jax.block_until_ready(y)

    # Correctness check vs plain-JAX reference of nn.Linear semantics.
    y_ref = x @ weight.T + bias
    assert y.shape == (2, 8, OUT_FEATURES)
    assert jnp.allclose(y, y_ref, atol=1e-3, rtol=1e-3)

    print("KERNEL_OK")
</pallas_src>

<mosaic_0001>
module attributes {stable_mosaic.version = 11 : i64} {
  func.func @_linear_kernel(%arg0: i32, %arg1: i32, %arg2: memref<16x3072xf32, #tpu.memory_space<vmem>>, %arg3: memref<3072x384xf32, #tpu.memory_space<vmem>>, %arg4: memref<1x384xf32, #tpu.memory_space<vmem>>, %arg5: memref<16x384xf32, #tpu.memory_space<vmem>>) attributes {dimension_semantics = [#tpu.dimension_semantics<parallel>, #tpu.dimension_semantics<parallel>], iteration_bounds = array<i64: 2, 1>, scalar_prefetch = 0 : i64, scratch_operands = 0 : i64, tpu.core_type = #tpu.core_type<tc>, window_params = [{transform_indices = @transform_0, window_bounds = array<i64: 16, 3072>}, {transform_indices = @transform_1, window_bounds = array<i64: 3072, 384>}, {transform_indices = @transform_2, window_bounds = array<i64: 1, 384>}, {transform_indices = @transform_3, window_bounds = array<i64: 16, 384>}]} {
    %c0 = arith.constant 0 : index
    %c0_0 = arith.constant 0 : index
    %0 = vector.load %arg2[%c0, %c0_0] : memref<16x3072xf32, #tpu.memory_space<vmem>>, vector<16x3072xf32>
    %c0_1 = arith.constant 0 : index
    %c0_2 = arith.constant 0 : index
    %1 = vector.load %arg3[%c0_1, %c0_2] : memref<3072x384xf32, #tpu.memory_space<vmem>>, vector<3072x384xf32>
    %cst = arith.constant dense<0.000000e+00> : vector<16x384xf32>
    %2 = tpu.matmul %0, %1, %cst {dimension_numbers = #tpu.dot_dimension_numbers<[1], [0], [0], [1], [0, 0, 1, 1], [], []>} : vector<16x3072xf32>, vector<3072x384xf32>, vector<16x384xf32> -> vector<16x384xf32>
    %c0_3 = arith.constant 0 : index
    %c0_4 = arith.constant 0 : index
    %3 = vector.load %arg4[%c0_3, %c0_4] : memref<1x384xf32, #tpu.memory_space<vmem>>, vector<1x384xf32>
    %4 = vector.broadcast %3 : vector<1x384xf32> to vector<16x384xf32>
    %5 = arith.addf %2, %4 : vector<16x384xf32>
    %c0_5 = arith.constant 0 : index
    %c0_6 = arith.constant 0 : index
    %6 = vector.load %arg5[%c0_5, %c0_6] : memref<16x384xf32, #tpu.memory_space<vmem>>, vector<16x384xf32>
    tpu.vector_store %arg5[%c0_5, %c0_6], %5 {strides = array<i32>} : memref<16x384xf32, #tpu.memory_space<vmem>>, vector<16x384xf32>,
    return
  }
  func.func @transform_0(%arg0: i32, %arg1: i32) -> (i32, i32) {
    %c0_i32 = arith.constant 0 : i32
    %c0_i32_0 = arith.constant 0 : i32
    return %arg1, %c0_i32 : i32, i32
  }
  func.func @transform_1(%arg0: i32, %arg1: i32) -> (i32, i32) {
    %c0_i32 = arith.constant 0 : i32
    %c0_i32_0 = arith.constant 0 : i32
    return %c0_i32, %arg0 : i32, i32
  }
  func.func @transform_2(%arg0: i32, %arg1: i32) -> (i32, i32) {
    %c0_i32 = arith.constant 0 : i32
    %c0_i32_0 = arith.constant 0 : i32
    return %c0_i32, %arg0 : i32, i32
  }
  func.func @transform_3(%arg0: i32, %arg1: i32) -> (i32, i32) {
    %c0_i32 = arith.constant 0 : i32
    return %arg1, %arg0 : i32, i32
  }
}

</mosaic_0001>

<llo_original>
// kernel: tpu_custom_call.1
$region0: #{tpu_custom_call.1}
  #allocation0 [shape = 'u32[]', space=smem, size = 0x4, offset = 0x4, fixed_abs, tag = 'smem constant byte address 0x4 - core index']
  #allocation1 [shape = 'u32[144,128]{1,0:T(1,128)}', space=vmem, size = 0x12000, scoped, tag = 'internal scratch']
  %s0 = inlined_call_operand.hbm [shape: f32[16,3072], index: 0, kind: input, shape index: {}]
  %s1 = inlined_call_operand.hbm [shape: f32[3072,768], index: 1, kind: input, shape index: {}]
  %s2 = inlined_call_operand.hbm [shape: f32[1,768], index: 2, kind: input, shape index: {}]
  %s3 = inlined_call_operand.hbm [shape: f32[16,768], index: 3, kind: output, shape index: {}]
  %s4 = sld [smem:[#allocation0]]
  $region57: #{tpu_custom_call.1} parent=0
    _
  %s6 = ssub.s32 1, %s4
  %s7 = scalar_select 0, %s6, %s4
  $region1: #{tpu_custom_call.1} parent=0
    #allocation2 [shape = 'u8[196608]{0}', space=vmem, size = 0x30000, scoped, tag = 'input window, operand 0, single buffered']
    #allocation3 [shape = 's32[2]{0}', space=sflag, size = 0x8, scoped, tag = 'scoped memory for tpu_custom_call.1']
    #allocation4 [shape = 's32[2]{0}', space=sflag, size = 0x8, scoped, tag = 'scoped memory for tpu_custom_call.1']
    #allocation5 [shape = 'u8[9437184]{0}', space=vmem, size = 0x900000, scoped, tag = 'input window, operand 1']
    #allocation6 [shape = 's32[2]{0}', space=sflag, size = 0x8, scoped, tag = 'scoped memory for tpu_custom_call.1']
    #allocation7 [shape = 'u8[3072]{0}', space=vmem, size = 0xc00, scoped, tag = 'input window, operand 2']
    #allocation8 [shape = 'u8[49152]{0}', space=vmem, size = 0xc000, scoped, tag = 'output window, operand 0']
    %8 = vsyncpa [#allocation3], 0
    %9 = vsyncpa [#allocation6], 0
    %s10 = scalar_lea.sflag [#allocation6], 1
    %11 = vsyncpa %s10, 0
    %12 = vsyncpa [#allocation4], 0
    %s13 = scalar_lea.sflag [#allocation4], 1
    %14 = vsyncpa %s13, 0
    loop: start=0, step=1, limit=4
    $region2: #{tpu_custom_call.1} parent=1 // loop_pre_header
      _
    $region3: #{tpu_custom_call.1} parent=1 // loop_header
      %s16 = sphi 0, %s20
      %p17 = scmp.ge.s32.totalorder %s16, 4
      %s23 = sphi 0, %s35
      %s24 = sphi 0, %s31
      %s25 = sphi 0, %s23
      %s26 = sphi 0, %s24
      %s27 = sphi 0, %s25
      %s28 = sphi 0, %s26
      %s38 = sphi 0, %s40
      %s41 = sphi 0, %s38
      %s42 = sphi 0, %s41
      %s58 = sphi 0, %s42
      %s64 = sphi 0, %s66
      %s67 = sphi 0, %s64
      %s68 = sphi 0, %s67
      %s84 = sphi 0, %s68
      %s90 = sphi 0, %s92
      %s93 = sphi 0, %s90
      %s94 = sphi 0, %s93
      %s110 = sphi 0, %s94
      %s118 = sphi 0, %s120
      %s121 = sphi 0, %s118
      %s122 = sphi 0, %s121
      %s138 = sphi 0, %s122
    $region4: #{tpu_custom_call.1} parent=1 // loop_header_branch
      %19 = sbr.rel (%p17) target = $region8
    $region5: #{tpu_custom_call.1} parent=1 // loop_body
      %s21 = ssub.s32 %s16, 1
      %s22 = ssub.s32 %s16, 2
      %s29 = sadd.s32 1, %s24
      %p30 = scmp.ge.s32.totalorder %s29, 1
      %s31 = scalar_select %p30, 0, %s29
      %s32 = sadd.s32 1, %s23
      %s33 = scalar_select %p30, %s32, %s23
      %p34 = scmp.ge.s32.totalorder %s33, 2
      %s35 = scalar_select %p34, 0, %s33
      %s36 = ssub.s32 %s24, %s31
      %p37 = scmp.eq.s32.totalorder %s36, 0
      %s39 = sadd.s32 %s38, 1
      %s40 = scalar_select %p37, %s38, %s39
      %p43 = pneg %p37
      %p44 = scmp.eq.s32.totalorder %s16, 1
      %p45 = por %p43, %p44
      %p46 = scmp.ne.s32.totalorder %s38, %s41
      %p47 = scmp.eq.s32.totalorder %s16, 0
      %p48 = por %p46, %p47
      %p49 = scmp.ne.s32.totalorder %s38, %s41
      %p50 = scmp.eq.s32.totalorder %s21, 1
      %p51 = por %p49, %p50
      %p52 = scmp.ne.s32.totalorder %s41, %s42
      %p53 = scmp.eq.s32.totalorder %s21, 0
      %p54 = por %p52, %p53
      %p55 = scmp.ne.s32.totalorder %s41, %s42
      %p56 = scmp.eq.s32.totalorder %s22, 1
      %p57 = por %p55, %p56
      %p59 = scmp.ne.s32.totalorder %s42, %s58
      %p60 = scmp.eq.s32.totalorder %s22, 0
      %p61 = por %p59, %p60
      %s62 = ssub.s32 %s23, %s35
      %p63 = scmp.eq.s32.totalorder %s62, 0
      %s65 = sadd.s32 %s64, 1
      %s66 = scalar_select %p63, %s64, %s65
      %p69 = pneg %p63
      %p70 = scmp.eq.s32.totalorder %s16, 1
      %p71 = por %p69, %p70
      %p72 = scmp.ne.s32.totalorder %s64, %s67
      %p73 = scmp.eq.s32.totalorder %s16, 0
      %p74 = por %p72, %p73
      %p75 = scmp.ne.s32.totalorder %s64, %s67
      %p76 = scmp.eq.s32.totalorder %s21, 1
      %p77 = por %p75, %p76
      %p78 = scmp.ne.s32.totalorder %s67, %s68
      %p79 = scmp.eq.s32.totalorder %s21, 0
      %p80 = por %p78, %p79
      %p81 = scmp.ne.s32.totalorder %s67, %s68
      %p82 = scmp.eq.s32.totalorder %s22, 1
      %p83 = por %p81, %p82
      %p85 = scmp.ne.s32.totalorder %s68, %s84
      %p86 = scmp.eq.s32.totalorder %s22, 0
      %p87 = por %p85, %p86
      %s88 = ssub.s32 %s23, %s35
      %p89 = scmp.eq.s32.totalorder %s88, 0
      %s91 = sadd.s32 %s90, 1
      %s92 = scalar_select %p89, %s90, %s91
      %p95 = pneg %p89
      %p96 = scmp.eq.s32.totalorder %s16, 1
      %p97 = por %p95, %p96
      %p98 = scmp.ne.s32.totalorder %s90, %s93
      %p99 = scmp.eq.s32.totalorder %s16, 0
      %p100 = por %p98, %p99
      %p101 = scmp.ne.s32.totalorder %s90, %s93
      %p102 = scmp.eq.s32.totalorder %s21, 1
      %p103 = por %p101, %p102
      %p104 = scmp.ne.s32.totalorder %s93, %s94
      %p105 = scmp.eq.s32.totalorder %s21, 0
      %p106 = por %p104, %p105
      %p107 = scmp.ne.s32.totalorder %s93, %s94
      %p108 = scmp.eq.s32.totalorder %s22, 1
      %p109 = por %p107, %p108
      %p111 = scmp.ne.s32.totalorder %s94, %s110
      %p112 = scmp.eq.s32.totalorder %s22, 0
      %p113 = por %p111, %p112
      %s114 = ssub.s32 %s24, %s31
      %s115 = ssub.s32 %s23, %s35
      %s116 = sor.u32 %s114, %s115
      %p117 = scmp.eq.s32.totalorder %s116, 0
      %s119 = sadd.s32 %s118, 1
      %s120 = scalar_select %p117, %s118, %s119
      %p123 = pneg %p117
      %p124 = scmp.eq.s32.totalorder %s16, 1
      %p125 = por %p123, %p124
      %p126 = scmp.ne.s32.totalorder %s118, %s121
      %p127 = scmp.eq.s32.totalorder %s16, 0
      %p128 = por %p126, %p127
      %p129 = scmp.ne.s32.totalorder %s118, %s121
      %p130 = scmp.eq.s32.totalorder %s21, 1
      %p131 = por %p129, %p130
      %p132 = scmp.ne.s32.totalorder %s121, %s122
      %p133 = scmp.eq.s32.totalorder %s21, 0
      %p134 = por %p132, %p133
      %p135 = scmp.ne.s32.totalorder %s121, %s122
      %p136 = scmp.eq.s32.totalorder %s22, 1
      %p137 = por %p135, %p136
      %p139 = scmp.ne.s32.totalorder %s122, %s138
      %p140 = scmp.eq.s32.totalorder %s22, 0
      %p141 = por %p139, %p140
      %p142 = scmp.le.s32.totalorder 1, %s16
      %p143 = scmp.lt.s32.totalorder %s16, 3
      %p144 = pnand %p142, %p143
      %p145 = pneg %p144
      // Predicated region
      $region9: #{tpu_custom_call.1} parent=5 // pred_check
        _
      $region10: #{tpu_custom_call.1} parent=5 // pred_check_branch
        %147 = sbr.rel (%p144) target = $region12
      $region11: #{tpu_custom_call.1} parent=5 // pred_region
        %s148 = ssub.s32 %s16, 1
        // Predicated region
        $region13: #{tpu_custom_call.1} parent=11 // pred_check
          %p149 = pneg %p54
        $region14: #{tpu_custom_call.1} parent=11 // pred_check_branch
          %151 = sbr.rel (%p149) target = $region16
        $region15: #{tpu_custom_call.1} parent=11 // pred_region
          %s152 = smul.u32 2, %s26
          %s154 = ssub.s32 6144, 6144
          %155 = vsyncadd [#allocation3], %s154
          %s156 = smul.addr %s152, 24
          %s157 = smul.addr %s156, 128
          %s158 = scalar_lea.hbm %s0, %s157
          %s159 = sshll.u32 [#allocation2], 4
          %s160 = int_to_ptr.vmem [resolvable:$true] %s159
          %165 = dma.hbm_to_vmem [thread:$0]  %s158, 6144, %s160, [#allocation3], 3072, 3072, 192
        $region16: #{tpu_custom_call.1} parent=11 // pred_fallthru
          _
      $region12: #{tpu_custom_call.1} parent=5 // pred_fallthru
        _
      %p166 = scmp.lt.s32.totalorder %s16, 2
      // Predicated region
      $region17: #{tpu_custom_call.1} parent=5 // pred_check
        %p167 = pneg %p166
      $region18: #{tpu_custom_call.1} parent=5 // pred_check_branch
        %169 = sbr.rel (%p167) target = $region20
      $region19: #{tpu_custom_call.1} parent=5 // pred_region
        // Predicated region
        $region21: #{tpu_custom_call.1} parent=19 // pred_check
          %p170 = pneg %p74
        $region22: #{tpu_custom_call.1} parent=19 // pred_check_branch
          %172 = sbr.rel (%p170) target = $region24
        $region23: #{tpu_custom_call.1} parent=19 // pred_region
          %s173 = sand.u32 %s16, 1
          %s174 = scalar_lea.sflag [#allocation6], %s173
          %s175 = sand.u32 %s64, 1
          %s176 = smul.addr %s175, 9216
          %s177 = scalar_lea.vmem [#allocation5], %s176
          %s178 = smul.u32 3, %s23
          %s180 = ssub.s32 147456, 147456
          %181 = vsyncadd %s174, %s180
          %s182 = smul.addr %s178, 128
          %s183 = scalar_lea.hbm %s1, %s182
          %s184 = sshll.u32 %s177, 4
          %s185 = int_to_ptr.vmem [resolvable:$true] %s184
          %190 = dma.hbm_to_vmem [thread:$0]  %s183, 147456, %s185, %s174, 768, 384, 24
        $region24: #{tpu_custom_call.1} parent=19 // pred_fallthru
          _
        // Predicated region
        $region25: #{tpu_custom_call.1} parent=19 // pred_check
          %p191 = pneg %p100
        $region26: #{tpu_custom_call.1} parent=19 // pred_check_branch
          %193 = sbr.rel (%p191) target = $region28
        $region27: #{tpu_custom_call.1} parent=19 // pred_region
          %s194 = sand.u32 %s16, 1
          %s195 = scalar_lea.sflag [#allocation6], %s194
          %s196 = sand.u32 %s90, 1
          %s197 = smul.addr %s196, 3
          %s198 = scalar_lea.vmem [#allocation7], %s197
          %s199 = smul.u32 3, %s23
          %s201 = ssub.s32 48, 48
          %202 = vsyncadd %s195, %s201
          %s203 = smul.addr %s199, 16
          %s204 = scalar_lea.hbm %s2, %s203
          %s206 = sshll.u32 %s198, 4
          %s207 = int_to_ptr.vmem [resolvable:$true] %s206
          %209 = dma.hbm_to_vmem [thread:$0]  %s204, 48, %s207, %s195
        $region28: #{tpu_custom_call.1} parent=19 // pred_fallthru
          _
      $region20: #{tpu_custom_call.1} parent=5 // pred_fallthru
        _
      %p210 = scmp.le.s32.totalorder 1, %s16
      %p211 = scmp.lt.s32.totalorder %s16, 3
      %p212 = pnand %p210, %p211
      %p213 = pneg %p212
      // Predicated region
      $region29: #{tpu_custom_call.1} parent=5 // pred_check
        _
      $region30: #{tpu_custom_call.1} parent=5 // pred_check_branch
        %215 = sbr.rel (%p212) target = $region32
      $region31: #{tpu_custom_call.1} parent=5 // pred_region
        %s216 = ssub.s32 %s16, 1
        // Predicated region
        $region33: #{tpu_custom_call.1} parent=31 // pred_check
          %p217 = pneg %p54
        $region34: #{tpu_custom_call.1} parent=31 // pred_check_branch
          %219 = sbr.rel (%p217) target = $region36
        $region35: #{tpu_custom_call.1} parent=31 // pred_region
          %220 = dma.done [#allocation3], 6144
        $region36: #{tpu_custom_call.1} parent=31 // pred_fallthru
          _
        %s221 = sand.u32 %s21, 1
        %s222 = scalar_lea.sflag [#allocation6], %s221
        %s223 = sand.u32 %s67, 1
        %s224 = smul.addr %s223, 9216
        %s225 = scalar_lea.vmem [#allocation5], %s224
        // Predicated region
        $region37: #{tpu_custom_call.1} parent=31 // pred_check
          %p226 = pneg %p80
        $region38: #{tpu_custom_call.1} parent=31 // pred_check_branch
          %228 = sbr.rel (%p226) target = $region40
        $region39: #{tpu_custom_call.1} parent=31 // pred_region
          %229 = dma.done %s222, 147456
        $region40: #{tpu_custom_call.1} parent=31 // pred_fallthru
          _
        %s230 = sand.u32 %s21, 1
        %s231 = scalar_lea.sflag [#allocation6], %s230
        %s232 = sand.u32 %s93, 1
        %s233 = smul.addr %s232, 3
        %s234 = scalar_lea.vmem [#allocation7], %s233
        // Predicated region
        $region41: #{tpu_custom_call.1} parent=31 // pred_check
          %p235 = pneg %p106
        $region42: #{tpu_custom_call.1} parent=31 // pred_check_branch
          %237 = sbr.rel (%p235) target = $region44
        $region43: #{tpu_custom_call.1} parent=31 // pred_region
          %238 = dma.done %s231, 48
        $region44: #{tpu_custom_call.1} parent=31 // pred_fallthru
          _
        %p239 = pneg %p54
        %p240 = pneg %p51
        %s241 = sand.u32 %s21, 1
        %s242 = scalar_lea.sflag [#allocation6], %s241
        %s243 = sand.u32 %s67, 1
        %s244 = smul.addr %s243, 9216
        %s245 = scalar_lea.vmem [#allocation5], %s244
        %p246 = pneg %p80
        %p247 = pneg %p77
        %s248 = sand.u32 %s21, 1
        %s249 = scalar_lea.sflag [#allocation6], %s248
        %s250 = sand.u32 %s93, 1
        %s251 = smul.addr %s250, 3
        %s252 = scalar_lea.vmem [#allocation7], %s251
        %p253 = pneg %p106
        %p254 = pneg %p103
        %p255 = pneg %p134
        %p256 = pneg %p131
        %s257 = sand.u32 %s121, 1
        %s258 = scalar_lea.sflag [#allocation4], %s257
        %s259 = sand.u32 %s121, 1
        %s260 = smul.addr %s259, 48
        %s261 = scalar_lea.vmem [#allocation8], %s260
        %s262 = smul.u32 2, %s26
        %s263 = smul.u32 3, %s25
        %s264 = smul.u32 3, %s25
        %s265 = smul.u32 2, %s26
        %s266 = smul.u32 3, %s25
        %v267 = vld [vmem:[#allocation2] sm:$0xff]
        %v268 = vld [vmem:[#allocation2 + $0x8] sm:$0xff]
        %v269 = vld [vmem:[#allocation2 + $0x10] sm:$0xff]
        %v270 = vld [vmem:[#allocation2 + $0x18] sm:$0xff]
        %v271 = vld [vmem:[#allocation2 + $0x20] sm:$0xff]
        %v272 = vld [vmem:[#allocation2 + $0x28] sm:$0xff]
        %v273 = vld [vmem:[#allocation2 + $0x30] sm:$0xff]
        %v274 = vld [vmem:[#allocation2 + $0x38] sm:$0xff]
        %v275 = vld [vmem:[#allocation2 + $0x40] sm:$0xff]
        %v276 = vld [vmem:[#allocation2 + $0x48] sm:$0xff]
        %v277 = vld [vmem:[#allocation2 + $0x50] sm:$0xff]
        %v278 = vld [vmem:[#allocation2 + $0x58] sm:$0xff]
        %v279 = vld [vmem:[#allocation2 + $0x60] sm:$0xff]
        %v280 = vld [vmem:[#allocation2 + $0x68] sm:$0xff]
        %v281 = vld [vmem:[#allocation2 + $0x70] sm:$0xff]
        %v282 = vld [vmem:[#allocation2 + $0x78] sm:$0xff]
        %v283 = vld [vmem:[#allocation2 + $0x80] sm:$0xff]
        %v284 = vld [vmem:[#allocation2 + $0x88] sm:$0xff]
        %v285 = vld [vmem:[#allocation2 + $0x90] sm:$0xff]
        %v286 = vld [vmem:[#allocation2 + $0x98] sm:$0xff]
        %v287 = vld [vmem:[#allocation2 + $0xa0] sm:$0xff]
        %v288 = vld [vmem:[#allocation2 + $0xa8] sm:$0xff]
        %v289 = vld [vmem:[#allocation2 + $0xb0] sm:$0xff]
        %v290 = vld [vmem:[#allocation2 + $0xb8] sm:$0xff]
        %v291 = vld [vmem:[#allocation2 + $0xc0] sm:$0xff]
        %v292 = vld [vmem:[#allocation2 + $0xc8] sm:$0xff]
        %v293 = vld [vmem:[#allocation2 + $0xd0] sm:$0xff]
        %v294 = vld [vmem:[#allocation2 + $0xd8] sm:$0xff]
        %v295 = vld [vmem:[#allocation2 + $0xe0] sm:$0xff]
        %v296 = vld [vmem:[#allocation2 + $0xe8] sm:$0xff]
        %v297 = vld [vmem:[#allocation2 + $0xf0] sm:$0xff]
        %v298 = vld [vmem:[#allocation2 + $0xf8] sm:$0xff]
        %v299 = vld [vmem:[#allocation2 + $0x100] sm:$0xff]
        %v300 = vld [vmem:[#allocation2 + $0x108] sm:$0xff]
        %v301 = vld [vmem:[#allocation2 + $0x110] sm:$0xff]
        %v302 = vld [vmem:[#allocation2 + $0x118] sm:$0xff]
        %v303 = vld [vmem:[#allocation2 + $0x120] sm:$0xff]
        %v304 = vld [vmem:[#allocation2 + $0x128] sm:$0xff]
        %v305 = vld [vmem:[#allocation2 + $0x130] sm:$0xff]
        %v306 = vld [vmem:[#allocation2 + $0x138] sm:$0xff]
        %v307 = vld [vmem:[#allocation2 + $0x140] sm:$0xff]
        %v308 = vld [vmem:[#allocation2 + $0x148] sm:$0xff]
        %v309 = vld [vmem:[#allocation2 + $0x150] sm:$0xff]
        %v310 = vld [vmem:[#allocation2 + $0x158] sm:$0xff]
        %v311 = vld [vmem:[#allocation2 + $0x160] sm:$0xff]
        %v312 = vld [vmem:[#allocation2 + $0x168] sm:$0xff]
        %v313 = vld [vmem:[#allocation2 + $0x170] sm:$0xff]
        %v314 = vld [vmem:[#allocation2 + $0x178] sm:$0xff]
        %v315 = vld [vmem:[%s225] sm:$0xff]
        %v316 = vld [vmem:[%s225 + $0x8] sm:$0xff]
        %v317 = vld [vmem:[%s225 + $0x10] sm:$0xff]
        %v318 = vld [vmem:[%s225 + $0x18] sm:$0xff]
        %v319 = vld [vmem:[%s225 + $0x20] sm:$0xff]
        %v320 = vld [vmem:[%s225 + $0x28] sm:$0xff]
        %v321 = vld [vmem:[%s225 + $0x30] sm:$0xff]
        %v322 = vld [vmem:[%s225 + $0x38] sm:$0xff]
        %v323 = vld [vmem:[%s225 + $0x40] sm:$0xff]
        %v324 = vld [vmem:[%s225 + $0x48] sm:$0xff]
        %v325 = vld [vmem:[%s225 + $0x50] sm:$0xff]
        %v326 = vld [vmem:[%s225 + $0x58] sm:$0xff]
        %v327 = vld [vmem:[%s225 + $0x60] sm:$0xff]
        %v328 = vld [vmem:[%s225 + $0x68] sm:$0xff]
        %v329 = vld [vmem:[%s225 + $0x70] sm:$0xff]
        %v330 = vld [vmem:[%s225 + $0x78] sm:$0xff]
        %v331 = vld [vmem:[%s225 + $0x80] sm:$0xff]
        %v332 = vld [vmem:[%s225 + $0x88] sm:$0xff]
        %v333 = vld [vmem:[%s225 + $0x90] sm:$0xff]
        %v334 = vld [vmem:[%s225 + $0x98] sm:$0xff]
        %v335 = vld [vmem:[%s225 + $0xa0] sm:$0xff]
        %v336 = vld [vmem:[%s225 + $0xa8] sm:$0xff]
        %v337 = vld [vmem:[%s225 + $0xb0] sm:$0xff]
        %v338 = vld [vmem:[%s225 + $0xb8] sm:$0xff]
        %v339 = vld [vmem:[%s225 + $0xc0] sm:$0xff]
        %v340 = vld [vmem:[%s225 + $0xc8] sm:$0xff]
        %v341 = vld [vmem:[%s225 + $0xd0] sm:$0xff]
        %v342 = vld [vmem:[%s225 + $0xd8] sm:$0xff]
        %v343 = vld [vmem:[%s225 + $0xe0] sm:$0xff]
        %v344 = vld [vmem:[%s225 + $0xe8] sm:$0xff]
        %v345 = vld [vmem:[%s225 + $0xf0] sm:$0xff]
        %v346 = vld [vmem:[%s225 + $0xf8] sm:$0xff]
        %v347 = vld [vmem:[%s225 + $0x100] sm:$0xff]
        %v348 = vld [vmem:[%s225 + $0x108] sm:$0xff]
        %v349 = vld [vmem:[%s225 + $0x110] sm:$0xff]
        %v350 = vld [vmem:[%s225 + $0x118] sm:$0xff]
        %v351 = vld [vmem:[%s225 + $0x120] sm:$0xff]
        %v352 = vld [vmem:[%s225 + $0x128] sm:$0xff]
        %v353 = vld [vmem:[%s225 + $0x130] sm:$0xff]
        %v354 = vld [vmem:[%s225 + $0x138] sm:$0xff]
        %v355 = vld [vmem:[%s225 + $0x140] sm:$0xff]
        %v356 = vld [vmem:[%s225 + $0x148] sm:$0xff]
        %v357 = vld [vmem:[%s225 + $0x150] sm:$0xff]
        %v358 = vld [vmem:[%s225 + $0x158] sm:$0xff]
        %v359 = vld [vmem:[%s225 + $0x160] sm:$0xff]
        %v360 = vld [vmem:[%s225 + $0x168] sm:$0xff]
        %v361 = vld [vmem:[%s225 + $0x170] sm:$0xff]
        %v362 = vld [vmem:[%s225 + $0x178] sm:$0xff]
        %v363 = vld [vmem:[%s225 + $0x180] sm:$0xff]
        %v364 = vld [vmem:[%s225 + $0x188] sm:$0xff]
        %v365 = vld [vmem:[%s225 + $0x190] sm:$0xff]
        %v366 = vld [vmem:[%s225 + $0x198] sm:$0xff]
        %v367 = vld [vmem:[%s225 + $0x1a0] sm:$0xff]
        %v368 = vld [vmem:[%s225 + $0x1a8] sm:$0xff]
        %v369 = vld [vmem:[%s225 + $0x1b0] sm:$0xff]
        %v370 = vld [vmem:[%s225 + $0x1b8] sm:$0xff]
        %v371 = vld [vmem:[%s225 + $0x1c0] sm:$0xff]
        %v372 = vld [vmem:[%s225 + $0x1c8] sm:$0xff]
        %v373 = vld [vmem:[%s225 + $0x1d0] sm:$0xff]
        %v374 = vld [vmem:[%s225 + $0x1d8] sm:$0xff]
        %v375 = vld [vmem:[%s225 + $0x1e0] sm:$0xff]
        %v376 = vld [vmem:[%s225 + $0x1e8] sm:$0xff]
        %v377 = vld [vmem:[%s225 + $0x1f0] sm:$0xff]
        %v378 = vld [vmem:[%s225 + $0x1f8] sm:$0xff]
        %v379 = vld [vmem:[%s225 + $0x200] sm:$0xff]
        %v380 = vld [vmem:[%s225 + $0x208] sm:$0xff]
        %v381 = vld [vmem:[%s225 + $0x210] sm:$0xff]
        %v382 = vld [vmem:[%s225 + $0x218] sm:$0xff]
        %v383 = vld [vmem:[%s225 + $0x220] sm:$0xff]
        %v384 = vld [vmem:[%s225 + $0x228] sm:$0xff]
        %v385 = vld [vmem:[%s225 + $0x230] sm:$0xff]
        %v386 = vld [vmem:[%s225 + $0x238] sm:$0xff]
        %v387 = vld [vmem:[%s225 + $0x240] sm:$0xff]
        %v388 = vld [vmem:[%s225 + $0x248] sm:$0xff]
        %v389 = vld [vmem:[%s225 + $0x250] sm:$0xff]
        %v390 = vld [vmem:[%s225 + $0x258] sm:$0xff]
        %v391 = vld [vmem:[%s225 + $0x260] sm:$0xff]
        %v392 = vld [vmem:[%s225 + $0x268] sm:$0xff]
        %v393 = vld [vmem:[%s225 + $0x270] sm:$0xff]
        %v394 = vld [vmem:[%s225 + $0x278] sm:$0xff]
        %v395 = vld [vmem:[%s225 + $0x280] sm:$0xff]
        %v396 = vld [vmem:[%s225 + $0x288] sm:$0xff]
        %v397 = vld [vmem:[%s225 + $0x290] sm:$0xff]
        %v398 = vld [vmem:[%s225 + $0x298] sm:$0xff]
        %v399 = vld [vmem:[%s225 + $0x2a0] sm:$0xff]
        %v400 = vld [vmem:[%s225 + $0x2a8] sm:$0xff]
        %v401 = vld [vmem:[%s225 + $0x2b0] sm:$0xff]
        %v402 = vld [vmem:[%s225 + $0x2b8] sm:$0xff]
        %v403 = vld [vmem:[%s225 + $0x2c0] sm:$0xff]
        %v404 = vld [vmem:[%s225 + $0x2c8] sm:$0xff]
        %v405 = vld [vmem:[%s225 + $0x2d0] sm:$0xff]
        %v406 = vld [vmem:[%s225 + $0x2d8] sm:$0xff]
        %v407 = vld [vmem:[%s225 + $0x2e0] sm:$0xff]
        %v408 = vld [vmem:[%s225 + $0x2e8] sm:$0xff]
        %v409 = vld [vmem:[%s225 + $0x2f0] sm:$0xff]
        %v410 = vld [vmem:[%s225 + $0x2f8] sm:$0xff]
        %v411 = vld [vmem:[%s225 + $0x300] sm:$0xff]
        %v412 = vld [vmem:[%s225 + $0x308] sm:$0xff]
        %v413 = vld [vmem:[%s225 + $0x310] sm:$0xff]
        %v414 = vld [vmem:[%s225 + $0x318] sm:$0xff]
        %v415 = vld [vmem:[%s225 + $0x320] sm:$0xff]
        %v416 = vld [vmem:[%s225 + $0x328] sm:$0xff]
        %v417 = vld [vmem:[%s225 + $0x330] sm:$0xff]
        %v418 = vld [vmem:[%s225 + $0x338] sm:$0xff]
        %v419 = vld [vmem:[%s225 + $0x340] sm:$0xff]
        %v420 = vld [vmem:[%s225 + $0x348] sm:$0xff]
        %v421 = vld [vmem:[%s225 + $0x350] sm:$0xff]
        %v422 = vld [vmem:[%s225 + $0x358] sm:$0xff]
        %v423 = vld [vmem:[%s225 + $0x360] sm:$0xff]
        %v424 = vld [vmem:[%s225 + $0x368] sm:$0xff]
        %v425 = vld [vmem:[%s225 + $0x370] sm:$0xff]
        %v426 = vld [vmem:[%s225 + $0x378] sm:$0xff]
        %v427 = vld [vmem:[%s225 + $0x380] sm:$0xff]
        %v428 = vld [vmem:[%s225 + $0x388] sm:$0xff]
        %v429 = vld [vmem:[%s225 + $0x390] sm:$0xff]
        %v430 = vld [vmem:[%s225 + $0x398] sm:$0xff]
        %v431 = vld [vmem:[%s225 + $0x3a0] sm:$0xff]
        %v432 = vld [vmem:[%s225 + $0x3a8] sm:$0xff]
        %v433 = vld [vmem:[%s225 + $0x3b0] sm:$0xff]
        %v434 = vld [vmem:[%s225 + $0x3b8] sm:$0xff]
        %v435 = vld [vmem:[%s225 + $0x3c0] sm:$0xff]
        %v436 = vld [vmem:[%s225 + $0x3c8] sm:$0xff]
        %v437 = vld [vmem:[%s225 + $0x3d0] sm:$0xff]
        %v438 = vld [vmem:[%s225 + $0x3d8] sm:$0xff]
        %v439 = vld [vmem:[%s225 + $0x3e0] sm:$0xff]
        %v440 = vld [vmem:[%s225 + $0x3e8] sm:$0xff]
        %v441 = vld [vmem:[%s225 + $0x3f0] sm:$0xff]
        %v442 = vld [vmem:[%s225 + $0x3f8] sm:$0xff]
        %v443 = vld [vmem:[%s225 + $0x400] sm:$0xff]
        %v444 = vld [vmem:[%s225 + $0x408] sm:$0xff]
        %v445 = vld [vmem:[%s225 + $0x410] sm:$0xff]
        %v446 = vld [vmem:[%s225 + $0x418] sm:$0xff]
        %v447 = vld [vmem:[%s225 + $0x420] sm:$0xff]
        %v448 = vld [vmem:[%s225 + $0x428] sm:$0xff]
        %v449 = vld [vmem:[%s225 + $0x430] sm:$0xff]
        %v450 = vld [vmem:[%s225 + $0x438] sm:$0xff]
        %v451 = vld [vmem:[%s225 + $0x440] sm:$0xff]
        %v452 = vld [vmem:[%s225 + $0x448] sm:$0xff]
        %v453 = vld [vmem:[%s225 + $0x450] sm:$0xff]
        %v454 = vld [vmem:[%s225 + $0x458] sm:$0xff]
        %v455 = vld [vmem:[%s225 + $0x460] sm:$0xff]
        %v456 = vld [vmem:[%s225 + $0x468] sm:$0xff]
        %v457 = vld [vmem:[%s225 + $0x470] sm:$0xff]
        %v458 = vld [vmem:[%s225 + $0x478] sm:$0xff]
        %v459 = vld [vmem:[%s225 + $0x480] sm:$0xff]
        %v460 = vld [vmem:[%s225 + $0x488] sm:$0xff]
        %v461 = vld [vmem:[%s225 + $0x490] sm:$0xff]
        %v462 = vld [vmem:[%s225 + $0x498] sm:$0xff]
        %v463 = vld [vmem:[%s225 + $0x4a0] sm:$0xff]
        %v464 = vld [vmem:[%s225 + $0x4a8] sm:$0xff]
        %v465 = vld [vmem:[%s225 + $0x4b0] sm:$0xff]
        %v466 = vld [vmem:[%s225 + $0x4b8] sm:$0xff]
        %v467 = vld [vmem:[%s225 + $0x4c0] sm:$0xff]
        %v468 = vld [vmem:[%s225 + $0x4c8] sm:$0xff]
        %v469 = vld [vmem:[%s225 + $0x4d0] sm:$0xff]
        %v470 = vld [vmem:[%s225 + $0x4d8] sm:$0xff]
        %v471 = vld [vmem:[%s225 + $0x4e0] sm:$0xff]
        %v472 = vld [vmem:[%s225 + $0x4e8] sm:$0xff]
        %v473 = vld [vmem:[%s225 + $0x4f0] sm:$0xff]
        %v474 = vld [vmem:[%s225 + $0x4f8] sm:$0xff]
        %v475 = vld [vmem:[%s225 + $0x500] sm:$0xff]
        %v476 = vld [vmem:[%s225 + $0x508] sm:$0xff]
        %v477 = vld [vmem:[%s225 + $0x510] sm:$0xff]
        %v478 = vld [vmem:[%s225 + $0x518] sm:$0xff]
        %v479 = vld [vmem:[%s225 + $0x520] sm:$0xff]
        %v480 = vld [vmem:[%s225 + $0x528] sm:$0xff]
        %v481 = vld [vmem:[%s225 + $0x530] sm:$0xff]
        %v482 = vld [vmem:[%s225 + $0x538] sm:$0xff]
        %v483 = vld [vmem:[%s225 + $0x540] sm:$0xff]
        %v484 = vld [vmem:[%s225 + $0x548] sm:$0xff]
        %v485 = vld [vmem:[%s225 + $0x550] sm:$0xff]
        %v486 = vld [vmem:[%s225 + $0x558] sm:$0xff]
        %v487 = vld [vmem:[%s225 + $0x560] sm:$0xff]
        %v488 = vld [vmem:[%s225 + $0x568] sm:$0xff]
        %v489 = vld [vmem:[%s225 + $0x570] sm:$0xff]
        %v490 = vld [vmem:[%s225 + $0x578] sm:$0xff]
        %v491 = vld [vmem:[%s225 + $0x580] sm:$0xff]
        %v492 = vld [vmem:[%s225 + $0x588] sm:$0xff]
        %v493 = vld [vmem:[%s225 + $0x590] sm:$0xff]
        %v494 = vld [vmem:[%s225 + $0x598] sm:$0xff]
        %v495 = vld [vmem:[%s225 + $0x5a0] sm:$0xff]
        %v496 = vld [vmem:[%s225 + $0x5a8] sm:$0xff]
        %v497 = vld [vmem:[%s225 + $0x5b0] sm:$0xff]
        %v498 = vld [vmem:[%s225 + $0x5b8] sm:$0xff]
        %v499 = vld [vmem:[%s225 + $0x5c0] sm:$0xff]
        %v500 = vld [vmem:[%s225 + $0x5c8] sm:$0xff]
        %v501 = vld [vmem:[%s225 + $0x5d0] sm:$0xff]
        %v502 = vld [vmem:[%s225 + $0x5d8] sm:$0xff]
        %v503 = vld [vmem:[%s225 + $0x5e0] sm:$0xff]
        %v504 = vld [vmem:[%s225 + $0x5e8] sm:$0xff]
        %v505 = vld [vmem:[%s225 + $0x5f0] sm:$0xff]
        %v506 = vld [vmem:[%s225 + $0x5f8] sm:$0xff]
        %v507 = vld [vmem:[%s225 + $0x600] sm:$0xff]
        %v508 = vld [vmem:[%s225 + $0x608] sm:$0xff]
        %v509 = vld [vmem:[%s225 + $0x610] sm:$0xff]
        %v510 = vld [vmem:[%s225 + $0x618] sm:$0xff]
        %v511 = vld [vmem:[%s225 + $0x620] sm:$0xff]
        %v512 = vld [vmem:[%s225 + $0x628] sm:$0xff]
        %v513 = vld [vmem:[%s225 + $0x630] sm:$0xff]
        %v514 = vld [vmem:[%s225 + $0x638] sm:$0xff]
        %v515 = vld [vmem:[%s225 + $0x640] sm:$0xff]
        %v516 = vld [vmem:[%s225 + $0x648] sm:$0xff]
        %v517 = vld [vmem:[%s225 + $0x650] sm:$0xff]
        %v518 = vld [vmem:[%s225 + $0x658] sm:$0xff]
        %v519 = vld [vmem:[%s225 + $0x660] sm:$0xff]
        %v520 = vld [vmem:[%s225 + $0x668] sm:$0xff]
        %v521 = vld [vmem:[%s225 + $0x670] sm:$0xff]
        %v522 = vld [vmem:[%s225 + $0x678] sm:$0xff]
        %v523 = vld [vmem:[%s225 + $0x680] sm:$0xff]
        %v524 = vld [vmem:[%s225 + $0x688] sm:$0xff]
        %v525 = vld [vmem:[%s225 + $0x690] sm:$0xff]
        %v526 = vld [vmem:[%s225 + $0x698] sm:$0xff]
        %v527 = vld [vmem:[%s225 + $0x6a0] sm:$0xff]
        %v528 = vld [vmem:[%s225 + $0x6a8] sm:$0xff]
        %v529 = vld [vmem:[%s225 + $0x6b0] sm:$0xff]
        %v530 = vld [vmem:[%s225 + $0x6b8] sm:$0xff]
        %v531 = vld [vmem:[%s225 + $0x6c0] sm:$0xff]
        %v532 = vld [vmem:[%s225 + $0x6c8] sm:$0xff]
        %v533 = vld [vmem:[%s225 + $0x6d0] sm:$0xff]
        %v534 = vld [vmem:[%s225 + $0x6d8] sm:$0xff]
        %v535 = vld [vmem:[%s225 + $0x6e0] sm:$0xff]
        %v536 = vld [vmem:[%s225 + $0x6e8] sm:$0xff]
        %v537 = vld [vmem:[%s225 + $0x6f0] sm:$0xff]
        %v538 = vld [vmem:[%s225 + $0x6f8] sm:$0xff]
        %v539 = vld [vmem:[%s225 + $0x700] sm:$0xff]
        %v540 = vld [vmem:[%s225 + $0x708] sm:$0xff]
        %v541 = vld [vmem:[%s225 + $0x710] sm:$0xff]
        %v542 = vld [vmem:[%s225 + $0x718] sm:$0xff]
        %v543 = vld [vmem:[%s225 + $0x720] sm:$0xff]
        %v544 = vld [vmem:[%s225 + $0x728] sm:$0xff]
        %v545 = vld [vmem:[%s225 + $0x730] sm:$0xff]
        %v546 = vld [vmem:[%s225 + $0x738] sm:$0xff]
        %v547 = vld [vmem:[%s225 + $0x740] sm:$0xff]
        %v548 = vld [vmem:[%s225 + $0x748] sm:$0xff]
        %v549 = vld [vmem:[%s225 + $0x750] sm:$0xff]
        %v550 = vld [vmem:[%s225 + $0x758] sm:$0xff]
        %v551 = vld [vmem:[%s225 + $0x760] sm:$0xff]
        %v552 = vld [vmem:[%s225 + $0x768] sm:$0xff]
        %v553 = vld [vmem:[%s225 + $0x770] sm:$0xff]
        %v554 = vld [vmem:[%s225 + $0x778] sm:$0xff]
        %v555 = vld [vmem:[%s225 + $0x780] sm:$0xff]
        %v556 = vld [vmem:[%s225 + $0x788] sm:$0xff]
        %v557 = vld [vmem:[%s225 + $0x790] sm:$0xff]
        %v558 = vld [vmem:[%s225 + $0x798] sm:$0xff]
        %v559 = vld [vmem:[%s225 + $0x7a0] sm:$0xff]
        %v560 = vld [vmem:[%s225 + $0x7a8] sm:$0xff]
        %v561 = vld [vmem:[%s225 + $0x7b0] sm:$0xff]
        %v562 = vld [vmem:[%s225 + $0x7b8] sm:$0xff]
        %v563 = vld [vmem:[%s225 + $0x7c0] sm:$0xff]
        %v564 = vld [vmem:[%s225 + $0x7c8] sm:$0xff]
        %v565 = vld [vmem:[%s225 + $0x7d0] sm:$0xff]
        %v566 = vld [vmem:[%s225 + $0x7d8] sm:$0xff]
        %v567 = vld [vmem:[%s225 + $0x7e0] sm:$0xff]
        %v568 = vld [vmem:[%s225 + $0x7e8] sm:$0xff]
        %v569 = vld [vmem:[%s225 + $0x7f0] sm:$0xff]
        %v570 = vld [vmem:[%s225 + $0x7f8] sm:$0xff]
        %v571 = vld [vmem:[%s225 + $0x800] sm:$0xff]
        %v572 = vld [vmem:[%s225 + $0x808] sm:$0xff]
        %v573 = vld [vmem:[%s225 + $0x810] sm:$0xff]
        %v574 = vld [vmem:[%s225 + $0x818] sm:$0xff]
        %v575 = vld [vmem:[%s225 + $0x820] sm:$0xff]
        %v576 = vld [vmem:[%s225 + $0x828] sm:$0xff]
        %v577 = vld [vmem:[%s225 + $0x830] sm:$0xff]
        %v578 = vld [vmem:[%s225 + $0x838] sm:$0xff]
        %v579 = vld [vmem:[%s225 + $0x840] sm:$0xff]
        %v580 = vld [vmem:[%s225 + $0x848] sm:$0xff]
        %v581 = vld [vmem:[%s225 + $0x850] sm:$0xff]
        %v582 = vld [vmem:[%s225 + $0x858] sm:$0xff]
        %v583 = vld [vmem:[%s225 + $0x860] sm:$0xff]
        %v584 = vld [vmem:[%s225 + $0x868] sm:$0xff]
        %v585 = vld [vmem:[%s225 + $0x870] sm:$0xff]
        %v586 = vld [vmem:[%s225 + $0x878] sm:$0xff]
        %v587 = vld [vmem:[%s225 + $0x880] sm:$0xff]
        %v588 = vld [vmem:[%s225 + $0x888] sm:$0xff]
        %v589 = vld [vmem:[%s225 + $0x890] sm:$0xff]
        %v590 = vld [vmem:[%s225 + $0x898] sm:$0xff]
        %v591 = vld [vmem:[%s225 + $0x8a0] sm:$0xff]
        %v592 = vld [vmem:[%s225 + $0x8a8] sm:$0xff]
        %v593 = vld [vmem:[%s225 + $0x8b0] sm:$0xff]
        %v594 = vld [vmem:[%s225 + $0x8b8] sm:$0xff]
        %v595 = vld [vmem:[%s225 + $0x8c0] sm:$0xff]
        %v596 = vld [vmem:[%s225 + $0x8c8] sm:$0xff]
        %v597 = vld [vmem:[%s225 + $0x8d0] sm:$0xff]
        %v598 = vld [vmem:[%s225 + $0x8d8] sm:$0xff]
        %v599 = vld [vmem:[%s225 + $0x8e0] sm:$0xff]
        %v600 = vld [vmem:[%s225 + $0x8e8] sm:$0xff]
        %v601 = vld [vmem:[%s225 + $0x8f0] sm:$0xff]
        %v602 = vld [vmem:[%s225 + $0x8f8] sm:$0xff]
        %v603 = vld [vmem:[%s225 + $0x900] sm:$0xff]
        %v604 = vld [vmem:[%s225 + $0x908] sm:$0xff]
        %v605 = vld [vmem:[%s225 + $0x910] sm:$0xff]
        %v606 = vld [vmem:[%s225 + $0x918] sm:$0xff]
        %v607 = vld [vmem:[%s225 + $0x920] sm:$0xff]
        %v608 = vld [vmem:[%s225 + $0x928] sm:$0xff]
        %v609 = vld [vmem:[%s225 + $0x930] sm:$0xff]
        %v610 = vld [vmem:[%s225 + $0x938] sm:$0xff]
        %v611 = vld [vmem:[%s225 + $0x940] sm:$0xff]
        %v612 = vld [vmem:[%s225 + $0x948] sm:$0xff]
        %v613 = vld [vmem:[%s225 + $0x950] sm:$0xff]
        %v614 = vld [vmem:[%s225 + $0x958] sm:$0xff]
        %v615 = vld [vmem:[%s225 + $0x960] sm:$0xff]
        %v616 = vld [vmem:[%s225 + $0x968] sm:$0xff]
        %v617 = vld [vmem:[%s225 + $0x970] sm:$0xff]
        %v618 = vld [vmem:[%s225 + $0x978] sm:$0xff]
        %v619 = vld [vmem:[%s225 + $0x980] sm:$0xff]
        %v620 = vld [vmem:[%s225 + $0x988] sm:$0xff]
        %v621 = vld [vmem:[%s225 + $0x990] sm:$0xff]
        %v622 = vld [vmem:[%s225 + $0x998] sm:$0xff]
        %v623 = vld [vmem:[%s225 + $0x9a0] sm:$0xff]
        %v624 = vld [vmem:[%s225 + $0x9a8] sm:$0xff]
        %v625 = vld [vmem:[%s225 + $0x9b0] sm:$0xff]
        %v626 = vld [vmem:[%s225 + $0x9b8] sm:$0xff]
        %v627 = vld [vmem:[%s225 + $0x9c0] sm:$0xff]
        %v628 = vld [vmem:[%s225 + $0x9c8] sm:$0xff]
        %v629 = vld [vmem:[%s225 + $0x9d0] sm:$0xff]
        %v630 = vld [vmem:[%s225 + $0x9d8] sm:$0xff]
        %v631 = vld [vmem:[%s225 + $0x9e0] sm:$0xff]
        %v632 = vld [vmem:[%s225 + $0x9e8] sm:$0xff]
        %v633 = vld [vmem:[%s225 + $0x9f0] sm:$0xff]
        %v634 = vld [vmem:[%s225 + $0x9f8] sm:$0xff]
        %v635 = vld [vmem:[%s225 + $0xa00] sm:$0xff]
        %v636 = vld [vmem:[%s225 + $0xa08] sm:$0xff]
        %v637 = vld [vmem:[%s225 + $0xa10] sm:$0xff]
        %v638 = vld [vmem:[%s225 + $0xa18] sm:$0xff]
        %v639 = vld [vmem:[%s225 + $0xa20] sm:$0xff]
        %v640 = vld [vmem:[%s225 + $0xa28] sm:$0xff]
        %v641 = vld [vmem:[%s225 + $0xa30] sm:$0xff]
        %v642 = vld [vmem:[%s225 + $0xa38] sm:$0xff]
        %v643 = vld [vmem:[%s225 + $0xa40] sm:$0xff]
        %v644 = vld [vmem:[%s225 + $0xa48] sm:$0xff]
        %v645 = vld [vmem:[%s225 + $0xa50] sm:$0xff]
        %v646 = vld [vmem:[%s225 + $0xa58] sm:$0xff]
        %v647 = vld [vmem:[%s225 + $0xa60] sm:$0xff]
        %v648 = vld [vmem:[%s225 + $0xa68] sm:$0xff]
        %v649 = vld [vmem:[%s225 + $0xa70] sm:$0xff]
        %v650 = vld [vmem:[%s225 + $0xa78] sm:$0xff]
        %v651 = vld [vmem:[%s225 + $0xa80] sm:$0xff]
        %v652 = vld [vmem:[%s225 + $0xa88] sm:$0xff]
        %v653 = vld [vmem:[%s225 + $0xa90] sm:$0xff]
        %v654 = vld [vmem:[%s225 + $0xa98] sm:$0xff]
        %v655 = vld [vmem:[%s225 + $0xaa0] sm:$0xff]
        %v656 = vld [vmem:[%s225 + $0xaa8] sm:$0xff]
        %v657 = vld [vmem:[%s225 + $0xab0] sm:$0xff]
        %v658 = vld [vmem:[%s225 + $0xab8] sm:$0xff]
        %v659 = vld [vmem:[%s225 + $0xac0] sm:$0xff]
        %v660 = vld [vmem:[%s225 + $0xac8] sm:$0xff]
        %v661 = vld [vmem:[%s225 + $0xad0] sm:$0xff]
        %v662 = vld [vmem:[%s225 + $0xad8] sm:$0xff]
        %v663 = vld [vmem:[%s225 + $0xae0] sm:$0xff]
        %v664 = vld [vmem:[%s225 + $0xae8] sm:$0xff]
        %v665 = vld [vmem:[%s225 + $0xaf0] sm:$0xff]
        %v666 = vld [vmem:[%s225 + $0xaf8] sm:$0xff]
        %v667 = vld [vmem:[%s225 + $0xb00] sm:$0xff]
        %v668 = vld [vmem:[%s225 + $0xb08] sm:$0xff]
        %v669 = vld [vmem:[%s225 + $0xb10] sm:$0xff]
        %v670 = vld [vmem:[%s225 + $0xb18] sm:$0xff]
        %v671 = vld [vmem:[%s225 + $0xb20] sm:$0xff]
        %v672 = vld [vmem:[%s225 + $0xb28] sm:$0xff]
        %v673 = vld [vmem:[%s225 + $0xb30] sm:$0xff]
        %v674 = vld [vmem:[%s225 + $0xb38] sm:$0xff]
        %v675 = vld [vmem:[%s225 + $0xb40] sm:$0xff]
        %v676 = vld [vmem:[%s225 + $0xb48] sm:$0xff]
        %v677 = vld [vmem:[%s225 + $0xb50] sm:$0xff]
        %v678 = vld [vmem:[%s225 + $0xb58] sm:$0xff]
        %v679 = vld [vmem:[%s225 + $0xb60] sm:$0xff]
        %v680 = vld [vmem:[%s225 + $0xb68] sm:$0xff]
        %v681 = vld [vmem:[%s225 + $0xb70] sm:$0xff]
        %v682 = vld [vmem:[%s225 + $0xb78] sm:$0xff]
        %v683 = vld [vmem:[%s225 + $0xb80] sm:$0xff]
        %v684 = vld [vmem:[%s225 + $0xb88] sm:$0xff]
        %v685 = vld [vmem:[%s225 + $0xb90] sm:$0xff]
        %v686 = vld [vmem:[%s225 + $0xb98] sm:$0xff]
        %v687 = vld [vmem:[%s225 + $0xba0] sm:$0xff]
        %v688 = vld [vmem:[%s225 + $0xba8] sm:$0xff]
        %v689 = vld [vmem:[%s225 + $0xbb0] sm:$0xff]
        %v690 = vld [vmem:[%s225 + $0xbb8] sm:$0xff]
        %v691 = vld [vmem:[%s225 + $0xbc0] sm:$0xff]
        %v692 = vld [vmem:[%s225 + $0xbc8] sm:$0xff]
        %v693 = vld [vmem:[%s225 + $0xbd0] sm:$0xff]
        %v694 = vld [vmem:[%s225 + $0xbd8] sm:$0xff]
        %v695 = vld [vmem:[%s225 + $0xbe0] sm:$0xff]
        %v696 = vld [vmem:[%s225 + $0xbe8] sm:$0xff]
        %v697 = vld [vmem:[%s225 + $0xbf0] sm:$0xff]
        %v698 = vld [vmem:[%s225 + $0xbf8] sm:$0xff]
        %v699 = vld [vmem:[%s225 + $0xc00] sm:$0xff]
        %v700 = vld [vmem:[%s225 + $0xc08] sm:$0xff]
        %v701 = vld [vmem:[%s225 + $0xc10] sm:$0xff]
        %v702 = vld [vmem:[%s225 + $0xc18] sm:$0xff]
        %v703 = vld [vmem:[%s225 + $0xc20] sm:$0xff]
        %v704 = vld [vmem:[%s225 + $0xc28] sm:$0xff]
        %v705 = vld [vmem:[%s225 + $0xc30] sm:$0xff]
        %v706 = vld [vmem:[%s225 + $0xc38] sm:$0xff]
        %v707 = vld [vmem:[%s225 + $0xc40] sm:$0xff]
        %v708 = vld [vmem:[%s225 + $0xc48] sm:$0xff]
        %v709 = vld [vmem:[%s225 + $0xc50] sm:$0xff]
        %v710 = vld [vmem:[%s225 + $0xc58] sm:$0xff]
        %v711 = vld [vmem:[%s225 + $0xc60] sm:$0xff]
        %v712 = vld [vmem:[%s225 + $0xc68] sm:$0xff]
        %v713 = vld [vmem:[%s225 + $0xc70] sm:$0xff]
        %v714 = vld [vmem:[%s225 + $0xc78] sm:$0xff]
        %v715 = vld [vmem:[%s225 + $0xc80] sm:$0xff]
        %v716 = vld [vmem:[%s225 + $0xc88] sm:$0xff]
        %v717 = vld [vmem:[%s225 + $0xc90] sm:$0xff]
        %v718 = vld [vmem:[%s225 + $0xc98] sm:$0xff]
        %v719 = vld [vmem:[%s225 + $0xca0] sm:$0xff]
        %v720 = vld [vmem:[%s225 + $0xca8] sm:$0xff]
        %v721 = vld [vmem:[%s225 + $0xcb0] sm:$0xff]
        %v722 = vld [vmem:[%s225 + $0xcb8] sm:$0xff]
        %v723 = vld [vmem:[%s225 + $0xcc0] sm:$0xff]
        %v724 = vld [vmem:[%s225 + $0xcc8] sm:$0xff]
        %v725 = vld [vmem:[%s225 + $0xcd0] sm:$0xff]
        %v726 = vld [vmem:[%s225 + $0xcd8] sm:$0xff]
        %v727 = vld [vmem:[%s225 + $0xce0] sm:$0xff]
        %v728 = vld [vmem:[%s225 + $0xce8] sm:$0xff]
        %v729 = vld [vmem:[%s225 + $0xcf0] sm:$0xff]
        %v730 = vld [vmem:[%s225 + $0xcf8] sm:$0xff]
        %v731 = vld [vmem:[%s225 + $0xd00] sm:$0xff]
        %v732 = vld [vmem:[%s225 + $0xd08] sm:$0xff]
        %v733 = vld [vmem:[%s225 + $0xd10] sm:$0xff]
        %v734 = vld [vmem:[%s225 + $0xd18] sm:$0xff]
        %v735 = vld [vmem:[%s225 + $0xd20] sm:$0xff]
        %v736 = vld [vmem:[%s225 + $0xd28] sm:$0xff]
        %v737 = vld [vmem:[%s225 + $0xd30] sm:$0xff]
        %v738 = vld [vmem:[%s225 + $0xd38] sm:$0xff]
        %v739 = vld [vmem:[%s225 + $0xd40] sm:$0xff]
        %v740 = vld [vmem:[%s225 + $0xd48] sm:$0xff]
        %v741 = vld [vmem:[%s225 + $0xd50] sm:$0xff]
        %v742 = vld [vmem:[%s225 + $0xd58] sm:$0xff]
        %v743 = vld [vmem:[%s225 + $0xd60] sm:$0xff]
        %v744 = vld [vmem:[%s225 + $0xd68] sm:$0xff]
        %v745 = vld [vmem:[%s225 + $0xd70] sm:$0xff]
        %v746 = vld [vmem:[%s225 + $0xd78] sm:$0xff]
        %v747 = vld [vmem:[%s225 + $0xd80] sm:$0xff]
        %v748 = vld [vmem:[%s225 + $0xd88] sm:$0xff]
        %v749 = vld [vmem:[%s225 + $0xd90] sm:$0xff]
        %v750 = vld [vmem:[%s225 + $0xd98] sm:$0xff]
        %v751 = vld [vmem:[%s225 + $0xda0] sm:$0xff]
        %v752 = vld [vmem:[%s225 + $0xda8] sm:$0xff]
        %v753 = vld [vmem:[%s225 + $0xdb0] sm:$0xff]
        %v754 = vld [vmem:[%s225 + $0xdb8] sm:$0xff]
        %v755 = vld [vmem:[%s225 + $0xdc0] sm:$0xff]
        %v756 = vld [vmem:[%s225 + $0xdc8] sm:$0xff]
        %v757 = vld [vmem:[%s225 + $0xdd0] sm:$0xff]
        %v758 = vld [vmem:[%s225 + $0xdd8] sm:$0xff]
        %v759 = vld [vmem:[%s225 + $0xde0] sm:$0xff]
        %v760 = vld [vmem:[%s225 + $0xde8] sm:$0xff]
        %v761 = vld [vmem:[%s225 + $0xdf0] sm:$0xff]
        %v762 = vld [vmem:[%s225 + $0xdf8] sm:$0xff]
        %v763 = vld [vmem:[%s225 + $0xe00] sm:$0xff]
        %v764 = vld [vmem:[%s225 + $0xe08] sm:$0xff]
        %v765 = vld [vmem:[%s225 + $0xe10] sm:$0xff]
        %v766 = vld [vmem:[%s225 + $0xe18] sm:$0xff]
        %v767 = vld [vmem:[%s225 + $0xe20] sm:$0xff]
        %v768 = vld [vmem:[%s225 + $0xe28] sm:$0xff]
        %v769 = vld [vmem:[%s225 + $0xe30] sm:$0xff]
        %v770 = vld [vmem:[%s225 + $0xe38] sm:$0xff]
        %v771 = vld [vmem:[%s225 + $0xe40] sm:$0xff]
        %v772 = vld [vmem:[%s225 + $0xe48] sm:$0xff]
        %v773 = vld [vmem:[%s225 + $0xe50] sm:$0xff]
        %v774 = vld [vmem:[%s225 + $0xe58] sm:$0xff]
        %v775 = vld [vmem:[%s225 + $0xe60] sm:$0xff]
        %v776 = vld [vmem:[%s225 + $0xe68] sm:$0xff]
        %v777 = vld [vmem:[%s225 + $0xe70] sm:$0xff]
        %v778 = vld [vmem:[%s225 + $0xe78] sm:$0xff]
        %v779 = vld [vmem:[%s225 + $0xe80] sm:$0xff]
        %v780 = vld [vmem:[%s225 + $0xe88] sm:$0xff]
        %v781 = vld [vmem:[%s225 + $0xe90] sm:$0xff]
        %v782 = vld [vmem:[%s225 + $0xe98] sm:$0xff]
        %v783 = vld [vmem:[%s225 + $0xea0] sm:$0xff]
        %v784 = vld [vmem:[%s225 + $0xea8] sm:$0xff]
        %v785 = vld [vmem:[%s225 + $0xeb0] sm:$0xff]
        %v786 = vld [vmem:[%s225 + $0xeb8] sm:$0xff]
        %v787 = vld [vmem:[%s225 + $0xec0] sm:$0xff]
        %v788 = vld [vmem:[%s225 + $0xec8] sm:$0xff]
        %v789 = vld [vmem:[%s225 + $0xed0] sm:$0xff]
        %v790 = vld [vmem:[%s225 + $0xed8] sm:$0xff]
        %v791 = vld [vmem:[%s225 + $0xee0] sm:$0xff]
        %v792 = vld [vmem:[%s225 + $0xee8] sm:$0xff]
        %v793 = vld [vmem:[%s225 + $0xef0] sm:$0xff]
        %v794 = vld [vmem:[%s225 + $0xef8] sm:$0xff]
        %v795 = vld [vmem:[%s225 + $0xf00] sm:$0xff]
        %v796 = vld [vmem:[%s225 + $0xf08] sm:$0xff]
        %v797 = vld [vmem:[%s225 + $0xf10] sm:$0xff]
        %v798 = vld [vmem:[%s225 + $0xf18] sm:$0xff]
        %v799 = vld [vmem:[%s225 + $0xf20] sm:$0xff]
        %v800 = vld [vmem:[%s225 + $0xf28] sm:$0xff]
        %v801 = vld [vmem:[%s225 + $0xf30] sm:$0xff]
        %v802 = vld [vmem:[%s225 + $0xf38] sm:$0xff]
        %v803 = vld [vmem:[%s225 + $0xf40] sm:$0xff]
        %v804 = vld [vmem:[%s225 + $0xf48] sm:$0xff]
        %v805 = vld [vmem:[%s225 + $0xf50] sm:$0xff]
        %v806 = vld [vmem:[%s225 + $0xf58] sm:$0xff]
        %v807 = vld [vmem:[%s225 + $0xf60] sm:$0xff]
        %v808 = vld [vmem:[%s225 + $0xf68] sm:$0xff]
        %v809 = vld [vmem:[%s225 + $0xf70] sm:$0xff]
        %v810 = vld [vmem:[%s225 + $0xf78] sm:$0xff]
        %v811 = vld [vmem:[%s225 + $0xf80] sm:$0xff]
        %v812 = vld [vmem:[%s225 + $0xf88] sm:$0xff]
        %v813 = vld [vmem:[%s225 + $0xf90] sm:$0xff]
        %v814 = vld [vmem:[%s225 + $0xf98] sm:$0xff]
        %v815 = vld [vmem:[%s225 + $0xfa0] sm:$0xff]
        %v816 = vld [vmem:[%s225 + $0xfa8] sm:$0xff]
        %v817 = vld [vmem:[%s225 + $0xfb0] sm:$0xff]
        %v818 = vld [vmem:[%s225 + $0xfb8] sm:$0xff]
        %v819 = vld [vmem:[%s225 + $0xfc0] sm:$0xff]
        %v820 = vld [vmem:[%s225 + $0xfc8] sm:$0xff]
        %v821 = vld [vmem:[%s225 + $0xfd0] sm:$0xff]
        %v822 = vld [vmem:[%s225 + $0xfd8] sm:$0xff]
        %v823 = vld [vmem:[%s225 + $0xfe0] sm:$0xff]
        %v824 = vld [vmem:[%s225 + $0xfe8] sm:$0xff]
        %v825 = vld [vmem:[%s225 + $0xff0] sm:$0xff]
        %v826 = vld [vmem:[%s225 + $0xff8] sm:$0xff]
        %v827 = vld [vmem:[%s225 + $0x1000] sm:$0xff]
        %v828 = vld [vmem:[%s225 + $0x1008] sm:$0xff]
        %v829 = vld [vmem:[%s225 + $0x1010] sm:$0xff]
        %v830 = vld [vmem:[%s225 + $0x1018] sm:$0xff]
        %v831 = vld [vmem:[%s225 + $0x1020] sm:$0xff]
        %v832 = vld [vmem:[%s225 + $0x1028] sm:$0xff]
        %v833 = vld [vmem:[%s225 + $0x1030] sm:$0xff]
        %v834 = vld [vmem:[%s225 + $0x1038] sm:$0xff]
        %v835 = vld [vmem:[%s225 + $0x1040] sm:$0xff]
        %v836 = vld [vmem:[%s225 + $0x1048] sm:$0xff]
        %v837 = vld [vmem:[%s225 + $0x1050] sm:$0xff]
        %v838 = vld [vmem:[%s225 + $0x1058] sm:$0xff]
        %v839 = vld [vmem:[%s225 + $0x1060] sm:$0xff]
        %v840 = vld [vmem:[%s225 + $0x1068] sm:$0xff]
        %v841 = vld [vmem:[%s225 + $0x1070] sm:$0xff]
        %v842 = vld [vmem:[%s225 + $0x1078] sm:$0xff]
        %v843 = vld [vmem:[%s225 + $0x1080] sm:$0xff]
        %v844 = vld [vmem:[%s225 + $0x1088] sm:$0xff]
        %v845 = vld [vmem:[%s225 + $0x1090] sm:$0xff]
        %v846 = vld [vmem:[%s225 + $0x1098] sm:$0xff]
        %v847 = vld [vmem:[%s225 + $0x10a0] sm:$0xff]
        %v848 = vld [vmem:[%s225 + $0x10a8] sm:$0xff]
        %v849 = vld [vmem:[%s225 + $0x10b0] sm:$0xff]
        %v850 = vld [vmem:[%s225 + $0x10b8] sm:$0xff]
        %v851 = vld [vmem:[%s225 + $0x10c0] sm:$0xff]
        %v852 = vld [vmem:[%s225 + $0x10c8] sm:$0xff]
        %v853 = vld [vmem:[%s225 + $0x10d0] sm:$0xff]
        %v854 = vld [vmem:[%s225 + $0x10d8] sm:$0xff]
        %v855 = vld [vmem:[%s225 + $0x10e0] sm:$0xff]
        %v856 = vld [vmem:[%s225 + $0x10e8] sm:$0xff]
        %v857 = vld [vmem:[%s225 + $0x10f0] sm:$0xff]
        %v858 = vld [vmem:[%s225 + $0x10f8] sm:$0xff]
        %v859 = vld [vmem:[%s225 + $0x1100] sm:$0xff]
        %v860 = vld [vmem:[%s225 + $0x1108] sm:$0xff]
        %v861 = vld [vmem:[%s225 + $0x1110] sm:$0xff]
        %v862 = vld [vmem:[%s225 + $0x1118] sm:$0xff]
        %v863 = vld [vmem:[%s225 + $0x1120] sm:$0xff]
        %v864 = vld [vmem:[%s225 + $0x1128] sm:$0xff]
        %v865 = vld [vmem:[%s225 + $0x1130] sm:$0xff]
        %v866 = vld [vmem:[%s225 + $0x1138] sm:$0xff]
        %v867 = vld [vmem:[%s225 + $0x1140] sm:$0xff]
        %v868 = vld [vmem:[%s225 + $0x1148] sm:$0xff]
        %v869 = vld [vmem:[%s225 + $0x1150] sm:$0xff]
        %v870 = vld [vmem:[%s225 + $0x1158] sm:$0xff]
        %v871 = vld [vmem:[%s225 + $0x1160] sm:$0xff]
        %v872 = vld [vmem:[%s225 + $0x1168] sm:$0xff]
        %v873 = vld [vmem:[%s225 + $0x1170] sm:$0xff]
        %v874 = vld [vmem:[%s225 + $0x1178] sm:$0xff]
        %v875 = vld [vmem:[%s225 + $0x1180] sm:$0xff]
        %v876 = vld [vmem:[%s225 + $0x1188] sm:$0xff]
        %v877 = vld [vmem:[%s225 + $0x1190] sm:$0xff]
        %v878 = vld [vmem:[%s225 + $0x1198] sm:$0xff]
        %v879 = vld [vmem:[%s225 + $0x11a0] sm:$0xff]
        %v880 = vld [vmem:[%s225 + $0x11a8] sm:$0xff]
        %v881 = vld [vmem:[%s225 + $0x11b0] sm:$0xff]
        %v882 = vld [vmem:[%s225 + $0x11b8] sm:$0xff]
        %v883 = vld [vmem:[%s225 + $0x11c0] sm:$0xff]
        %v884 = vld [vmem:[%s225 + $0x11c8] sm:$0xff]
        %v885 = vld [vmem:[%s225 + $0x11d0] sm:$0xff]
        %v886 = vld [vmem:[%s225 + $0x11d8] sm:$0xff]
        %v887 = vld [vmem:[%s225 + $0x11e0] sm:$0xff]
        %v888 = vld [vmem:[%s225 + $0x11e8] sm:$0xff]
        %v889 = vld [vmem:[%s225 + $0x11f0] sm:$0xff]
        %v890 = vld [vmem:[%s225 + $0x11f8] sm:$0xff]
        %v891 = vld [vmem:[%s225 + $0x1200] sm:$0xff]
        %v892 = vld [vmem:[%s225 + $0x1208] sm:$0xff]
        %v893 = vld [vmem:[%s225 + $0x1210] sm:$0xff]
        %v894 = vld [vmem:[%s225 + $0x1218] sm:$0xff]
        %v895 = vld [vmem:[%s225 + $0x1220] sm:$0xff]
        %v896 = vld [vmem:[%s225 + $0x1228] sm:$0xff]
        %v897 = vld [vmem:[%s225 + $0x1230] sm:$0xff]
        %v898 = vld [vmem:[%s225 + $0x1238] sm:$0xff]
        %v899 = vld [vmem:[%s225 + $0x1240] sm:$0xff]
        %v900 = vld [vmem:[%s225 + $0x1248] sm:$0xff]
        %v901 = vld [vmem:[%s225 + $0x1250] sm:$0xff]
        %v902 = vld [vmem:[%s225 + $0x1258] sm:$0xff]
        %v903 = vld [vmem:[%s225 + $0x1260] sm:$0xff]
        %v904 = vld [vmem:[%s225 + $0x1268] sm:$0xff]
        %v905 = vld [vmem:[%s225 + $0x1270] sm:$0xff]
        %v906 = vld [vmem:[%s225 + $0x1278] sm:$0xff]
        %v907 = vld [vmem:[%s225 + $0x1280] sm:$0xff]
        %v908 = vld [vmem:[%s225 + $0x1288] sm:$0xff]
        %v909 = vld [vmem:[%s225 + $0x1290] sm:$0xff]
        %v910 = vld [vmem:[%s225 + $0x1298] sm:$0xff]
        %v911 = vld [vmem:[%s225 + $0x12a0] sm:$0xff]
        %v912 = vld [vmem:[%s225 + $0x12a8] sm:$0xff]
        %v913 = vld [vmem:[%s225 + $0x12b0] sm:$0xff]
        %v914 = vld [vmem:[%s225 + $0x12b8] sm:$0xff]
        %v915 = vld [vmem:[%s225 + $0x12c0] sm:$0xff]
        %v916 = vld [vmem:[%s225 + $0x12c8] sm:$0xff]
        %v917 = vld [vmem:[%s225 + $0x12d0] sm:$0xff]
        %v918 = vld [vmem:[%s225 + $0x12d8] sm:$0xff]
        %v919 = vld [vmem:[%s225 + $0x12e0] sm:$0xff]
        %v920 = vld [vmem:[%s225 + $0x12e8] sm:$0xff]
        %v921 = vld [vmem:[%s225 + $0x12f0] sm:$0xff]
        %v922 = vld [vmem:[%s225 + $0x12f8] sm:$0xff]
        %v923 = vld [vmem:[%s225 + $0x1300] sm:$0xff]
        %v924 = vld [vmem:[%s225 + $0x1308] sm:$0xff]
        %v925 = vld [vmem:[%s225 + $0x1310] sm:$0xff]
        %v926 = vld [vmem:[%s225 + $0x1318] sm:$0xff]
        %v927 = vld [vmem:[%s225 + $0x1320] sm:$0xff]
        %v928 = vld [vmem:[%s225 + $0x1328] sm:$0xff]
        %v929 = vld [vmem:[%s225 + $0x1330] sm:$0xff]
        %v930 = vld [vmem:[%s225 + $0x1338] sm:$0xff]
        %v931 = vld [vmem:[%s225 + $0x1340] sm:$0xff]
        %v932 = vld [vmem:[%s225 + $0x1348] sm:$0xff]
        %v933 = vld [vmem:[%s225 + $0x1350] sm:$0xff]
        %v934 = vld [vmem:[%s225 + $0x1358] sm:$0xff]
        %v935 = vld [vmem:[%s225 + $0x1360] sm:$0xff]
        %v936 = vld [vmem:[%s225 + $0x1368] sm:$0xff]
        %v937 = vld [vmem:[%s225 + $0x1370] sm:$0xff]
        %v938 = vld [vmem:[%s225 + $0x1378] sm:$0xff]
        %v939 = vld [vmem:[%s225 + $0x1380] sm:$0xff]
        %v940 = vld [vmem:[%s225 + $0x1388] sm:$0xff]
        %v941 = vld [vmem:[%s225 + $0x1390] sm:$0xff]
        %v942 = vld [vmem:[%s225 + $0x1398] sm:$0xff]
        %v943 = vld [vmem:[%s225 + $0x13a0] sm:$0xff]
        %v944 = vld [vmem:[%s225 + $0x13a8] sm:$0xff]
        %v945 = vld [vmem:[%s225 + $0x13b0] sm:$0xff]
        %v946 = vld [vmem:[%s225 + $0x13b8] sm:$0xff]
        %v947 = vld [vmem:[%s225 + $0x13c0] sm:$0xff]
        %v948 = vld [vmem:[%s225 + $0x13c8] sm:$0xff]
        %v949 = vld [vmem:[%s225 + $0x13d0] sm:$0xff]
        %v950 = vld [vmem:[%s225 + $0x13d8] sm:$0xff]
        %v951 = vld [vmem:[%s225 + $0x13e0] sm:$0xff]
        %v952 = vld [vmem:[%s225 + $0x13e8] sm:$0xff]
        %v953 = vld [vmem:[%s225 + $0x13f0] sm:$0xff]
        %v954 = vld [vmem:[%s225 + $0x13f8] sm:$0xff]
        %v955 = vld [vmem:[%s225 + $0x1400] sm:$0xff]
        %v956 = vld [vmem:[%s225 + $0x1408] sm:$0xff]
        %v957 = vld [vmem:[%s225 + $0x1410] sm:$0xff]
        %v958 = vld [vmem:[%s225 + $0x1418] sm:$0xff]
        %v959 = vld [vmem:[%s225 + $0x1420] sm:$0xff]
        %v960 = vld [vmem:[%s225 + $0x1428] sm:$0xff]
        %v961 = vld [vmem:[%s225 + $0x1430] sm:$0xff]
        %v962 = vld [vmem:[%s225 + $0x1438] sm:$0xff]
        %v963 = vld [vmem:[%s225 + $0x1440] sm:$0xff]
        %v964 = vld [vmem:[%s225 + $0x1448] sm:$0xff]
        %v965 = vld [vmem:[%s225 + $0x1450] sm:$0xff]
        %v966 = vld [vmem:[%s225 + $0x1458] sm:$0xff]
        %v967 = vld [vmem:[%s225 + $0x1460] sm:$0xff]
        %v968 = vld [vmem:[%s225 + $0x1468] sm:$0xff]
        %v969 = vld [vmem:[%s225 + $0x1470] sm:$0xff]
        %v970 = vld [vmem:[%s225 + $0x1478] sm:$0xff]
        %v971 = vld [vmem:[%s225 + $0x1480] sm:$0xff]
        %v972 = vld [vmem:[%s225 + $0x1488] sm:$0xff]
        %v973 = vld [vmem:[%s225 + $0x1490] sm:$0xff]
        %v974 = vld [vmem:[%s225 + $0x1498] sm:$0xff]
        %v975 = vld [vmem:[%s225 + $0x14a0] sm:$0xff]
        %v976 = vld [vmem:[%s225 + $0x14a8] sm:$0xff]
        %v977 = vld [vmem:[%s225 + $0x14b0] sm:$0xff]
        %v978 = vld [vmem:[%s225 + $0x14b8] sm:$0xff]
        %v979 = vld [vmem:[%s225 + $0x14c0] sm:$0xff]
        %v980 = vld [vmem:[%s225 + $0x14c8] sm:$0xff]
        %v981 = vld [vmem:[%s225 + $0x14d0] sm:$0xff]
        %v982 = vld [vmem:[%s225 + $0x14d8] sm:$0xff]
        %v983 = vld [vmem:[%s225 + $0x14e0] sm:$0xff]
        %v984 = vld [vmem:[%s225 + $0x14e8] sm:$0xff]
        %v985 = vld [vmem:[%s225 + $0x14f0] sm:$0xff]
        %v986 = vld [vmem:[%s225 + $0x14f8] sm:$0xff]
        %v987 = vld [vmem:[%s225 + $0x1500] sm:$0xff]
        %v988 = vld [vmem:[%s225 + $0x1508] sm:$0xff]
        %v989 = vld [vmem:[%s225 + $0x1510] sm:$0xff]
        %v990 = vld [vmem:[%s225 + $0x1518] sm:$0xff]
        %v991 = vld [vmem:[%s225 + $0x1520] sm:$0xff]
        %v992 = vld [vmem:[%s225 + $0x1528] sm:$0xff]
        %v993 = vld [vmem:[%s225 + $0x1530] sm:$0xff]
        %v994 = vld [vmem:[%s225 + $0x1538] sm:$0xff]
        %v995 = vld [vmem:[%s225 + $0x1540] sm:$0xff]
        %v996 = vld [vmem:[%s225 + $0x1548] sm:$0xff]
        %v997 = vld [vmem:[%s225 + $0x1550] sm:$0xff]
        %v998 = vld [vmem:[%s225 + $0x1558] sm:$0xff]
        %v999 = vld [vmem:[%s225 + $0x1560] sm:$0xff]
        %v1000 = vld [vmem:[%s225 + $0x1568] sm:$0xff]
        %v1001 = vld [vmem:[%s225 + $0x1570] sm:$0xff]
        %v1002 = vld [vmem:[%s225 + $0x1578] sm:$0xff]
        %v1003 = vld [vmem:[%s225 + $0x1580] sm:$0xff]
        %v1004 = vld [vmem:[%s225 + $0x1588] sm:$0xff]
        %v1005 = vld [vmem:[%s225 + $0x1590] sm:$0xff]
        %v1006 = vld [vmem:[%s225 + $0x1598] sm:$0xff]
        %v1007 = vld [vmem:[%s225 + $0x15a0] sm:$0xff]
        %v1008 = vld [vmem:[%s225 + $0x15a8] sm:$0xff]
        %v1009 = vld [vmem:[%s225 + $0x15b0] sm:$0xff]
        %v1010 = vld [vmem:[%s225 + $0x15b8] sm:$0xff]
        %v1011 = vld [vmem:[%s225 + $0x15c0] sm:$0xff]
        %v1012 = vld [vmem:[%s225 + $0x15c8] sm:$0xff]
        %v1013 = vld [vmem:[%s225 + $0x15d0] sm:$0xff]
        %v1014 = vld [vmem:[%s225 + $0x15d8] sm:$0xff]
        %v1015 = vld [vmem:[%s225 + $0x15e0] sm:$0xff]
        %v1016 = vld [vmem:[%s225 + $0x15e8] sm:$0xff]
        %v1017 = vld [vmem:[%s225 + $0x15f0] sm:$0xff]
        %v1018 = vld [vmem:[%s225 + $0x15f8] sm:$0xff]
        %v1019 = vld [vmem:[%s225 + $0x1600] sm:$0xff]
        %v1020 = vld [vmem:[%s225 + $0x1608] sm:$0xff]
        %v1021 = vld [vmem:[%s225 + $0x1610] sm:$0xff]
        %v1022 = vld [vmem:[%s225 + $0x1618] sm:$0xff]
        %v1023 = vld [vmem:[%s225 + $0x1620] sm:$0xff]
        %v1024 = vld [vmem:[%s225 + $0x1628] sm:$0xff]
        %v1025 = vld [vmem:[%s225 + $0x1630] sm:$0xff]
        %v1026 = vld [vmem:[%s225 + $0x1638] sm:$0xff]
        %v1027 = vld [vmem:[%s225 + $0x1640] sm:$0xff]
        %v1028 = vld [vmem:[%s225 + $0x1648] sm:$0xff]
        %v1029 = vld [vmem:[%s225 + $0x1650] sm:$0xff]
        %v1030 = vld [vmem:[%s225 + $0x1658] sm:$0xff]
        %v1031 = vld [vmem:[%s225 + $0x1660] sm:$0xff]
        %v1032 = vld [vmem:[%s225 + $0x1668] sm:$0xff]
        %v1033 = vld [vmem:[%s225 + $0x1670] sm:$0xff]
        %v1034 = vld [vmem:[%s225 + $0x1678] sm:$0xff]
        %v1035 = vld [vmem:[%s225 + $0x1680] sm:$0xff]
        %v1036 = vld [vmem:[%s225 + $0x1688] sm:$0xff]
        %v1037 = vld [vmem:[%s225 + $0x1690] sm:$0xff]
        %v1038 = vld [vmem:[%s225 + $0x1698] sm:$0xff]
        %v1039 = vld [vmem:[%s225 + $0x16a0] sm:$0xff]
        %v1040 = vld [vmem:[%s225 + $0x16a8] sm:$0xff]
        %v1041 = vld [vmem:[%s225 + $0x16b0] sm:$0xff]
        %v1042 = vld [vmem:[%s225 + $0x16b8] sm:$0xff]
        %v1043 = vld [vmem:[%s225 + $0x16c0] sm:$0xff]
        %v1044 = vld [vmem:[%s225 + $0x16c8] sm:$0xff]
        %v1045 = vld [vmem:[%s225 + $0x16d0] sm:$0xff]
        %v1046 = vld [vmem:[%s225 + $0x16d8] sm:$0xff]
        %v1047 = vld [vmem:[%s225 + $0x16e0] sm:$0xff]
        %v1048 = vld [vmem:[%s225 + $0x16e8] sm:$0xff]
        %v1049 = vld [vmem:[%s225 + $0x16f0] sm:$0xff]
        %v1050 = vld [vmem:[%s225 + $0x16f8] sm:$0xff]
        %v1051 = vld [vmem:[%s225 + $0x1700] sm:$0xff]
        %v1052 = vld [vmem:[%s225 + $0x1708] sm:$0xff]
        %v1053 = vld [vmem:[%s225 + $0x1710] sm:$0xff]
        %v1054 = vld [vmem:[%s225 + $0x1718] sm:$0xff]
        %v1055 = vld [vmem:[%s225 + $0x1720] sm:$0xff]
        %v1056 = vld [vmem:[%s225 + $0x1728] sm:$0xff]
        %v1057 = vld [vmem:[%s225 + $0x1730] sm:$0xff]
        %v1058 = vld [vmem:[%s225 + $0x1738] sm:$0xff]
        %v1059 = vld [vmem:[%s225 + $0x1740] sm:$0xff]
        %v1060 = vld [vmem:[%s225 + $0x1748] sm:$0xff]
        %v1061 = vld [vmem:[%s225 + $0x1750] sm:$0xff]
        %v1062 = vld [vmem:[%s225 + $0x1758] sm:$0xff]
        %v1063 = vld [vmem:[%s225 + $0x1760] sm:$0xff]
        %v1064 = vld [vmem:[%s225 + $0x1768] sm:$0xff]
        %v1065 = vld [vmem:[%s225 + $0x1770] sm:$0xff]
        %v1066 = vld [vmem:[%s225 + $0x1778] sm:$0xff]
        %v1067 = vld [vmem:[%s225 + $0x1780] sm:$0xff]
        %v1068 = vld [vmem:[%s225 + $0x1788] sm:$0xff]
        %v1069 = vld [vmem:[%s225 + $0x1790] sm:$0xff]
        %v1070 = vld [vmem:[%s225 + $0x1798] sm:$0xff]
        %v1071 = vld [vmem:[%s225 + $0x17a0] sm:$0xff]
        %v1072 = vld [vmem:[%s225 + $0x17a8] sm:$0xff]
        %v1073 = vld [vmem:[%s225 + $0x17b0] sm:$0xff]
        %v1074 = vld [vmem:[%s225 + $0x17b8] sm:$0xff]
        %v1075 = vld [vmem:[%s225 + $0x17c0] sm:$0xff]
        %v1076 = vld [vmem:[%s225 + $0x17c8] sm:$0xff]
        %v1077 = vld [vmem:[%s225 + $0x17d0] sm:$0xff]
        %v1078 = vld [vmem:[%s225 + $0x17d8] sm:$0xff]
        %v1079 = vld [vmem:[%s225 + $0x17e0] sm:$0xff]
        %v1080 = vld [vmem:[%s225 + $0x17e8] sm:$0xff]
        %v1081 = vld [vmem:[%s225 + $0x17f0] sm:$0xff]
        %v1082 = vld [vmem:[%s225 + $0x17f8] sm:$0xff]
        %v1083 = vld [vmem:[%s225 + $0x1800] sm:$0xff]
        %v1084 = vld [vmem:[%s225 + $0x1808] sm:$0xff]
        %v1085 = vld [vmem:[%s225 + $0x1810] sm:$0xff]
        %v1086 = vld [vmem:[%s225 + $0x1818] sm:$0xff]
        %v1087 = vld [vmem:[%s225 + $0x1820] sm:$0xff]
        %v1088 = vld [vmem:[%s225 + $0x1828] sm:$0xff]
        %v1089 = vld [vmem:[%s225 + $0x1830] sm:$0xff]
        %v1090 = vld [vmem:[%s225 + $0x1838] sm:$0xff]
        %v1091 = vld [vmem:[%s225 + $0x1840] sm:$0xff]
        %v1092 = vld [vmem:[%s225 + $0x1848] sm:$0xff]
        %v1093 = vld [vmem:[%s225 + $0x1850] sm:$0xff]
        %v1094 = vld [vmem:[%s225 + $0x1858] sm:$0xff]
        %v1095 = vld [vmem:[%s225 + $0x1860] sm:$0xff]
        %v1096 = vld [vmem:[%s225 + $0x1868] sm:$0xff]
        %v1097 = vld [vmem:[%s225 + $0x1870] sm:$0xff]
        %v1098 = vld [vmem:[%s225 + $0x1878] sm:$0xff]
        %v1099 = vld [vmem:[%s225 + $0x1880] sm:$0xff]
        %v1100 = vld [vmem:[%s225 + $0x1888] sm:$0xff]
        %v1101 = vld [vmem:[%s225 + $0x1890] sm:$0xff]
        %v1102 = vld [vmem:[%s225 + $0x1898] sm:$0xff]
        %v1103 = vld [vmem:[%s225 + $0x18a0] sm:$0xff]
        %v1104 = vld [vmem:[%s225 + $0x18a8] sm:$0xff]
        %v1105 = vld [vmem:[%s225 + $0x18b0] sm:$0xff]
        %v1106 = vld [vmem:[%s225 + $0x18b8] sm:$0xff]
        %v1107 = vld [vmem:[%s225 + $0x18c0] sm:$0xff]
        %v1108 = vld [vmem:[%s225 + $0x18c8] sm:$0xff]
        %v1109 = vld [vmem:[%s225 + $0x18d0] sm:$0xff]
        %v1110 = vld [vmem:[%s225 + $0x18d8] sm:$0xff]
        %v1111 = vld [vmem:[%s225 + $0x18e0] sm:$0xff]
        %v1112 = vld [vmem:[%s225 + $0x18e8] sm:$0xff]
        %v1113 = vld [vmem:[%s225 + $0x18f0] sm:$0xff]
        %v1114 = vld [vmem:[%s225 + $0x18f8] sm:$0xff]
        %v1115 = vld [vmem:[%s225 + $0x1900] sm:$0xff]
        %v1116 = vld [vmem:[%s225 + $0x1908] sm:$0xff]
        %v1117 = vld [vmem:[%s225 + $0x1910] sm:$0xff]
        %v1118 = vld [vmem:[%s225 + $0x1918] sm:$0xff]
        %v1119 = vld [vmem:[%s225 + $0x1920] sm:$0xff]
        %v1120 = vld [vmem:[%s225 + $0x1928] sm:$0xff]
        %v1121 = vld [vmem:[%s225 + $0x1930] sm:$0xff]
        %v1122 = vld [vmem:[%s225 + $0x1938] sm:$0xff]
        %v1123 = vld [vmem:[%s225 + $0x1940] sm:$0xff]
        %v1124 = vld [vmem:[%s225 + $0x1948] sm:$0xff]
        %v1125 = vld [vmem:[%s225 + $0x1950] sm:$0xff]
        %v1126 = vld [vmem:[%s225 + $0x1958] sm:$0xff]
        %v1127 = vld [vmem:[%s225 + $0x1960] sm:$0xff]
        %v1128 = vld [vmem:[%s225 + $0x1968] sm:$0xff]
        %v1129 = vld [vmem:[%s225 + $0x1970] sm:$0xff]
        %v1130 = vld [vmem:[%s225 + $0x1978] sm:$0xff]
        %v1131 = vld [vmem:[%s225 + $0x1980] sm:$0xff]
        %v1132 = vld [vmem:[%s225 + $0x1988] sm:$0xff]
        %v1133 = vld [vmem:[%s225 + $0x1990] sm:$0xff]
        %v1134 = vld [vmem:[%s225 + $0x1998] sm:$0xff]
        %v1135 = vld [vmem:[%s225 + $0x19a0] sm:$0xff]
        %v1136 = vld [vmem:[%s225 + $0x19a8] sm:$0xff]
        %v1137 = vld [vmem:[%s225 + $0x19b0] sm:$0xff]
        %v1138 = vld [vmem:[%s225 + $0x19b8] sm:$0xff]
        %v1139 = vld [vmem:[%s225 + $0x19c0] sm:$0xff]
        %v1140 = vld [vmem:[%s225 + $0x19c8] sm:$0xff]
        %v1141 = vld [vmem:[%s225 + $0x19d0] sm:$0xff]
        %v1142 = vld [vmem:[%s225 + $0x19d8] sm:$0xff]
        %v1143 = vld [vmem:[%s225 + $0x19e0] sm:$0xff]
        %v1144 = vld [vmem:[%s225 + $0x19e8] sm:$0xff]
        %v1145 = vld [vmem:[%s225 + $0x19f0] sm:$0xff]
        %v1146 = vld [vmem:[%s225 + $0x19f8] sm:$0xff]
        %v1147 = vld [vmem:[%s225 + $0x1a00] sm:$0xff]
        %v1148 = vld [vmem:[%s225 + $0x1a08] sm:$0xff]
        %v1149 = vld [vmem:[%s225 + $0x1a10] sm:$0xff]
        %v1150 = vld [vmem:[%s225 + $0x1a18] sm:$0xff]
        %v1151 = vld [vmem:[%s225 + $0x1a20] sm:$0xff]
        %v1152 = vld [vmem:[%s225 + $0x1a28] sm:$0xff]
        %v1153 = vld [vmem:[%s225 + $0x1a30] sm:$0xff]
        %v1154 = vld [vmem:[%s225 + $0x1a38] sm:$0xff]
        %v1155 = vld [vmem:[%s225 + $0x1a40] sm:$0xff]
        %v1156 = vld [vmem:[%s225 + $0x1a48] sm:$0xff]
        %v1157 = vld [vmem:[%s225 + $0x1a50] sm:$0xff]
        %v1158 = vld [vmem:[%s225 + $0x1a58] sm:$0xff]
        %v1159 = vld [vmem:[%s225 + $0x1a60] sm:$0xff]
        %v1160 = vld [vmem:[%s225 + $0x1a68] sm:$0xff]
        %v1161 = vld [vmem:[%s225 + $0x1a70] sm:$0xff]
        %v1162 = vld [vmem:[%s225 + $0x1a78] sm:$0xff]
        %v1163 = vld [vmem:[%s225 + $0x1a80] sm:$0xff]
        %v1164 = vld [vmem:[%s225 + $0x1a88] sm:$0xff]
        %v1165 = vld [vmem:[%s225 + $0x1a90] sm:$0xff]
        %v1166 = vld [vmem:[%s225 + $0x1a98] sm:$0xff]
        %v1167 = vld [vmem:[%s225 + $0x1aa0] sm:$0xff]
        %v1168 = vld [vmem:[%s225 + $0x1aa8] sm:$0xff]
        %v1169 = vld [vmem:[%s225 + $0x1ab0] sm:$0xff]
        %v1170 = vld [vmem:[%s225 + $0x1ab8] sm:$0xff]
        %v1171 = vld [vmem:[%s225 + $0x1ac0] sm:$0xff]
        %v1172 = vld [vmem:[%s225 + $0x1ac8] sm:$0xff]
        %v1173 = vld [vmem:[%s225 + $0x1ad0] sm:$0xff]
        %v1174 = vld [vmem:[%s225 + $0x1ad8] sm:$0xff]
        %v1175 = vld [vmem:[%s225 + $0x1ae0] sm:$0xff]
        %v1176 = vld [vmem:[%s225 + $0x1ae8] sm:$0xff]
        %v1177 = vld [vmem:[%s225 + $0x1af0] sm:$0xff]
        %v1178 = vld [vmem:[%s225 + $0x1af8] sm:$0xff]
        %v1179 = vld [vmem:[%s225 + $0x1b00] sm:$0xff]
        %v1180 = vld [vmem:[%s225 + $0x1b08] sm:$0xff]
        %v1181 = vld [vmem:[%s225 + $0x1b10] sm:$0xff]
        %v1182 = vld [vmem:[%s225 + $0x1b18] sm:$0xff]
        %v1183 = vld [vmem:[%s225 + $0x1b20] sm:$0xff]
        %v1184 = vld [vmem:[%s225 + $0x1b28] sm:$0xff]
        %v1185 = vld [vmem:[%s225 + $0x1b30] sm:$0xff]
        %v1186 = vld [vmem:[%s225 + $0x1b38] sm:$0xff]
        %v1187 = vld [vmem:[%s225 + $0x1b40] sm:$0xff]
        %v1188 = vld [vmem:[%s225 + $0x1b48] sm:$0xff]
        %v1189 = vld [vmem:[%s225 + $0x1b50] sm:$0xff]
        %v1190 = vld [vmem:[%s225 + $0x1b58] sm:$0xff]
        %v1191 = vld [vmem:[%s225 + $0x1b60] sm:$0xff]
        %v1192 = vld [vmem:[%s225 + $0x1b68] sm:$0xff]
        %v1193 = vld [vmem:[%s225 + $0x1b70] sm:$0xff]
        %v1194 = vld [vmem:[%s225 + $0x1b78] sm:$0xff]
        %v1195 = vld [vmem:[%s225 + $0x1b80] sm:$0xff]
        %v1196 = vld [vmem:[%s225 + $0x1b88] sm:$0xff]
        %v1197 = vld [vmem:[%s225 + $0x1b90] sm:$0xff]
        %v1198 = vld [vmem:[%s225 + $0x1b98] sm:$0xff]
        %v1199 = vld [vmem:[%s225 + $0x1ba0] sm:$0xff]
        %v1200 = vld [vmem:[%s225 + $0x1ba8] sm:$0xff]
        %v1201 = vld [vmem:[%s225 + $0x1bb0] sm:$0xff]
        %v1202 = vld [vmem:[%s225 + $0x1bb8] sm:$0xff]
        %v1203 = vld [vmem:[%s225 + $0x1bc0] sm:$0xff]
        %v1204 = vld [vmem:[%s225 + $0x1bc8] sm:$0xff]
        %v1205 = vld [vmem:[%s225 + $0x1bd0] sm:$0xff]
        %v1206 = vld [vmem:[%s225 + $0x1bd8] sm:$0xff]
        %v1207 = vld [vmem:[%s225 + $0x1be0] sm:$0xff]
        %v1208 = vld [vmem:[%s225 + $0x1be8] sm:$0xff]
        %v1209 = vld [vmem:[%s225 + $0x1bf0] sm:$0xff]
        %v1210 = vld [vmem:[%s225 + $0x1bf8] sm:$0xff]
        %v1211 = vld [vmem:[%s225 + $0x1c00] sm:$0xff]
        %v1212 = vld [vmem:[%s225 + $0x1c08] sm:$0xff]
        %v1213 = vld [vmem:[%s225 + $0x1c10] sm:$0xff]
        %v1214 = vld [vmem:[%s225 + $0x1c18] sm:$0xff]
        %v1215 = vld [vmem:[%s225 + $0x1c20] sm:$0xff]
        %v1216 = vld [vmem:[%s225 + $0x1c28] sm:$0xff]
        %v1217 = vld [vmem:[%s225 + $0x1c30] sm:$0xff]
        %v1218 = vld [vmem:[%s225 + $0x1c38] sm:$0xff]
        %v1219 = vld [vmem:[%s225 + $0x1c40] sm:$0xff]
        %v1220 = vld [vmem:[%s225 + $0x1c48] sm:$0xff]
        %v1221 = vld [vmem:[%s225 + $0x1c50] sm:$0xff]
        %v1222 = vld [vmem:[%s225 + $0x1c58] sm:$0xff]
        %v1223 = vld [vmem:[%s225 + $0x1c60] sm:$0xff]
        %v1224 = vld [vmem:[%s225 + $0x1c68] sm:$0xff]
        %v1225 = vld [vmem:[%s225 + $0x1c70] sm:$0xff]
        %v1226 = vld [vmem:[%s225 + $0x1c78] sm:$0xff]
        %v1227 = vld [vmem:[%s225 + $0x1c80] sm:$0xff]
        %v1228 = vld [vmem:[%s225 + $0x1c88] sm:$0xff]
        %v1229 = vld [vmem:[%s225 + $0x1c90] sm:$0xff]
        %v1230 = vld [vmem:[%s225 + $0x1c98] sm:$0xff]
        %v1231 = vld [vmem:[%s225 + $0x1ca0] sm:$0xff]
        %v1232 = vld [vmem:[%s225 + $0x1ca8] sm:$0xff]
        %v1233 = vld [vmem:[%s225 + $0x1cb0] sm:$0xff]
        %v1234 = vld [vmem:[%s225 + $0x1cb8] sm:$0xff]
        %v1235 = vld [vmem:[%s225 + $0x1cc0] sm:$0xff]
        %v1236 = vld [vmem:[%s225 + $0x1cc8] sm:$0xff]
        %v1237 = vld [vmem:[%s225 + $0x1cd0] sm:$0xff]
        %v1238 = vld [vmem:[%s225 + $0x1cd8] sm:$0xff]
        %v1239 = vld [vmem:[%s225 + $0x1ce0] sm:$0xff]
        %v1240 = vld [vmem:[%s225 + $0x1ce8] sm:$0xff]
        %v1241 = vld [vmem:[%s225 + $0x1cf0] sm:$0xff]
        %v1242 = vld [vmem:[%s225 + $0x1cf8] sm:$0xff]
        %v1243 = vld [vmem:[%s225 + $0x1d00] sm:$0xff]
        %v1244 = vld [vmem:[%s225 + $0x1d08] sm:$0xff]
        %v1245 = vld [vmem:[%s225 + $0x1d10] sm:$0xff]
        %v1246 = vld [vmem:[%s225 + $0x1d18] sm:$0xff]
        %v1247 = vld [vmem:[%s225 + $0x1d20] sm:$0xff]
        %v1248 = vld [vmem:[%s225 + $0x1d28] sm:$0xff]
        %v1249 = vld [vmem:[%s225 + $0x1d30] sm:$0xff]
        %v1250 = vld [vmem:[%s225 + $0x1d38] sm:$0xff]
        %v1251 = vld [vmem:[%s225 + $0x1d40] sm:$0xff]
        %v1252 = vld [vmem:[%s225 + $0x1d48] sm:$0xff]
        %v1253 = vld [vmem:[%s225 + $0x1d50] sm:$0xff]
        %v1254 = vld [vmem:[%s225 + $0x1d58] sm:$0xff]
        %v1255 = vld [vmem:[%s225 + $0x1d60] sm:$0xff]
        %v1256 = vld [vmem:[%s225 + $0x1d68] sm:$0xff]
        %v1257 = vld [vmem:[%s225 + $0x1d70] sm:$0xff]
        %v1258 = vld [vmem:[%s225 + $0x1d78] sm:$0xff]
        %v1259 = vld [vmem:[%s225 + $0x1d80] sm:$0xff]
        %v1260 = vld [vmem:[%s225 + $0x1d88] sm:$0xff]
        %v1261 = vld [vmem:[%s225 + $0x1d90] sm:$0xff]
        %v1262 = vld [vmem:[%s225 + $0x1d98] sm:$0xff]
        %v1263 = vld [vmem:[%s225 + $0x1da0] sm:$0xff]
        %v1264 = vld [vmem:[%s225 + $0x1da8] sm:$0xff]
        %v1265 = vld [vmem:[%s225 + $0x1db0] sm:$0xff]
        %v1266 = vld [vmem:[%s225 + $0x1db8] sm:$0xff]
        %v1267 = vld [vmem:[%s225 + $0x1dc0] sm:$0xff]
        %v1268 = vld [vmem:[%s225 + $0x1dc8] sm:$0xff]
        %v1269 = vld [vmem:[%s225 + $0x1dd0] sm:$0xff]
        %v1270 = vld [vmem:[%s225 + $0x1dd8] sm:$0xff]
        %v1271 = vld [vmem:[%s225 + $0x1de0] sm:$0xff]
        %v1272 = vld [vmem:[%s225 + $0x1de8] sm:$0xff]
        %v1273 = vld [vmem:[%s225 + $0x1df0] sm:$0xff]
        %v1274 = vld [vmem:[%s225 + $0x1df8] sm:$0xff]
        %v1275 = vld [vmem:[%s225 + $0x1e00] sm:$0xff]
        %v1276 = vld [vmem:[%s225 + $0x1e08] sm:$0xff]
        %v1277 = vld [vmem:[%s225 + $0x1e10] sm:$0xff]
        %v1278 = vld [vmem:[%s225 + $0x1e18] sm:$0xff]
        %v1279 = vld [vmem:[%s225 + $0x1e20] sm:$0xff]
        %v1280 = vld [vmem:[%s225 + $0x1e28] sm:$0xff]
        %v1281 = vld [vmem:[%s225 + $0x1e30] sm:$0xff]
        %v1282 = vld [vmem:[%s225 + $0x1e38] sm:$0xff]
        %v1283 = vld [vmem:[%s225 + $0x1e40] sm:$0xff]
        %v1284 = vld [vmem:[%s225 + $0x1e48] sm:$0xff]
        %v1285 = vld [vmem:[%s225 + $0x1e50] sm:$0xff]
        %v1286 = vld [vmem:[%s225 + $0x1e58] sm:$0xff]
        %v1287 = vld [vmem:[%s225 + $0x1e60] sm:$0xff]
        %v1288 = vld [vmem:[%s225 + $0x1e68] sm:$0xff]
        %v1289 = vld [vmem:[%s225 + $0x1e70] sm:$0xff]
        %v1290 = vld [vmem:[%s225 + $0x1e78] sm:$0xff]
        %v1291 = vld [vmem:[%s225 + $0x1e80] sm:$0xff]
        %v1292 = vld [vmem:[%s225 + $0x1e88] sm:$0xff]
        %v1293 = vld [vmem:[%s225 + $0x1e90] sm:$0xff]
        %v1294 = vld [vmem:[%s225 + $0x1e98] sm:$0xff]
        %v1295 = vld [vmem:[%s225 + $0x1ea0] sm:$0xff]
        %v1296 = vld [vmem:[%s225 + $0x1ea8] sm:$0xff]
        %v1297 = vld [vmem:[%s225 + $0x1eb0] sm:$0xff]
        %v1298 = vld [vmem:[%s225 + $0x1eb8] sm:$0xff]
        %v1299 = vld [vmem:[%s225 + $0x1ec0] sm:$0xff]
        %v1300 = vld [vmem:[%s225 + $0x1ec8] sm:$0xff]
        %v1301 = vld [vmem:[%s225 + $0x1ed0] sm:$0xff]
        %v1302 = vld [vmem:[%s225 + $0x1ed8] sm:$0xff]
        %v1303 = vld [vmem:[%s225 + $0x1ee0] sm:$0xff]
        %v1304 = vld [vmem:[%s225 + $0x1ee8] sm:$0xff]
        %v1305 = vld [vmem:[%s225 + $0x1ef0] sm:$0xff]
        %v1306 = vld [vmem:[%s225 + $0x1ef8] sm:$0xff]
        %v1307 = vld [vmem:[%s225 + $0x1f00] sm:$0xff]
        %v1308 = vld [vmem:[%s225 + $0x1f08] sm:$0xff]
        %v1309 = vld [vmem:[%s225 + $0x1f10] sm:$0xff]
        %v1310 = vld [vmem:[%s225 + $0x1f18] sm:$0xff]
        %v1311 = vld [vmem:[%s225 + $0x1f20] sm:$0xff]
        %v1312 = vld [vmem:[%s225 + $0x1f28] sm:$0xff]
        %v1313 = vld [vmem:[%s225 + $0x1f30] sm:$0xff]
        %v1314 = vld [vmem:[%s225 + $0x1f38] sm:$0xff]
        %v1315 = vld [vmem:[%s225 + $0x1f40] sm:$0xff]
        %v1316 = vld [vmem:[%s225 + $0x1f48] sm:$0xff]
        %v1317 = vld [vmem:[%s225 + $0x1f50] sm:$0xff]
        %v1318 = vld [vmem:[%s225 + $0x1f58] sm:$0xff]
        %v1319 = vld [vmem:[%s225 + $0x1f60] sm:$0xff]
        %v1320 = vld [vmem:[%s225 + $0x1f68] sm:$0xff]
        %v1321 = vld [vmem:[%s225 + $0x1f70] sm:$0xff]
        %v1322 = vld [vmem:[%s225 + $0x1f78] sm:$0xff]
        %v1323 = vld [vmem:[%s225 + $0x1f80] sm:$0xff]
        %v1324 = vld [vmem:[%s225 + $0x1f88] sm:$0xff]
        %v1325 = vld [vmem:[%s225 + $0x1f90] sm:$0xff]
        %v1326 = vld [vmem:[%s225 + $0x1f98] sm:$0xff]
        %v1327 = vld [vmem:[%s225 + $0x1fa0] sm:$0xff]
        %v1328 = vld [vmem:[%s225 + $0x1fa8] sm:$0xff]
        %v1329 = vld [vmem:[%s225 + $0x1fb0] sm:$0xff]
        %v1330 = vld [vmem:[%s225 + $0x1fb8] sm:$0xff]
        %v1331 = vld [vmem:[%s225 + $0x1fc0] sm:$0xff]
        %v1332 = vld [vmem:[%s225 + $0x1fc8] sm:$0xff]
        %v1333 = vld [vmem:[%s225 + $0x1fd0] sm:$0xff]
        %v1334 = vld [vmem:[%s225 + $0x1fd8] sm:$0xff]
        %v1335 = vld [vmem:[%s225 + $0x1fe0] sm:$0xff]
        %v1336 = vld [vmem:[%s225 + $0x1fe8] sm:$0xff]
        %v1337 = vld [vmem:[%s225 + $0x1ff0] sm:$0xff]
        %v1338 = vld [vmem:[%s225 + $0x1ff8] sm:$0xff]
        %v1339 = vld [vmem:[%s225 + $0x2000] sm:$0xff]
        %v1340 = vld [vmem:[%s225 + $0x2008] sm:$0xff]
        %v1341 = vld [vmem:[%s225 + $0x2010] sm:$0xff]
        %v1342 = vld [vmem:[%s225 + $0x2018] sm:$0xff]
        %v1343 = vld [vmem:[%s225 + $0x2020] sm:$0xff]
        %v1344 = vld [vmem:[%s225 + $0x2028] sm:$0xff]
        %v1345 = vld [vmem:[%s225 + $0x2030] sm:$0xff]
        %v1346 = vld [vmem:[%s225 + $0x2038] sm:$0xff]
        %v1347 = vld [vmem:[%s225 + $0x2040] sm:$0xff]
        %v1348 = vld [vmem:[%s225 + $0x2048] sm:$0xff]
        %v1349 = vld [vmem:[%s225 + $0x2050] sm:$0xff]
        %v1350 = vld [vmem:[%s225 + $0x2058] sm:$0xff]
        %v1351 = vld [vmem:[%s225 + $0x2060] sm:$0xff]
        %v1352 = vld [vmem:[%s225 + $0x2068] sm:$0xff]
        %v1353 = vld [vmem:[%s225 + $0x2070] sm:$0xff]
        %v1354 = vld [vmem:[%s225 + $0x2078] sm:$0xff]
        %v1355 = vld [vmem:[%s225 + $0x2080] sm:$0xff]
        %v1356 = vld [vmem:[%s225 + $0x2088] sm:$0xff]
        %v1357 = vld [vmem:[%s225 + $0x2090] sm:$0xff]
        %v1358 = vld [vmem:[%s225 + $0x2098] sm:$0xff]
        %v1359 = vld [vmem:[%s225 + $0x20a0] sm:$0xff]
        %v1360 = vld [vmem:[%s225 + $0x20a8] sm:$0xff]
        %v1361 = vld [vmem:[%s225 + $0x20b0] sm:$0xff]
        %v1362 = vld [vmem:[%s225 + $0x20b8] sm:$0xff]
        %v1363 = vld [vmem:[%s225 + $0x20c0] sm:$0xff]
        %v1364 = vld [vmem:[%s225 + $0x20c8] sm:$0xff]
        %v1365 = vld [vmem:[%s225 + $0x20d0] sm:$0xff]
        %v1366 = vld [vmem:[%s225 + $0x20d8] sm:$0xff]
        %v1367 = vld [vmem:[%s225 + $0x20e0] sm:$0xff]
        %v1368 = vld [vmem:[%s225 + $0x20e8] sm:$0xff]
        %v1369 = vld [vmem:[%s225 + $0x20f0] sm:$0xff]
        %v1370 = vld [vmem:[%s225 + $0x20f8] sm:$0xff]
        %v1371 = vld [vmem:[%s225 + $0x2100] sm:$0xff]
        %v1372 = vld [vmem:[%s225 + $0x2108] sm:$0xff]
        %v1373 = vld [vmem:[%s225 + $0x2110] sm:$0xff]
        %v1374 = vld [vmem:[%s225 + $0x2118] sm:$0xff]
        %v1375 = vld [vmem:[%s225 + $0x2120] sm:$0xff]
        %v1376 = vld [vmem:[%s225 + $0x2128] sm:$0xff]
        %v1377 = vld [vmem:[%s225 + $0x2130] sm:$0xff]
        %v1378 = vld [vmem:[%s225 + $0x2138] sm:$0xff]
        %v1379 = vld [vmem:[%s225 + $0x2140] sm:$0xff]
        %v1380 = vld [vmem:[%s225 + $0x2148] sm:$0xff]
        %v1381 = vld [vmem:[%s225 + $0x2150] sm:$0xff]
        %v1382 = vld [vmem:[%s225 + $0x2158] sm:$0xff]
        %v1383 = vld [vmem:[%s225 + $0x2160] sm:$0xff]
        %v1384 = vld [vmem:[%s225 + $0x2168] sm:$0xff]
        %v1385 = vld [vmem:[%s225 + $0x2170] sm:$0xff]
        %v1386 = vld [vmem:[%s225 + $0x2178] sm:$0xff]
        %v1387 = vld [vmem:[%s225 + $0x2180] sm:$0xff]
        %v1388 = vld [vmem:[%s225 + $0x2188] sm:$0xff]
        %v1389 = vld [vmem:[%s225 + $0x2190] sm:$0xff]
        %v1390 = vld [vmem:[%s225 + $0x2198] sm:$0xff]
        %v1391 = vld [vmem:[%s225 + $0x21a0] sm:$0xff]
        %v1392 = vld [vmem:[%s225 + $0x21a8] sm:$0xff]
        %v1393 = vld [vmem:[%s225 + $0x21b0] sm:$0xff]
        %v1394 = vld [vmem:[%s225 + $0x21b8] sm:$0xff]
        %v1395 = vld [vmem:[%s225 + $0x21c0] sm:$0xff]
        %v1396 = vld [vmem:[%s225 + $0x21c8] sm:$0xff]
        %v1397 = vld [vmem:[%s225 + $0x21d0] sm:$0xff]
        %v1398 = vld [vmem:[%s225 + $0x21d8] sm:$0xff]
        %v1399 = vld [vmem:[%s225 + $0x21e0] sm:$0xff]
        %v1400 = vld [vmem:[%s225 + $0x21e8] sm:$0xff]
        %v1401 = vld [vmem:[%s225 + $0x21f0] sm:$0xff]
        %v1402 = vld [vmem:[%s225 + $0x21f8] sm:$0xff]
        %v1403 = vld [vmem:[%s225 + $0x2200] sm:$0xff]
        %v1404 = vld [vmem:[%s225 + $0x2208] sm:$0xff]
        %v1405 = vld [vmem:[%s225 + $0x2210] sm:$0xff]
        %v1406 = vld [vmem:[%s225 + $0x2218] sm:$0xff]
        %v1407 = vld [vmem:[%s225 + $0x2220] sm:$0xff]
        %v1408 = vld [vmem:[%s225 + $0x2228] sm:$0xff]
        %v1409 = vld [vmem:[%s225 + $0x2230] sm:$0xff]
        %v1410 = vld [vmem:[%s225 + $0x2238] sm:$0xff]
        %v1411 = vld [vmem:[%s225 + $0x2240] sm:$0xff]
        %v1412 = vld [vmem:[%s225 + $0x2248] sm:$0xff]
        %v1413 = vld [vmem:[%s225 + $0x2250] sm:$0xff]
        %v1414 = vld [vmem:[%s225 + $0x2258] sm:$0xff]
        %v1415 = vld [vmem:[%s225 + $0x2260] sm:$0xff]
        %v1416 = vld [vmem:[%s225 + $0x2268] sm:$0xff]
        %v1417 = vld [vmem:[%s225 + $0x2270] sm:$0xff]
        %v1418 = vld [vmem:[%s225 + $0x2278] sm:$0xff]
        %v1419 = vld [vmem:[%s225 + $0x2280] sm:$0xff]
        %v1420 = vld [vmem:[%s225 + $0x2288] sm:$0xff]
        %v1421 = vld [vmem:[%s225 + $0x2290] sm:$0xff]
        %v1422 = vld [vmem:[%s225 + $0x2298] sm:$0xff]
        %v1423 = vld [vmem:[%s225 + $0x22a0] sm:$0xff]
        %v1424 = vld [vmem:[%s225 + $0x22a8] sm:$0xff]
        %v1425 = vld [vmem:[%s225 + $0x22b0] sm:$0xff]
        %v1426 = vld [vmem:[%s225 + $0x22b8] sm:$0xff]
        %v1427 = vld [vmem:[%s225 + $0x22c0] sm:$0xff]
        %v1428 = vld [vmem:[%s225 + $0x22c8] sm:$0xff]
        %v1429 = vld [vmem:[%s225 + $0x22d0] sm:$0xff]
        %v1430 = vld [vmem:[%s225 + $0x22d8] sm:$0xff]
        %v1431 = vld [vmem:[%s225 + $0x22e0] sm:$0xff]
        %v1432 = vld [vmem:[%s225 + $0x22e8] sm:$0xff]
        %v1433 = vld [vmem:[%s225 + $0x22f0] sm:$0xff]
        %v1434 = vld [vmem:[%s225 + $0x22f8] sm:$0xff]
        %v1435 = vld [vmem:[%s225 + $0x2300] sm:$0xff]
        %v1436 = vld [vmem:[%s225 + $0x2308] sm:$0xff]
        %v1437 = vld [vmem:[%s225 + $0x2310] sm:$0xff]
        %v1438 = vld [vmem:[%s225 + $0x2318] sm:$0xff]
        %v1439 = vld [vmem:[%s225 + $0x2320] sm:$0xff]
        %v1440 = vld [vmem:[%s225 + $0x2328] sm:$0xff]
        %v1441 = vld [vmem:[%s225 + $0x2330] sm:$0xff]
        %v1442 = vld [vmem:[%s225 + $0x2338] sm:$0xff]
        %v1443 = vld [vmem:[%s225 + $0x2340] sm:$0xff]
        %v1444 = vld [vmem:[%s225 + $0x2348] sm:$0xff]
        %v1445 = vld [vmem:[%s225 + $0x2350] sm:$0xff]
        %v1446 = vld [vmem:[%s225 + $0x2358] sm:$0xff]
        %v1447 = vld [vmem:[%s225 + $0x2360] sm:$0xff]
        %v1448 = vld [vmem:[%s225 + $0x2368] sm:$0xff]
        %v1449 = vld [vmem:[%s225 + $0x2370] sm:$0xff]
        %v1450 = vld [vmem:[%s225 + $0x2378] sm:$0xff]
        %v1451 = vld [vmem:[%s225 + $0x2380] sm:$0xff]
        %v1452 = vld [vmem:[%s225 + $0x2388] sm:$0xff]
        %v1453 = vld [vmem:[%s225 + $0x2390] sm:$0xff]
        %v1454 = vld [vmem:[%s225 + $0x2398] sm:$0xff]
        %v1455 = vld [vmem:[%s225 + $0x23a0] sm:$0xff]
        %v1456 = vld [vmem:[%s225 + $0x23a8] sm:$0xff]
        %v1457 = vld [vmem:[%s225 + $0x23b0] sm:$0xff]
        %v1458 = vld [vmem:[%s225 + $0x23b8] sm:$0xff]
        %v1459 = vld [vmem:[%s225 + $0x23c0] sm:$0xff]
        %v1460 = vld [vmem:[%s225 + $0x23c8] sm:$0xff]
        %v1461 = vld [vmem:[%s225 + $0x23d0] sm:$0xff]
        %v1462 = vld [vmem:[%s225 + $0x23d8] sm:$0xff]
        %v1463 = vld [vmem:[%s225 + $0x23e0] sm:$0xff]
        %v1464 = vld [vmem:[%s225 + $0x23e8] sm:$0xff]
        %v1465 = vld [vmem:[%s225 + $0x23f0] sm:$0xff]
        %v1466 = vld [vmem:[%s225 + $0x23f8] sm:$0xff]
        %v1467 = vld [vmem:[%s234] sm:$0x7]
        %v1469 = vlaneseq
        %v1470 = vshrl.u32 %v1469, 7
        %v1471 = vsub.s32 0, %v1470
        %v1472 = vrot.slane %v1467, %v1471
        %v1473 = vlaneseq
        %v1474 = vshrl.u32 %v1473, 7
        %v1475 = vsub.s32 1, %v1474
        %v1476 = vrot.slane %v1467, %v1475
        %v1477 = vlaneseq
        %v1478 = vshrl.u32 %v1477, 7
        %v1479 = vsub.s32 2, %v1478
        %v1480 = vrot.slane %v1467, %v1479
        %1484 = vmatprep.subr.mxu0 %v316
        %1485 = vmatpush1.msra.mxu0 %v315
        %1486 = vmatprep.subr.mxu0 %v319
        %1487 = vmatpush1.msra.mxu0 %v318
        %1488 = vmatprep.subr.mxu0 %v322
        %1489 = vmatpush1.msra.mxu0 %v321
        %1490 = vmatprep.subr.mxu0 %v325
        %1491 = vmatpush1.msra.mxu0 %v324
        %1492 = vmatprep.subr.mxu0 %v328
        %1493 = vmatpush1.msra.mxu0 %v327
        %1494 = vmatprep.subr.mxu0 %v331
        %1495 = vmatpush1.msra.mxu0 %v330
        %1496 = vmatprep.subr.mxu0 %v334
        %1497 = vmatpush1.msra.mxu0 %v333
        %1498 = vmatprep.subr.mxu0 %v337
        %1499 = vmatpush1.msra.mxu0 %v336
        %1500 = vmatprep.subr.mxu0 %v340
        %1501 = vmatpush1.msra.mxu0 %v339
        %1502 = vmatprep.subr.mxu0 %v343
        %1503 = vmatpush1.msra.mxu0 %v342
        %1504 = vmatprep.subr.mxu0 %v346
        %1505 = vmatpush1.msra.mxu0 %v345
        %1506 = vmatprep.subr.mxu0 %v349
        %1507 = vmatpush1.msra.mxu0 %v348
        %1508 = vmatprep.subr.mxu0 %v352
        %1509 = vmatpush1.msra.mxu0 %v351
        %1510 = vmatprep.subr.mxu0 %v355
        %1511 = vmatpush1.msra.mxu0 %v354
        %1512 = vmatprep.subr.mxu0 %v358
        %1513 = vmatpush1.msra.mxu0 %v357
        %1514 = vmatprep.subr.mxu0 %v361
        %1515 = vmatpush1.msra.mxu0 %v360
        %1516 = vmatprep.subr.mxu0 %v364
        %1517 = vmatpush1.msra.mxu0 %v363
        %1518 = vmatprep.subr.mxu0 %v367
        %1519 = vmatpush1.msra.mxu0 %v366
        %1520 = vmatprep.subr.mxu0 %v370
        %1521 = vmatpush1.msra.mxu0 %v369
        %1522 = vmatprep.subr.mxu0 %v373
        %1523 = vmatpush1.msra.mxu0 %v372
        %1524 = vmatprep.subr.mxu0 %v376
        %1525 = vmatpush1.msra.mxu0 %v375
        %1526 = vmatprep.subr.mxu0 %v379
        %1527 = vmatpush1.msra.mxu0 %v378
        %1528 = vmatprep.subr.mxu0 %v382
        %1529 = vmatpush1.msra.mxu0 %v381
        %1530 = vmatprep.subr.mxu0 %v385
        %1531 = vmatpush1.msra.mxu0 %v384
        %1532 = vmatprep.subr.mxu0 %v388
        %1533 = vmatpush1.msra.mxu0 %v387
        %1534 = vmatprep.subr.mxu0 %v391
        %1535 = vmatpush1.msra.mxu0 %v390
        %1536 = vmatprep.subr.mxu0 %v394
        %1537 = vmatpush1.msra.mxu0 %v393
        %1538 = vmatprep.subr.mxu0 %v397
        %1539 = vmatpush1.msra.mxu0 %v396
        %1540 = vmatprep.subr.mxu0 %v400
        %1541 = vmatpush1.msra.mxu0 %v399
        %1542 = vmatprep.subr.mxu0 %v403
        %1543 = vmatpush1.msra.mxu0 %v402
        %1544 = vmatprep.subr.mxu0 %v406
        %1545 = vmatpush1.msra.mxu0 %v405
        %1546 = vmatprep.subr.mxu0 %v409
        %1547 = vmatpush1.msra.mxu0 %v408
        %1548 = vmatprep.mubr.f32.mxu0 %v268
        %1549 = vmatmul.mubr.f32.gmra.mrb[0].mxu0 %v267
        %v1550 = vpop.f32.mrb[0].mxu0
        %v1551 = vadd.f32 %v1472, %v1550
        %v1552 = vpop.f32.mrb[0].mxu0
        %v1553 = vadd.f32 %v1476, %v1552
        %1554 = vmatprep.mubr.f32.mxu0 %v292
        %1555 = vmatmul.mubr.f32.gmra.mrb[0].mxu0 %v291
        %v1556 = vpop.f32.mrb[0].mxu0
        %v1557 = vadd.f32 %v1472, %v1556
        %v1558 = vpop.f32.mrb[0].mxu0
        %v1559 = vadd.f32 %v1476, %v1558
        %1560 = vdwg.mxu0
        %1561 = vmatprep.subr.mxu0 %v412
        %1562 = vmatpush1.msra.mxu0 %v411
        %1563 = vmatprep.subr.mxu0 %v415
        %1564 = vmatpush1.msra.mxu0 %v414
        %1565 = vmatprep.subr.mxu0 %v418
        %1566 = vmatpush1.msra.mxu0 %v417
        %1567 = vmatprep.subr.mxu0 %v421
        %1568 = vmatpush1.msra.mxu0 %v420
        %1569 = vmatprep.subr.mxu0 %v424
        %1570 = vmatpush1.msra.mxu0 %v423
        %1571 = vmatprep.subr.mxu0 %v427
        %1572 = vmatpush1.msra.mxu0 %v426
        %1573 = vmatprep.subr.mxu0 %v430
        %1574 = vmatpush1.msra.mxu0 %v429
        %1575 = vmatprep.subr.mxu0 %v433
        %1576 = vmatpush1.msra.mxu0 %v432
        %1577 = vmatprep.subr.mxu0 %v436
        %1578 = vmatpush1.msra.mxu0 %v435
        %1579 = vmatprep.subr.mxu0 %v439
        %1580 = vmatpush1.msra.mxu0 %v438
        %1581 = vmatprep.subr.mxu0 %v442
        %1582 = vmatpush1.msra.mxu0 %v441
        %1583 = vmatprep.subr.mxu0 %v445
        %1584 = vmatpush1.msra.mxu0 %v444
        %1585 = vmatprep.subr.mxu0 %v448
        %1586 = vmatpush1.msra.mxu0 %v447
        %1587 = vmatprep.subr.mxu0 %v451
        %1588 = vmatpush1.msra.mxu0 %v450
        %1589 = vmatprep.subr.mxu0 %v454
        %1590 = vmatpush1.msra.mxu0 %v453
        %1591 = vmatprep.subr.mxu0 %v457
        %1592 = vmatpush1.msra.mxu0 %v456
        %1593 = vmatprep.subr.mxu0 %v460
        %1594 = vmatpush1.msra.mxu0 %v459
        %1595 = vmatprep.subr.mxu0 %v463
        %1596 = vmatpush1.msra.mxu0 %v462
        %1597 = vmatprep.subr.mxu0 %v466
        %1598 = vmatpush1.msra.mxu0 %v465
        %1599 = vmatprep.subr.mxu0 %v469
        %1600 = vmatpush1.msra.mxu0 %v468
        %1601 = vmatprep.subr.mxu0 %v472
        %1602 = vmatpush1.msra.mxu0 %v471
        %1603 = vmatprep.subr.mxu0 %v475
        %1604 = vmatpush1.msra.mxu0 %v474
        %1605 = vmatprep.subr.mxu0 %v478
        %1606 = vmatpush1.msra.mxu0 %v477
        %1607 = vmatprep.subr.mxu0 %v481
        %1608 = vmatpush1.msra.mxu0 %v480
        %1609 = vmatprep.subr.mxu0 %v484
        %1610 = vmatpush1.msra.mxu0 %v483
        %1611 = vmatprep.subr.mxu0 %v487
        %1612 = vmatpush1.msra.mxu0 %v486
        %1613 = vmatprep.subr.mxu0 %v490
        %1614 = vmatpush1.msra.mxu0 %v489
        %1615 = vmatprep.subr.mxu0 %v493
        %1616 = vmatpush1.msra.mxu0 %v492
        %1617 = vmatprep.subr.mxu0 %v496
        %1618 = vmatpush1.msra.mxu0 %v495
        %1619 = vmatprep.subr.mxu0 %v499
        %1620 = vmatpush1.msra.mxu0 %v498
        %1621 = vmatprep.subr.mxu0 %v502
        %1622 = vmatpush1.msra.mxu0 %v501
        %1623 = vmatprep.subr.mxu0 %v505
        %1624 = vmatpush1.msra.mxu0 %v504
        %1625 = vmatprep.mubr.f32.mxu0 %v270
        %1626 = vmatmul.mubr.f32.gmra.mrb[0].mxu0 %v269
        %v1627 = vpop.f32.mrb[0].mxu0
        %v1628 = vadd.f32 %v1551, %v1627
        %v1629 = vpop.f32.mrb[0].mxu0
        %v1630 = vadd.f32 %v1553, %v1629
        %1631 = vmatprep.mubr.f32.mxu0 %v294
        %1632 = vmatmul.mubr.f32.gmra.mrb[0].mxu0 %v293
        %v1633 = vpop.f32.mrb[0].mxu0
        %v1634 = vadd.f32 %v1557, %v1633
        %v1635 = vpop.f32.mrb[0].mxu0
        %v1636 = vadd.f32 %v1559, %v1635
        %1637 = vdwg.mxu0
        %1638 = vmatprep.subr.mxu0 %v508
        %1639 = vmatpush1.msra.mxu0 %v507
        %1640 = vmatprep.subr.mxu0 %v511
        %1641 = vmatpush1.msra.mxu0 %v510
        %1642 = vmatprep.subr.mxu0 %v514
        %1643 = vmatpush1.msra.mxu0 %v513
        %1644 = vmatprep.subr.mxu0 %v517
        %1645 = vmatpush1.msra.mxu0 %v516
        %1646 = vmatprep.subr.mxu0 %v520
        %1647 = vmatpush1.msra.mxu0 %v519
        %1648 = vmatprep.subr.mxu0 %v523
        %1649 = vmatpush1.msra.mxu0 %v522
        %1650 = vmatprep.subr.mxu0 %v526
        %1651 = vmatpush1.msra.mxu0 %v525
        %1652 = vmatprep.subr.mxu0 %v529
        %1653 = vmatpush1.msra.mxu0 %v528
        %1654 = vmatprep.subr.mxu0 %v532
        %1655 = vmatpush1.msra.mxu0 %v531
        %1656 = vmatprep.subr.mxu0 %v535
        %1657 = vmatpush1.msra.mxu0 %v534
        %1658 = vmatprep.subr.mxu0 %v538
        %1659 = vmatpush1.msra.mxu0 %v537
        %1660 = vmatprep.subr.mxu0 %v541
        %1661 = vmatpush1.msra.mxu0 %v540
        %1662 = vmatprep.subr.mxu0 %v544
        %1663 = vmatpush1.msra.mxu0 %v543
        %1664 = vmatprep.subr.mxu0 %v547
        %1665 = vmatpush1.msra.mxu0 %v546
        %1666 = vmatprep.subr.mxu0 %v550
        %1667 = vmatpush1.msra.mxu0 %v549
        %1668 = vmatprep.subr.mxu0 %v553
        %1669 = vmatpush1.msra.mxu0 %v552
        %1670 = vmatprep.subr.mxu0 %v556
        %1671 = vmatpush1.msra.mxu0 %v555
        %1672 = vmatprep.subr.mxu0 %v559
        %1673 = vmatpush1.msra.mxu0 %v558
        %1674 = vmatprep.subr.mxu0 %v562
        %1675 = vmatpush1.msra.mxu0 %v561
        %1676 = vmatprep.subr.mxu0 %v565
        %1677 = vmatpush1.msra.mxu0 %v564
        %1678 = vmatprep.subr.mxu0 %v568
        %1679 = vmatpush1.msra.mxu0 %v567
        %1680 = vmatprep.subr.mxu0 %v571
        %1681 = vmatpush1.msra.mxu0 %v570
        %1682 = vmatprep.subr.mxu0 %v574
        %1683 = vmatpush1.msra.mxu0 %v573
        %1684 = vmatprep.subr.mxu0 %v577
        %1685 = vmatpush1.msra.mxu0 %v576
        %1686 = vmatprep.subr.mxu0 %v580
        %1687 = vmatpush1.msra.mxu0 %v579
        %1688 = vmatprep.subr.mxu0 %v583
        %1689 = vmatpush1.msra.mxu0 %v582
        %1690 = vmatprep.subr.mxu0 %v586
        %1691 = vmatpush1.msra.mxu0 %v585
        %1692 = vmatprep.subr.mxu0 %v589
        %1693 = vmatpush1.msra.mxu0 %v588
        %1694 = vmatprep.subr.mxu0 %v592
        %1695 = vmatpush1.msra.mxu0 %v591
        %1696 = vmatprep.subr.mxu0 %v595
        %1697 = vmatpush1.msra.mxu0 %v594
        %1698 = vmatprep.subr.mxu0 %v598
        %1699 = vmatpush1.msra.mxu0 %v597
        %1700 = vmatprep.subr.mxu0 %v601
        %1701 = vmatpush1.msra.mxu0 %v600
        %1702 = vmatprep.mubr.f32.mxu0 %v272
        %1703 = vmatmul.mubr.f32.gmra.mrb[0].mxu0 %v271
        %v1704 = vpop.f32.mrb[0].mxu0
        %v1705 = vadd.f32 %v1628, %v1704
        %v1706 = vpop.f32.mrb[0].mxu0
        %v1707 = vadd.f32 %v1630, %v1706
        %1708 = vmatprep.mubr.f32.mxu0 %v296
        %1709 = vmatmul.mubr.f32.gmra.mrb[0].mxu0 %v295
        %v1710 = vpop.f32.mrb[0].mxu0
        %v1711 = vadd.f32 %v1634, %v1710
        %v1712 = vpop.f32.mrb[0].mxu0
        %v1713 = vadd.f32 %v1636, %v1712
        %1714 = vdwg.mxu0
        %1715 = vmatprep.subr.mxu0 %v604
        %1716 = vmatpush1.msra.mxu0 %v603
        %1717 = vmatprep.subr.mxu0 %v607
        %1718 = vmatpush1.msra.mxu0 %v606
        %1719 = vmatprep.subr.mxu0 %v610
        %1720 = vmatpush1.msra.mxu0 %v609
        %1721 = vmatprep.subr.mxu0 %v613
        %1722 = vmatpush1.msra.mxu0 %v612
        %1723 = vmatprep.subr.mxu0 %v616
        %1724 = vmatpush1.msra.mxu0 %v615
        %1725 = vmatprep.subr.mxu0 %v619
        %1726 = vmatpush1.msra.mxu0 %v618
        %1727 = vmatprep.subr.mxu0 %v622
        %1728 = vmatpush1.msra.mxu0 %v621
        %1729 = vmatprep.subr.mxu0 %v625
        %1730 = vmatpush1.msra.mxu0 %v624
        %1731 = vmatprep.subr.mxu0 %v628
        %1732 = vmatpush1.msra.mxu0 %v627
        %1733 = vmatprep.subr.mxu0 %v631
        %1734 = vmatpush1.msra.mxu0 %v630
        %1735 = vmatprep.subr.mxu0 %v634
        %1736 = vmatpush1.msra.mxu0 %v633
        %1737 = vmatprep.subr.mxu0 %v637
        %1738 = vmatpush1.msra.mxu0 %v636
        %1739 = vmatprep.subr.mxu0 %v640
        %1740 = vmatpush1.msra.mxu0 %v639
        %1741 = vmatprep.subr.mxu0 %v643
        %1742 = vmatpush1.msra.mxu0 %v642
        %1743 = vmatprep.subr.mxu0 %v646
        %1744 = vmatpush1.msra.mxu0 %v645
        %1745 = vmatprep.subr.mxu0 %v649
        %1746 = vmatpush1.msra.mxu0 %v648
        %1747 = vmatprep.subr.mxu0 %v652
        %1748 = vmatpush1.msra.mxu0 %v651
        %1749 = vmatprep.subr.mxu0 %v655
        %1750 = vmatpush1.msra.mxu0 %v654
        %1751 = vmatprep.subr.mxu0 %v658
        %1752 = vmatpush1.msra.mxu0 %v657
        %1753 = vmatprep.subr.mxu0 %v661
        %1754 = vmatpush1.msra.mxu0 %v660
        %1755 = vmatprep.subr.mxu0 %v664
        %1756 = vmatpush1.msra.mxu0 %v663
        %1757 = vmatprep.subr.mxu0 %v667
        %1758 = vmatpush1.msra.mxu0 %v666
        %1759 = vmatprep.subr.mxu0 %v670
        %1760 = vmatpush1.msra.mxu0 %v669
        %1761 = vmatprep.subr.mxu0 %v673
        %1762 = vmatpush1.msra.mxu0 %v672
        %1763 = vmatprep.subr.mxu0 %v676
        %1764 = vmatpush1.msra.mxu0 %v675
        %1765 = vmatprep.subr.mxu0 %v679
        %1766 = vmatpush1.msra.mxu0 %v678
        %1767 = vmatprep.subr.mxu0 %v682
        %1768 = vmatpush1.msra.mxu0 %v681
        %1769 = vmatprep.subr.mxu0 %v685
        %1770 = vmatpush1.msra.mxu0 %v684
        %1771 = vmatprep.subr.mxu0 %v688
        %1772 = vmatpush1.msra.mxu0 %v687
        %1773 = vmatprep.subr.mxu0 %v691
        %1774 = vmatpush1.msra.mxu0 %v690
        %1775 = vmatprep.subr.mxu0 %v694
        %1776 = vmatpush1.msra.mxu0 %v693
        %1777 = vmatprep.subr.mxu0 %v697
        %1778 = vmatpush1.msra.mxu0 %v696
        %1779 = vmatprep.mubr.f32.mxu0 %v274
        %1780 = vmatmul.mubr.f32.gmra.mrb[0].mxu0 %v273
        %v1781 = vpop.f32.mrb[0].mxu0
        %v1782 = vadd.f32 %v1705, %v1781
        %v1783 = vpop.f32.mrb[0].mxu0
        %v1784 = vadd.f32 %v1707, %v1783
        %1785 = vmatprep.mubr.f32.mxu0 %v298
        %1786 = vmatmul.mubr.f32.gmra.mrb[0].mxu0 %v297
        %v1787 = vpop.f32.mrb[0].mxu0
        %v1788 = vadd.f32 %v1711, %v1787
        %v1789 = vpop.f32.mrb[0].mxu0
        %v1790 = vadd.f32 %v1713, %v1789
        %1791 = vdwg.mxu0
        %1792 = vmatprep.subr.mxu0 %v700
        %1793 = vmatpush1.msra.mxu0 %v699
        %1794 = vmatprep.subr.mxu0 %v703
        %1795 = vmatpush1.msra.mxu0 %v702
        %1796 = vmatprep.subr.mxu0 %v706
        %1797 = vmatpush1.msra.mxu0 %v705
        %1798 = vmatprep.subr.mxu0 %v709
        %1799 = vmatpush1.msra.mxu0 %v708
        %1800 = vmatprep.subr.mxu0 %v712
        %1801 = vmatpush1.msra.mxu0 %v711
        %1802 = vmatprep.subr.mxu0 %v715
        %1803 = vmatpush1.msra.mxu0 %v714
        %1804 = vmatprep.subr.mxu0 %v718
        %1805 = vmatpush1.msra.mxu0 %v717
        %1806 = vmatprep.subr.mxu0 %v721
        %1807 = vmatpush1.msra.mxu0 %v720
        %1808 = vmatprep.subr.mxu0 %v724
        %1809 = vmatpush1.msra.mxu0 %v723
        %1810 = vmatprep.subr.mxu0 %v727
        %1811 = vmatpush1.msra.mxu0 %v726
        %1812 = vmatprep.subr.mxu0 %v730
        %1813 = vmatpush1.msra.mxu0 %v729
        %1814 = vmatprep.subr.mxu0 %v733
        %1815 = vmatpush1.msra.mxu0 %v732
        %1816 = vmatprep.subr.mxu0 %v736
        %1817 = vmatpush1.msra.mxu0 %v735
        %1818 = vmatprep.subr.mxu0 %v739
        %1819 = vmatpush1.msra.mxu0 %v738
        %1820 = vmatprep.subr.mxu0 %v742
        %1821 = vmatpush1.msra.mxu0 %v741
        %1822 = vmatprep.subr.mxu0 %v745
        %1823 = vmatpush1.msra.mxu0 %v744
        %1824 = vmatprep.subr.mxu0 %v748
        %1825 = vmatpush1.msra.mxu0 %v747
        %1826 = vmatprep.subr.mxu0 %v751
        %1827 = vmatpush1.msra.mxu0 %v750
        %1828 = vmatprep.subr.mxu0 %v754
        %1829 = vmatpush1.msra.mxu0 %v753
        %1830 = vmatprep.subr.mxu0 %v757
        %1831 = vmatpush1.msra.mxu0 %v756
        %1832 = vmatprep.subr.mxu0 %v760
        %1833 = vmatpush1.msra.mxu0 %v759
        %1834 = vmatprep.subr.mxu0 %v763
        %1835 = vmatpush1.msra.mxu0 %v762
        %1836 = vmatprep.subr.mxu0 %v766
        %1837 = vmatpush1.msra.mxu0 %v765
        %1838 = vmatprep.subr.mxu0 %v769
        %1839 = vmatpush1.msra.mxu0 %v768
        %1840 = vmatprep.subr.mxu0 %v772
        %1841 = vmatpush1.msra.mxu0 %v771
        %1842 = vmatprep.subr.mxu0 %v775
        %1843 = vmatpush1.msra.mxu0 %v774
        %1844 = vmatprep.subr.mxu0 %v778
        %1845 = vmatpush1.msra.mxu0 %v777
        %1846 = vmatprep.subr.mxu0 %v781
        %1847 = vmatpush1.msra.mxu0 %v780
        %1848 = vmatprep.subr.mxu0 %v784
        %1849 = vmatpush1.msra.mxu0 %v783
        %1850 = vmatprep.subr.mxu0 %v787
        %1851 = vmatpush1.msra.mxu0 %v786
        %1852 = vmatprep.subr.mxu0 %v790
        %1853 = vmatpush1.msra.mxu0 %v789
        %1854 = vmatprep.subr.mxu0 %v793
        %1855 = vmatpush1.msra.mxu0 %v792
        %1856 = vmatprep.mubr.f32.mxu0 %v276
        %1857 = vmatmul.mubr.f32.gmra.mrb[0].mxu0 %v275
        %v1858 = vpop.f32.mrb[0].mxu0
        %v1859 = vadd.f32 %v1782, %v1858
        %v1860 = vpop.f32.mrb[0].mxu0
        %v1861 = vadd.f32 %v1784, %v1860
        %1862 = vmatprep.mubr.f32.mxu0 %v300
        %1863 = vmatmul.mubr.f32.gmra.mrb[0].mxu0 %v299
        %v1864 = vpop.f32.mrb[0].mxu0
        %v1865 = vadd.f32 %v1788, %v1864
        %v1866 = vpop.f32.mrb[0].mxu0
        %v1867 = vadd.f32 %v1790, %v1866
        %1868 = vdwg.mxu0
        %1869 = vmatprep.subr.mxu0 %v796
        %1870 = vmatpush1.msra.mxu0 %v795
        %1871 = vmatprep.subr.mxu0 %v799
        %1872 = vmatpush1.msra.mxu0 %v798
        %1873 = vmatprep.subr.mxu0 %v802
        %1874 = vmatpush1.msra.mxu0 %v801
        %1875 = vmatprep.subr.mxu0 %v805
        %1876 = vmatpush1.msra.mxu0 %v804
        %1877 = vmatprep.subr.mxu0 %v808
        %1878 = vmatpush1.msra.mxu0 %v807
        %1879 = vmatprep.subr.mxu0 %v811
        %1880 = vmatpush1.msra.mxu0 %v810
        %1881 = vmatprep.subr.mxu0 %v814
        %1882 = vmatpush1.msra.mxu0 %v813
        %1883 = vmatprep.subr.mxu0 %v817
        %1884 = vmatpush1.msra.mxu0 %v816
        %1885 = vmatprep.subr.mxu0 %v820
        %1886 = vmatpush1.msra.mxu0 %v819
        %1887 = vmatprep.subr.mxu0 %v823
        %1888 = vmatpush1.msra.mxu0 %v822
        %1889 = vmatprep.subr.mxu0 %v826
        %1890 = vmatpush1.msra.mxu0 %v825
        %1891 = vmatprep.subr.mxu0 %v829
        %1892 = vmatpush1.msra.mxu0 %v828
        %1893 = vmatprep.subr.mxu0 %v832
        %1894 = vmatpush1.msra.mxu0 %v831
        %1895 = vmatprep.subr.mxu0 %v835
        %1896 = vmatpush1.msra.mxu0 %v834
        %1897 = vmatprep.subr.mxu0 %v838
        %1898 = vmatpush1.msra.mxu0 %v837
        %1899 = vmatprep.subr.mxu0 %v841
        %1900 = vmatpush1.msra.mxu0 %v840
        %1901 = vmatprep.subr.mxu0 %v844
        %1902 = vmatpush1.msra.mxu0 %v843
        %1903 = vmatprep.subr.mxu0 %v847
        %1904 = vmatpush1.msra.mxu0 %v846
        %1905 = vmatprep.subr.mxu0 %v850
        %1906 = vmatpush1.msra.mxu0 %v849
        %1907 = vmatprep.subr.mxu0 %v853
        %1908 = vmatpush1.msra.mxu0 %v852
        %1909 = vmatprep.subr.mxu0 %v856
        %1910 = vmatpush1.msra.mxu0 %v855
        %1911 = vmatprep.subr.mxu0 %v859
        %1912 = vmatpush1.msra.mxu0 %v858
        %1913 = vmatprep.subr.mxu0 %v862
        %1914 = vmatpush1.msra.mxu0 %v861
        %1915 = vmatprep.subr.mxu0 %v865
        %1916 = vmatpush1.msra.mxu0 %v864
        %1917 = vmatprep.subr.mxu0 %v868
        %1918 = vmatpush1.msra.mxu0 %v867
        %1919 = vmatprep.subr.mxu0 %v871
        %1920 = vmatpush1.msra.mxu0 %v870
        %1921 = vmatprep.subr.mxu0 %v874
        %1922 = vmatpush1.msra.mxu0 %v873
        %1923 = vmatprep.subr.mxu0 %v877
        %1924 = vmatpush1.msra.mxu0 %v876
        %1925 = vmatprep.subr.mxu0 %v880
        %1926 = vmatpush1.msra.mxu0 %v879
        %1927 = vmatprep.subr.mxu0 %v883
        %1928 = vmatpush1.msra.mxu0 %v882
        %1929 = vmatprep.subr.mxu0 %v886
        %1930 = vmatpush1.msra.mxu0 %v885
        %1931 = vmatprep.subr.mxu0 %v889
        %1932 = vmatpush1.msra.mxu0 %v888
        %1933 = vmatprep.mubr.f32.mxu0 %v278
        %1934 = vmatmul.mubr.f32.gmra.mrb[0].mxu0 %v277
        %v1935 = vpop.f32.mrb[0].mxu0
        %v1936 = vadd.f32 %v1859, %v1935
        %v1937 = vpop.f32.mrb[0].mxu0
        %v1938 = vadd.f32 %v1861, %v1937
        %1939 = vmatprep.mubr.f32.mxu0 %v302
        %1940 = vmatmul.mubr.f32.gmra.mrb[0].mxu0 %v301
        %v1941 = vpop.f32.mrb[0].mxu0
        %v1942 = vadd.f32 %v1865, %v1941
        %v1943 = vpop.f32.mrb[0].mxu0
        %v1944 = vadd.f32 %v1867, %v1943
        %1945 = vdwg.mxu0
        %1946 = vmatprep.subr.mxu0 %v892
        %1947 = vmatpush1.msra.mxu0 %v891
        %1948 = vmatprep.subr.mxu0 %v895
        %1949 = vmatpush1.msra.mxu0 %v894
        %1950 = vmatprep.subr.mxu0 %v898
        %1951 = vmatpush1.msra.mxu0 %v897
        %1952 = vmatprep.subr.mxu0 %v901
        %1953 = vmatpush1.msra.mxu0 %v900
        %1954 = vmatprep.subr.mxu0 %v904
        %1955 = vmatpush1.msra.mxu0 %v903
        %1956 = vmatprep.subr.mxu0 %v907
        %1957 = vmatpush1.msra.mxu0 %v906
        %1958 = vmatprep.subr.mxu0 %v910
        %1959 = vmatpush1.msra.mxu0 %v909
        %1960 = vmatprep.subr.mxu0 %v913
        %1961 = vmatpush1.msra.mxu0 %v912
        %1962 = vmatprep.subr.mxu0 %v916
        %1963 = vmatpush1.msra.mxu0 %v915
        %1964 = vmatprep.subr.mxu0 %v919
        %1965 = vmatpush1.msra.mxu0 %v918
        %1966 = vmatprep.subr.mxu0 %v922
        %1967 = vmatpush1.msra.mxu0 %v921
        %1968 = vmatprep.subr.mxu0 %v925
        %1969 = vmatpush1.msra.mxu0 %v924
        %1970 = vmatprep.subr.mxu0 %v928
        %1971 = vmatpush1.msra.mxu0 %v927
        %1972 = vmatprep.subr.mxu0 %v931
        %1973 = vmatpush1.msra.mxu0 %v930
        %1974 = vmatprep.subr.mxu0 %v934
        %1975 = vmatpush1.msra.mxu0 %v933
        %1976 = vmatprep.subr.mxu0 %v937
        %1977 = vmatpush1.msra.mxu0 %v936
        %1978 = vmatprep.subr.mxu0 %v940
        %1979 = vmatpush1.msra.mxu0 %v939
        %1980 = vmatprep.subr.mxu0 %v943
        %1981 = vmatpush1.msra.mxu0 %v942
        %1982 = vmatprep.subr.mxu0 %v946
        %1983 = vmatpush1.msra.mxu0 %v945
        %1984 = vmatprep.subr.mxu0 %v949
        %1985 = vmatpush1.msra.mxu0 %v948
        %1986 = vmatprep.subr.mxu0 %v952
        %1987 = vmatpush1.msra.mxu0 %v951
        %1988 = vmatprep.subr.mxu0 %v955
        %1989 = vmatpush1.msra.mxu0 %v954
        %1990 = vmatprep.subr.mxu0 %v958
        %1991 = vmatpush1.msra.mxu0 %v957
        %1992 = vmatprep.subr.mxu0 %v961
        %1993 = vmatpush1.msra.mxu0 %v960
        %1994 = vmatprep.subr.mxu0 %v964
        %1995 = vmatpush1.msra.mxu0 %v963
        %1996 = vmatprep.subr.mxu0 %v967
        %1997 = vmatpush1.msra.mxu0 %v966
        %1998 = vmatprep.subr.mxu0 %v970
        %1999 = vmatpush1.msra.mxu0 %v969
        %2000 = vmatprep.subr.mxu0 %v973
        %2001 = vmatpush1.msra.mxu0 %v972
        %2002 = vmatprep.subr.mxu0 %v976
        %2003 = vmatpush1.msra.mxu0 %v975
        %2004 = vmatprep.subr.mxu0 %v979
        %2005 = vmatpush1.msra.mxu0 %v978
        %2006 = vmatprep.subr.mxu0 %v982
        %2007 = vmatpush1.msra.mxu0 %v981
        %2008 = vmatprep.subr.mxu0 %v985
        %2009 = vmatpush1.msra.mxu0 %v984
        %2010 = vmatprep.mubr.f32.mxu0 %v280
        %2011 = vmatmul.mubr.f32.gmra.mrb[0].mxu0 %v279
        %v2012 = vpop.f32.mrb[0].mxu0
        %v2013 = vadd.f32 %v1936, %v2012
        %v2014 = vpop.f32.mrb[0].mxu0
        %v2015 = vadd.f32 %v1938, %v2014
        %2016 = vmatprep.mubr.f32.mxu0 %v304
        %2017 = vmatmul.mubr.f32.gmra.mrb[0].mxu0 %v303
        %v2018 = vpop.f32.mrb[0].mxu0
        %v2019 = vadd.f32 %v1942, %v2018
        %v2020 = vpop.f32.mrb[0].mxu0
        %v2021 = vadd.f32 %v1944, %v2020
        %2022 = vdwg.mxu0
        %2023 = vmatprep.subr.mxu0 %v988
        %2024 = vmatpush1.msra.mxu0 %v987
        %2025 = vmatprep.subr.mxu0 %v991
        %2026 = vmatpush1.msra.mxu0 %v990
        %2027 = vmatprep.subr.mxu0 %v994
        %2028 = vmatpush1.msra.mxu0 %v993
        %2029 = vmatprep.subr.mxu0 %v997
        %2030 = vmatpush1.msra.mxu0 %v996
        %2031 = vmatprep.subr.mxu0 %v1000
        %2032 = vmatpush1.msra.mxu0 %v999
        %2033 = vmatprep.subr.mxu0 %v1003
        %2034 = vmatpush1.msra.mxu0 %v1002
        %2035 = vmatprep.subr.mxu0 %v1006
        %2036 = vmatpush1.msra.mxu0 %v1005
        %2037 = vmatprep.subr.mxu0 %v1009
        %2038 = vmatpush1.msra.mxu0 %v1008
        %2039 = vmatprep.subr.mxu0 %v1012
        %2040 = vmatpush1.msra.mxu0 %v1011
        %2041 = vmatprep.subr.mxu0 %v1015
        %2042 = vmatpush1.msra.mxu0 %v1014
        %2043 = vmatprep.subr.mxu0 %v1018
        %2044 = vmatpush1.msra.mxu0 %v1017
        %2045 = vmatprep.subr.mxu0 %v1021
        %2046 = vmatpush1.msra.mxu0 %v1020
        %2047 = vmatprep.subr.mxu0 %v1024
        %2048 = vmatpush1.msra.mxu0 %v1023
        %2049 = vmatprep.subr.mxu0 %v1027
        %2050 = vmatpush1.msra.mxu0 %v1026
        %2051 = vmatprep.subr.mxu0 %v1030
        %2052 = vmatpush1.msra.mxu0 %v1029
        %2053 = vmatprep.subr.mxu0 %v1033
        %2054 = vmatpush1.msra.mxu0 %v1032
        %2055 = vmatprep.subr.mxu0 %v1036
        %2056 = vmatpush1.msra.mxu0 %v1035
        %2057 = vmatprep.subr.mxu0 %v1039
        %2058 = vmatpush1.msra.mxu0 %v1038
        %2059 = vmatprep.subr.mxu0 %v1042
        %2060 = vmatpush1.msra.mxu0 %v1041
        %2061 = vmatprep.subr.mxu0 %v1045
        %2062 = vmatpush1.msra.mxu0 %v1044
        %2063 = vmatprep.subr.mxu0 %v1048
        %2064 = vmatpush1.msra.mxu0 %v1047
        %2065 = vmatprep.subr.mxu0 %v1051
        %2066 = vmatpush1.msra.mxu0 %v1050
        %2067 = vmatprep.subr.mxu0 %v1054
        %2068 = vmatpush1.msra.mxu0 %v1053
        %2069 = vmatprep.subr.mxu0 %v1057
        %2070 = vmatpush1.msra.mxu0 %v1056
        %2071 = vmatprep.subr.mxu0 %v1060
        %2072 = vmatpush1.msra.mxu0 %v1059
        %2073 = vmatprep.subr.mxu0 %v1063
        %2074 = vmatpush1.msra.mxu0 %v1062
        %2075 = vmatprep.subr.mxu0 %v1066
        %2076 = vmatpush1.msra.mxu0 %v1065
        %2077 = vmatprep.subr.mxu0 %v1069
        %2078 = vmatpush1.msra.mxu0 %v1068
        %2079 = vmatprep.subr.mxu0 %v1072
        %2080 = vmatpush1.msra.mxu0 %v1071
        %2081 = vmatprep.subr.mxu0 %v1075
        %2082 = vmatpush1.msra.mxu0 %v1074
        %2083 = vmatprep.subr.mxu0 %v1078
        %2084 = vmatpush1.msra.mxu0 %v1077
        %2085 = vmatprep.subr.mxu0 %v1081
        %2086 = vmatpush1.msra.mxu0 %v1080
        %2087 = vmatprep.mubr.f32.mxu0 %v282
        %2088 = vmatmul.mubr.f32.gmra.mrb[0].mxu0 %v281
        %v2089 = vpop.f32.mrb[0].mxu0
        %v2090 = vadd.f32 %v2013, %v2089
        %v2091 = vpop.f32.mrb[0].mxu0
        %v2092 = vadd.f32 %v2015, %v2091
        %2093 = vmatprep.mubr.f32.mxu0 %v306
        %2094 = vmatmul.mubr.f32.gmra.mrb[0].mxu0 %v305
        %v2095 = vpop.f32.mrb[0].mxu0
        %v2096 = vadd.f32 %v2019, %v2095
        %v2097 = vpop.f32.mrb[0].mxu0
        %v2098 = vadd.f32 %v2021, %v2097
        %2099 = vdwg.mxu0
        %2100 = vmatprep.subr.mxu0 %v1084
        %2101 = vmatpush1.msra.mxu0 %v1083
        %2102 = vmatprep.subr.mxu0 %v1087
        %2103 = vmatpush1.msra.mxu0 %v1086
        %2104 = vmatprep.subr.mxu0 %v1090
        %2105 = vmatpush1.msra.mxu0 %v1089
        %2106 = vmatprep.subr.mxu0 %v1093
        %2107 = vmatpush1.msra.mxu0 %v1092
        %2108 = vmatprep.subr.mxu0 %v1096
        %2109 = vmatpush1.msra.mxu0 %v1095
        %2110 = vmatprep.subr.mxu0 %v1099
        %2111 = vmatpush1.msra.mxu0 %v1098
        %2112 = vmatprep.subr.mxu0 %v1102
        %2113 = vmatpush1.msra.mxu0 %v1101
        %2114 = vmatprep.subr.mxu0 %v1105
        %2115 = vmatpush1.msra.mxu0 %v1104
        %2116 = vmatprep.subr.mxu0 %v1108
        %2117 = vmatpush1.msra.mxu0 %v1107
        %2118 = vmatprep.subr.mxu0 %v1111
        %2119 = vmatpush1.msra.mxu0 %v1110
        %2120 = vmatprep.subr.mxu0 %v1114
        %2121 = vmatpush1.msra.mxu0 %v1113
        %2122 = vmatprep.subr.mxu0 %v1117
        %2123 = vmatpush1.msra.mxu0 %v1116
        %2124 = vmatprep.subr.mxu0 %v1120
        %2125 = vmatpush1.msra.mxu0 %v1119
        %2126 = vmatprep.subr.mxu0 %v1123
        %2127 = vmatpush1.msra.mxu0 %v1122
        %2128 = vmatprep.subr.mxu0 %v1126
        %2129 = vmatpush1.msra.mxu0 %v1125
        %2130 = vmatprep.subr.mxu0 %v1129
        %2131 = vmatpush1.msra.mxu0 %v1128
        %2132 = vmatprep.subr.mxu0 %v1132
        %2133 = vmatpush1.msra.mxu0 %v1131
        %2134 = vmatprep.subr.mxu0 %v1135
        %2135 = vmatpush1.msra.mxu0 %v1134
        %2136 = vmatprep.subr.mxu0 %v1138
        %2137 = vmatpush1.msra.mxu0 %v1137
        %2138 = vmatprep.subr.mxu0 %v1141
        %2139 = vmatpush1.msra.mxu0 %v1140
        %2140 = vmatprep.subr.mxu0 %v1144
        %2141 = vmatpush1.msra.mxu0 %v1143
        %2142 = vmatprep.subr.mxu0 %v1147
        %2143 = vmatpush1.msra.mxu0 %v1146
        %2144 = vmatprep.subr.mxu0 %v1150
        %2145 = vmatpush1.msra.mxu0 %v1149
        %2146 = vmatprep.subr.mxu0 %v1153
        %2147 = vmatpush1.msra.mxu0 %v1152
        %2148 = vmatprep.subr.mxu0 %v1156
        %2149 = vmatpush1.msra.mxu0 %v1155
        %2150 = vmatprep.subr.mxu0 %v1159
        %2151 = vmatpush1.msra.mxu0 %v1158
        %2152 = vmatprep.subr.mxu0 %v1162
        %2153 = vmatpush1.msra.mxu0 %v1161
        %2154 = vmatprep.subr.mxu0 %v1165
        %2155 = vmatpush1.msra.mxu0 %v1164
        %2156 = vmatprep.subr.mxu0 %v1168
        %2157 = vmatpush1.msra.mxu0 %v1167
        %2158 = vmatprep.subr.mxu0 %v1171
        %2159 = vmatpush1.msra.mxu0 %v1170
        %2160 = vmatprep.subr.mxu0 %v1174
        %2161 = vmatpush1.msra.mxu0 %v1173
        %2162 = vmatprep.subr.mxu0 %v1177
        %2163 = vmatpush1.msra.mxu0 %v1176
        %2164 = vmatprep.mubr.f32.mxu0 %v284
        %2165 = vmatmul.mubr.f32.gmra.mrb[0].mxu0 %v283
        %v2166 = vpop.f32.mrb[0].mxu0
        %v2167 = vadd.f32 %v2090, %v2166
        %v2168 = vpop.f32.mrb[0].mxu0
        %v2169 = vadd.f32 %v2092, %v2168
        %2170 = vmatprep.mubr.f32.mxu0 %v308
        %2171 = vmatmul.mubr.f32.gmra.mrb[0].mxu0 %v307
        %v2172 = vpop.f32.mrb[0].mxu0
        %v2173 = vadd.f32 %v2096, %v2172
        %v2174 = vpop.f32.mrb[0].mxu0
        %v2175 = vadd.f32 %v2098, %v2174
        %2176 = vdwg.mxu0
        %2177 = vmatprep.subr.mxu0 %v1180
        %2178 = vmatpush1.msra.mxu0 %v1179
        %2179 = vmatprep.subr.mxu0 %v1183
        %2180 = vmatpush1.msra.mxu0 %v1182
        %2181 = vmatprep.subr.mxu0 %v1186
        %2182 = vmatpush1.msra.mxu0 %v1185
        %2183 = vmatprep.subr.mxu0 %v1189
        %2184 = vmatpush1.msra.mxu0 %v1188
        %2185 = vmatprep.subr.mxu0 %v1192
        %2186 = vmatpush1.msra.mxu0 %v1191
        %2187 = vmatprep.subr.mxu0 %v1195
        %2188 = vmatpush1.msra.mxu0 %v1194
        %2189 = vmatprep.subr.mxu0 %v1198
        %2190 = vmatpush1.msra.mxu0 %v1197
        %2191 = vmatprep.subr.mxu0 %v1201
        %2192 = vmatpush1.msra.mxu0 %v1200
        %2193 = vmatprep.subr.mxu0 %v1204
        %2194 = vmatpush1.msra.mxu0 %v1203
        %2195 = vmatprep.subr.mxu0 %v1207
        %2196 = vmatpush1.msra.mxu0 %v1206
        %2197 = vmatprep.subr.mxu0 %v1210
        %2198 = vmatpush1.msra.mxu0 %v1209
        %2199 = vmatprep.subr.mxu0 %v1213
        %2200 = vmatpush1.msra.mxu0 %v1212
        %2201 = vmatprep.subr.mxu0 %v1216
        %2202 = vmatpush1.msra.mxu0 %v1215
        %2203 = vmatprep.subr.mxu0 %v1219
        %2204 = vmatpush1.msra.mxu0 %v1218
        %2205 = vmatprep.subr.mxu0 %v1222
        %2206 = vmatpush1.msra.mxu0 %v1221
        %2207 = vmatprep.subr.mxu0 %v1225
        %2208 = vmatpush1.msra.mxu0 %v1224
        %2209 = vmatprep.subr.mxu0 %v1228
        %2210 = vmatpush1.msra.mxu0 %v1227
        %2211 = vmatprep.subr.mxu0 %v1231
        %2212 = vmatpush1.msra.mxu0 %v1230
        %2213 = vmatprep.subr.mxu0 %v1234
        %2214 = vmatpush1.msra.mxu0 %v1233
        %2215 = vmatprep.subr.mxu0 %v1237
        %2216 = vmatpush1.msra.mxu0 %v1236
        %2217 = vmatprep.subr.mxu0 %v1240
        %2218 = vmatpush1.msra.mxu0 %v1239
        %2219 = vmatprep.subr.mxu0 %v1243
        %2220 = vmatpush1.msra.mxu0 %v1242
        %2221 = vmatprep.subr.mxu0 %v1246
        %2222 = vmatpush1.msra.mxu0 %v1245
        %2223 = vmatprep.subr.mxu0 %v1249
        %2224 = vmatpush1.msra.mxu0 %v1248
        %2225 = vmatprep.subr.mxu0 %v1252
        %2226 = vmatpush1.msra.mxu0 %v1251
        %2227 = vmatprep.subr.mxu0 %v1255
        %2228 = vmatpush1.msra.mxu0 %v1254
        %2229 = vmatprep.subr.mxu0 %v1258
        %2230 = vmatpush1.msra.mxu0 %v1257
        %2231 = vmatprep.subr.mxu0 %v1261
        %2232 = vmatpush1.msra.mxu0 %v1260
        %2233 = vmatprep.subr.mxu0 %v1264
        %2234 = vmatpush1.msra.mxu0 %v1263
        %2235 = vmatprep.subr.mxu0 %v1267
        %2236 = vmatpush1.msra.mxu0 %v1266
        %2237 = vmatprep.subr.mxu0 %v1270
        %2238 = vmatpush1.msra.mxu0 %v1269
        %2239 = vmatprep.subr.mxu0 %v1273
        %2240 = vmatpush1.msra.mxu0 %v1272
        %2241 = vmatprep.mubr.f32.mxu0 %v286
        %2242 = vmatmul.mubr.f32.gmra.mrb[0].mxu0 %v285
        %v2243 = vpop.f32.mrb[0].mxu0
        %v2244 = vadd.f32 %v2167, %v2243
        %v2245 = vpop.f32.mrb[0].mxu0
        %v2246 = vadd.f32 %v2169, %v2245
        %2247 = vmatprep.mubr.f32.mxu0 %v310
        %2248 = vmatmul.mubr.f32.gmra.mrb[0].mxu0 %v309
        %v2249 = vpop.f32.mrb[0].mxu0
        %v2250 = vadd.f32 %v2173, %v2249
        %v2251 = vpop.f32.mrb[0].mxu0
        %v2252 = vadd.f32 %v2175, %v2251
        %2253 = vdwg.mxu0
        %2254 = vmatprep.subr.mxu0 %v1276
        %2255 = vmatpush1.msra.mxu0 %v1275
        %2256 = vmatprep.subr.mxu0 %v1279
        %2257 = vmatpush1.msra.mxu0 %v1278
        %2258 = vmatprep.subr.mxu0 %v1282
        %2259 = vmatpush1.msra.mxu0 %v1281
        %2260 = vmatprep.subr.mxu0 %v1285
        %2261 = vmatpush1.msra.mxu0 %v1284
        %2262 = vmatprep.subr.mxu0 %v1288
        %2263 = vmatpush1.msra.mxu0 %v1287
        %2264 = vmatprep.subr.mxu0 %v1291
        %2265 = vmatpush1.msra.mxu0 %v1290
        %2266 = vmatprep.subr.mxu0 %v1294
        %2267 = vmatpush1.msra.mxu0 %v1293
        %2268 = vmatprep.subr.mxu0 %v1297
        %2269 = vmatpush1.msra.mxu0 %v1296
        %2270 = vmatprep.subr.mxu0 %v1300
        %2271 = vmatpush1.msra.mxu0 %v1299
        %2272 = vmatprep.subr.mxu0 %v1303
        %2273 = vmatpush1.msra.mxu0 %v1302
        %2274 = vmatprep.subr.mxu0 %v1306
        %2275 = vmatpush1.msra.mxu0 %v1305
        %2276 = vmatprep.subr.mxu0 %v1309
        %2277 = vmatpush1.msra.mxu0 %v1308
        %2278 = vmatprep.subr.mxu0 %v1312
        %2279 = vmatpush1.msra.mxu0 %v1311
        %2280 = vmatprep.subr.mxu0 %v1315
        %2281 = vmatpush1.msra.mxu0 %v1314
        %2282 = vmatprep.subr.mxu0 %v1318
        %2283 = vmatpush1.msra.mxu0 %v1317
        %2284 = vmatprep.subr.mxu0 %v1321
        %2285 = vmatpush1.msra.mxu0 %v1320
        %2286 = vmatprep.subr.mxu0 %v1324
        %2287 = vmatpush1.msra.mxu0 %v1323
        %2288 = vmatprep.subr.mxu0 %v1327
        %2289 = vmatpush1.msra.mxu0 %v1326
        %2290 = vmatprep.subr.mxu0 %v1330
        %2291 = vmatpush1.msra.mxu0 %v1329
        %2292 = vmatprep.subr.mxu0 %v1333
        %2293 = vmatpush1.msra.mxu0 %v1332
        %2294 = vmatprep.subr.mxu0 %v1336
        %2295 = vmatpush1.msra.mxu0 %v1335
        %2296 = vmatprep.subr.mxu0 %v1339
        %2297 = vmatpush1.msra.mxu0 %v1338
        %2298 = vmatprep.subr.mxu0 %v1342
        %2299 = vmatpush1.msra.mxu0 %v1341
        %2300 = vmatprep.subr.mxu0 %v1345
        %2301 = vmatpush1.msra.mxu0 %v1344
        %2302 = vmatprep.subr.mxu0 %v1348
        %2303 = vmatpush1.msra.mxu0 %v1347
        %2304 = vmatprep.subr.mxu0 %v1351
        %2305 = vmatpush1.msra.mxu0 %v1350
        %2306 = vmatprep.subr.mxu0 %v1354
        %2307 = vmatpush1.msra.mxu0 %v1353
        %2308 = vmatprep.subr.mxu0 %v1357
        %2309 = vmatpush1.msra.mxu0 %v1356
        %2310 = vmatprep.subr.mxu0 %v1360
        %2311 = vmatpush1.msra.mxu0 %v1359
        %2312 = vmatprep.subr.mxu0 %v1363
        %2313 = vmatpush1.msra.mxu0 %v1362
        %2314 = vmatprep.subr.mxu0 %v1366
        %2315 = vmatpush1.msra.mxu0 %v1365
        %2316 = vmatprep.subr.mxu0 %v1369
        %2317 = vmatpush1.msra.mxu0 %v1368
        %2318 = vmatprep.mubr.f32.mxu0 %v288
        %2319 = vmatmul.mubr.f32.gmra.mrb[0].mxu0 %v287
        %v2320 = vpop.f32.mrb[0].mxu0
        %v2321 = vadd.f32 %v2244, %v2320
        %v2322 = vpop.f32.mrb[0].mxu0
        %v2323 = vadd.f32 %v2246, %v2322
        %2324 = vmatprep.mubr.f32.mxu0 %v312
        %2325 = vmatmul.mubr.f32.gmra.mrb[0].mxu0 %v311
        %v2326 = vpop.f32.mrb[0].mxu0
        %v2327 = vadd.f32 %v2250, %v2326
        %v2328 = vpop.f32.mrb[0].mxu0
        %v2329 = vadd.f32 %v2252, %v2328
        %2330 = vdwg.mxu0
        %2331 = vmatprep.subr.mxu0 %v1372
        %2332 = vmatpush1.msra.mxu0 %v1371
        %2333 = vmatprep.subr.mxu0 %v1375
        %2334 = vmatpush1.msra.mxu0 %v1374
        %2335 = vmatprep.subr.mxu0 %v1378
        %2336 = vmatpush1.msra.mxu0 %v1377
        %2337 = vmatprep.subr.mxu0 %v1381
        %2338 = vmatpush1.msra.mxu0 %v1380
        %2339 = vmatprep.subr.mxu0 %v1384
        %2340 = vmatpush1.msra.mxu0 %v1383
        %2341 = vmatprep.subr.mxu0 %v1387
        %2342 = vmatpush1.msra.mxu0 %v1386
        %2343 = vmatprep.subr.mxu0 %v1390
        %2344 = vmatpush1.msra.mxu0 %v1389
        %2345 = vmatprep.subr.mxu0 %v1393
        %2346 = vmatpush1.msra.mxu0 %v1392
        %2347 = vmatprep.subr.mxu0 %v1396
        %2348 = vmatpush1.msra.mxu0 %v1395
        %2349 = vmatprep.subr.mxu0 %v1399
        %2350 = vmatpush1.msra.mxu0 %v1398
        %2351 = vmatprep.subr.mxu0 %v1402
        %2352 = vmatpush1.msra.mxu0 %v1401
        %2353 = vmatprep.subr.mxu0 %v1405
        %2354 = vmatpush1.msra.mxu0 %v1404
        %2355 = vmatprep.subr.mxu0 %v1408
        %2356 = vmatpush1.msra.mxu0 %v1407
        %2357 = vmatprep.subr.mxu0 %v1411
        %2358 = vmatpush1.msra.mxu0 %v1410
        %2359 = vmatprep.subr.mxu0 %v1414
        %2360 = vmatpush1.msra.mxu0 %v1413
        %2361 = vmatprep.subr.mxu0 %v1417
        %2362 = vmatpush1.msra.mxu0 %v1416
        %2363 = vmatprep.subr.mxu0 %v1420
        %2364 = vmatpush1.msra.mxu0 %v1419
        %2365 = vmatprep.subr.mxu0 %v1423
        %2366 = vmatpush1.msra.mxu0 %v1422
        %2367 = vmatprep.subr.mxu0 %v1426
        %2368 = vmatpush1.msra.mxu0 %v1425
        %2369 = vmatprep.subr.mxu0 %v1429
        %2370 = vmatpush1.msra.mxu0 %v1428
        %2371 = vmatprep.subr.mxu0 %v1432
        %2372 = vmatpush1.msra.mxu0 %v1431
        %2373 = vmatprep.subr.mxu0 %v1435
        %2374 = vmatpush1.msra.mxu0 %v1434
        %2375 = vmatprep.subr.mxu0 %v1438
        %2376 = vmatpush1.msra.mxu0 %v1437
        %2377 = vmatprep.subr.mxu0 %v1441
        %2378 = vmatpush1.msra.mxu0 %v1440
        %2379 = vmatprep.subr.mxu0 %v1444
        %2380 = vmatpush1.msra.mxu0 %v1443
        %2381 = vmatprep.subr.mxu0 %v1447
        %2382 = vmatpush1.msra.mxu0 %v1446
        %2383 = vmatprep.subr.mxu0 %v1450
        %2384 = vmatpush1.msra.mxu0 %v1449
        %2385 = vmatprep.subr.mxu0 %v1453
        %2386 = vmatpush1.msra.mxu0 %v1452
        %2387 = vmatprep.subr.mxu0 %v1456
        %2388 = vmatpush1.msra.mxu0 %v1455
        %2389 = vmatprep.subr.mxu0 %v1459
        %2390 = vmatpush1.msra.mxu0 %v1458
        %2391 = vmatprep.subr.mxu0 %v1462
        %2392 = vmatpush1.msra.mxu0 %v1461
        %2393 = vmatprep.subr.mxu0 %v1465
        %2394 = vmatpush1.msra.mxu0 %v1464
        %2395 = vmatprep.mubr.f32.mxu0 %v290
        %2396 = vmatmul.mubr.f32.gmra.mrb[0].mxu0 %v289
        %v2397 = vpop.f32.mrb[0].mxu0
        %v2398 = vadd.f32 %v2321, %v2397
        %v2399 = vpop.f32.mrb[0].mxu0
        %v2400 = vadd.f32 %v2323, %v2399
        %2401 = vmatprep.mubr.f32.mxu0 %v314
        %2402 = vmatmul.mubr.f32.gmra.mrb[0].mxu0 %v313
        %v2403 = vpop.f32.mrb[0].mxu0
        %v2404 = vadd.f32 %v2327, %v2403
        %v2405 = vpop.f32.mrb[0].mxu0
        %v2406 = vadd.f32 %v2329, %v2405
        %2407 = vdwg.mxu0
        %2408 = vmatprep.subr.mxu0 0.0
        %2409 = vmatpush1.msra.mxu0 %v317
        %2410 = vmatprep.subr.mxu0 0.0
        %2411 = vmatpush1.msra.mxu0 %v320
        %2412 = vmatprep.subr.mxu0 0.0
        %2413 = vmatpush1.msra.mxu0 %v323
        %2414 = vmatprep.subr.mxu0 0.0
        %2415 = vmatpush1.msra.mxu0 %v326
        %2416 = vmatprep.subr.mxu0 0.0
        %2417 = vmatpush1.msra.mxu0 %v329
        %2418 = vmatprep.subr.mxu0 0.0
        %2419 = vmatpush1.msra.mxu0 %v332
        %2420 = vmatprep.subr.mxu0 0.0
        %2421 = vmatpush1.msra.mxu0 %v335
        %2422 = vmatprep.subr.mxu0 0.0
        %2423 = vmatpush1.msra.mxu0 %v338
        %2424 = vmatprep.subr.mxu0 0.0
        %2425 = vmatpush1.msra.mxu0 %v341
        %2426 = vmatprep.subr.mxu0 0.0
        %2427 = vmatpush1.msra.mxu0 %v344
        %2428 = vmatprep.subr.mxu0 0.0
        %2429 = vmatpush1.msra.mxu0 %v347
        %2430 = vmatprep.subr.mxu0 0.0
        %2431 = vmatpush1.msra.mxu0 %v350
        %2432 = vmatprep.subr.mxu0 0.0
        %2433 = vmatpush1.msra.mxu0 %v353
        %2434 = vmatprep.subr.mxu0 0.0
        %2435 = vmatpush1.msra.mxu0 %v356
        %2436 = vmatprep.subr.mxu0 0.0
        %2437 = vmatpush1.msra.mxu0 %v359
        %2438 = vmatprep.subr.mxu0 0.0
        %2439 = vmatpush1.msra.mxu0 %v362
        %2440 = vmatprep.subr.mxu0 0.0
        %2441 = vmatpush1.msra.mxu0 %v365
        %2442 = vmatprep.subr.mxu0 0.0
        %2443 = vmatpush1.msra.mxu0 %v368
        %2444 = vmatprep.subr.mxu0 0.0
        %2445 = vmatpush1.msra.mxu0 %v371
        %2446 = vmatprep.subr.mxu0 0.0
        %2447 = vmatpush1.msra.mxu0 %v374
        %2448 = vmatprep.subr.mxu0 0.0
        %2449 = vmatpush1.msra.mxu0 %v377
        %2450 = vmatprep.subr.mxu0 0.0
        %2451 = vmatpush1.msra.mxu0 %v380
        %2452 = vmatprep.subr.mxu0 0.0
        %2453 = vmatpush1.msra.mxu0 %v383
        %2454 = vmatprep.subr.mxu0 0.0
        %2455 = vmatpush1.msra.mxu0 %v386
        %2456 = vmatprep.subr.mxu0 0.0
        %2457 = vmatpush1.msra.mxu0 %v389
        %2458 = vmatprep.subr.mxu0 0.0
        %2459 = vmatpush1.msra.mxu0 %v392
        %2460 = vmatprep.subr.mxu0 0.0
        %2461 = vmatpush1.msra.mxu0 %v395
        %2462 = vmatprep.subr.mxu0 0.0
        %2463 = vmatpush1.msra.mxu0 %v398
        %2464 = vmatprep.subr.mxu0 0.0
        %2465 = vmatpush1.msra.mxu0 %v401
        %2466 = vmatprep.subr.mxu0 0.0
        %2467 = vmatpush1.msra.mxu0 %v404
        %2468 = vmatprep.subr.mxu0 0.0
        %2469 = vmatpush1.msra.mxu0 %v407
        %2470 = vmatprep.subr.mxu0 0.0
        %2471 = vmatpush1.msra.mxu0 %v410
        %2472 = vmatprep.mubr.f32.mxu0 %v268
        %2473 = vmatmul.mubr.f32.gmra.mrb[0].mxu0 %v267
        %v2474 = vpop.f32.mrb[0].mxu0
        %v2475 = vadd.f32 %v1480, %v2474
        %v2476 = vpop.f32.mrb[0].mxu0
        %2477 = vmatprep.mubr.f32.mxu0 %v292
        %2478 = vmatmul.mubr.f32.gmra.mrb[0].mxu0 %v291
        %v2479 = vpop.f32.mrb[0].mxu0
        %v2480 = vadd.f32 %v1480, %v2479
        %v2481 = vpop.f32.mrb[0].mxu0
        %2482 = vdwg.mxu0
        %2483 = vmatprep.subr.mxu0 0.0
        %2484 = vmatpush1.msra.mxu0 %v413
        %2485 = vmatprep.subr.mxu0 0.0
        %2486 = vmatpush1.msra.mxu0 %v416
        %2487 = vmatprep.subr.mxu0 0.0
        %2488 = vmatpush1.msra.mxu0 %v419
        %2489 = vmatprep.subr.mxu0 0.0
        %2490 = vmatpush1.msra.mxu0 %v422
        %2491 = vmatprep.subr.mxu0 0.0
        %2492 = vmatpush1.msra.mxu0 %v425
        %2493 = vmatprep.subr.mxu0 0.0
        %2494 = vmatpush1.msra.mxu0 %v428
        %2495 = vmatprep.subr.mxu0 0.0
        %2496 = vmatpush1.msra.mxu0 %v431
        %2497 = vmatprep.subr.mxu0 0.0
        %2498 = vmatpush1.msra.mxu0 %v434
        %2499 = vmatprep.subr.mxu0 0.0
        %2500 = vmatpush1.msra.mxu0 %v437
        %2501 = vmatprep.subr.mxu0 0.0
        %2502 = vmatpush1.msra.mxu0 %v440
        %2503 = vmatprep.subr.mxu0 0.0
        %2504 = vmatpush1.msra.mxu0 %v443
        %2505 = vmatprep.subr.mxu0 0.0
        %2506 = vmatpush1.msra.mxu0 %v446
        %2507 = vmatprep.subr.mxu0 0.0
        %2508 = vmatpush1.msra.mxu0 %v449
        %2509 = vmatprep.subr.mxu0 0.0
        %2510 = vmatpush1.msra.mxu0 %v452
        %2511 = vmatprep.subr.mxu0 0.0
        %2512 = vmatpush1.msra.mxu0 %v455
        %2513 = vmatprep.subr.mxu0 0.0
        %2514 = vmatpush1.msra.mxu0 %v458
        %2515 = vmatprep.subr.mxu0 0.0
        %2516 = vmatpush1.msra.mxu0 %v461
        %2517 = vmatprep.subr.mxu0 0.0
        %2518 = vmatpush1.msra.mxu0 %v464
        %2519 = vmatprep.subr.mxu0 0.0
        %2520 = vmatpush1.msra.mxu0 %v467
        %2521 = vmatprep.subr.mxu0 0.0
        %2522 = vmatpush1.msra.mxu0 %v470
        %2523 = vmatprep.subr.mxu0 0.0
        %2524 = vmatpush1.msra.mxu0 %v473
        %2525 = vmatprep.subr.mxu0 0.0
        %2526 = vmatpush1.msra.mxu0 %v476
        %2527 = vmatprep.subr.mxu0 0.0
        %2528 = vmatpush1.msra.mxu0 %v479
        %2529 = vmatprep.subr.mxu0 0.0
        %2530 = vmatpush1.msra.mxu0 %v482
        %2531 = vmatprep.subr.mxu0 0.0
        %2532 = vmatpush1.msra.mxu0 %v485
        %2533 = vmatprep.subr.mxu0 0.0
        %2534 = vmatpush1.msra.mxu0 %v488
        %2535 = vmatprep.subr.mxu0 0.0
        %2536 = vmatpush1.msra.mxu0 %v491
        %2537 = vmatprep.subr.mxu0 0.0
        %2538 = vmatpush1.msra.mxu0 %v494
        %2539 = vmatprep.subr.mxu0 0.0
        %2540 = vmatpush1.msra.mxu0 %v497
        %2541 = vmatprep.subr.mxu0 0.0
        %2542 = vmatpush1.msra.mxu0 %v500
        %2543 = vmatprep.subr.mxu0 0.0
        %2544 = vmatpush1.msra.mxu0 %v503
        %2545 = vmatprep.subr.mxu0 0.0
        %2546 = vmatpush1.msra.mxu0 %v506
        %2547 = vmatprep.mubr.f32.mxu0 %v270
        %2548 = vmatmul.mubr.f32.gmra.mrb[0].mxu0 %v269
        %v2549 = vpop.f32.mrb[0].mxu0
        %v2550 = vadd.f32 %v2475, %v2549
        %v2551 = vpop.f32.mrb[0].mxu0
        %2552 = vmatprep.mubr.f32.mxu0 %v294
        %2553 = vmatmul.mubr.f32.gmra.mrb[0].mxu0 %v293
        %v2554 = vpop.f32.mrb[0].mxu0
        %v2555 = vadd.f32 %v2480, %v2554
        %v2556 = vpop.f32.mrb[0].mxu0
        %2557 = vdwg.mxu0
        %2558 = vmatprep.subr.mxu0 0.0
        %2559 = vmatpush1.msra.mxu0 %v509
        %2560 = vmatprep.subr.mxu0 0.0
        %2561 = vmatpush1.msra.mxu0 %v512
        %2562 = vmatprep.subr.mxu0 0.0
        %2563 = vmatpush1.msra.mxu0 %v515
        %2564 = vmatprep.subr.mxu0 0.0
        %2565 = vmatpush1.msra.mxu0 %v518
        %2566 = vmatprep.subr.mxu0 0.0
        %2567 = vmatpush1.msra.mxu0 %v521
        %2568 = vmatprep.subr.mxu0 0.0
        %2569 = vmatpush1.msra.mxu0 %v524
        %2570 = vmatprep.subr.mxu0 0.0
        %2571 = vmatpush1.msra.mxu0 %v527
        %2572 = vmatprep.subr.mxu0 0.0
        %2573 = vmatpush1.msra.mxu0 %v530
        %2574 = vmatprep.subr.mxu0 0.0
        %2575 = vmatpush1.msra.mxu0 %v533
        %2576 = vmatprep.subr.mxu0 0.0
        %2577 = vmatpush1.msra.mxu0 %v536
        %2578 = vmatprep.subr.mxu0 0.0
        %2579 = vmatpush1.msra.mxu0 %v539
        %2580 = vmatprep.subr.mxu0 0.0
        %2581 = vmatpush1.msra.mxu0 %v542
        %2582 = vmatprep.subr.mxu0 0.0
        %2583 = vmatpush1.msra.mxu0 %v545
        %2584 = vmatprep.subr.mxu0 0.0
        %2585 = vmatpush1.msra.mxu0 %v548
        %2586 = vmatprep.subr.mxu0 0.0
        %2587 = vmatpush1.msra.mxu0 %v551
        %2588 = vmatprep.subr.mxu0 0.0
        %2589 = vmatpush1.msra.mxu0 %v554
        %2590 = vmatprep.subr.mxu0 0.0
        %2591 = vmatpush1.msra.mxu0 %v557
        %2592 = vmatprep.subr.mxu0 0.0
        %2593 = vmatpush1.msra.mxu0 %v560
        %2594 = vmatprep.subr.mxu0 0.0
        %2595 = vmatpush1.msra.mxu0 %v563
        %2596 = vmatprep.subr.mxu0 0.0
        %2597 = vmatpush1.msra.mxu0 %v566
        %2598 = vmatprep.subr.mxu0 0.0
        %2599 = vmatpush1.msra.mxu0 %v569
        %2600 = vmatprep.subr.mxu0 0.0
        %2601 = vmatpush1.msra.mxu0 %v572
        %2602 = vmatprep.subr.mxu0 0.0
        %2603 = vmatpush1.msra.mxu0 %v575
        %2604 = vmatprep.subr.mxu0 0.0
        %2605 = vmatpush1.msra.mxu0 %v578
        %2606 = vmatprep.subr.mxu0 0.0
        %2607 = vmatpush1.msra.mxu0 %v581
        %2608 = vmatprep.subr.mxu0 0.0
        %2609 = vmatpush1.msra.mxu0 %v584
        %2610 = vmatprep.subr.mxu0 0.0
        %2611 = vmatpush1.msra.mxu0 %v587
        %2612 = vmatprep.subr.mxu0 0.0
        %2613 = vmatpush1.msra.mxu0 %v590
        %2614 = vmatprep.subr.mxu0 0.0
        %2615 = vmatpush1.msra.mxu0 %v593
        %2616 = vmatprep.subr.mxu0 0.0
        %2617 = vmatpush1.msra.mxu0 %v596
        %2618 = vmatprep.subr.mxu0 0.0
        %2619 = vmatpush1.msra.mxu0 %v599
        %2620 = vmatprep.subr.mxu0 0.0
        %2621 = vmatpush1.msra.mxu0 %v602
        %2622 = vmatprep.mubr.f32.mxu0 %v272
        %2623 = vmatmul.mubr.f32.gmra.mrb[0].mxu0 %v271
        %v2624 = vpop.f32.mrb[0].mxu0
        %v2625 = vadd.f32 %v2550, %v2624
        %v2626 = vpop.f32.mrb[0].mxu0
        %2627 = vmatprep.mubr.f32.mxu0 %v296
        %2628 = vmatmul.mubr.f32.gmra.mrb[0].mxu0 %v295
        %v2629 = vpop.f32.mrb[0].mxu0
        %v2630 = vadd.f32 %v2555, %v2629
        %v2631 = vpop.f32.mrb[0].mxu0
        %2632 = vdwg.mxu0
        %2633 = vmatprep.subr.mxu0 0.0
        %2634 = vmatpush1.msra.mxu0 %v605
        %2635 = vmatprep.subr.mxu0 0.0
        %2636 = vmatpush1.msra.mxu0 %v608
        %2637 = vmatprep.subr.mxu0 0.0
        %2638 = vmatpush1.msra.mxu0 %v611
        %2639 = vmatprep.subr.mxu0 0.0
        %2640 = vmatpush1.msra.mxu0 %v614
        %2641 = vmatprep.subr.mxu0 0.0
        %2642 = vmatpush1.msra.mxu0 %v617
        %2643 = vmatprep.subr.mxu0 0.0
        %2644 = vmatpush1.msra.mxu0 %v620
        %2645 = vmatprep.subr.mxu0 0.0
        %2646 = vmatpush1.msra.mxu0 %v623
        %2647 = vmatprep.subr.mxu0 0.0
        %2648 = vmatpush1.msra.mxu0 %v626
        %2649 = vmatprep.subr.mxu0 0.0
        %2650 = vmatpush1.msra.mxu0 %v629
        %2651 = vmatprep.subr.mxu0 0.0
        %2652 = vmatpush1.msra.mxu0 %v632
        %2653 = vmatprep.subr.mxu0 0.0
        %2654 = vmatpush1.msra.mxu0 %v635
        %2655 = vmatprep.subr.mxu0 0.0
        %2656 = vmatpush1.msra.mxu0 %v638
        %2657 = vmatprep.subr.mxu0 0.0
        %2658 = vmatpush1.msra.mxu0 %v641
        %2659 = vmatprep.subr.mxu0 0.0
        %2660 = vmatpush1.msra.mxu0 %v644
        %2661 = vmatprep.subr.mxu0 0.0
        %2662 = vmatpush1.msra.mxu0 %v647
        %2663 = vmatprep.subr.mxu0 0.0
        %2664 = vmatpush1.msra.mxu0 %v650
        %2665 = vmatprep.subr.mxu0 0.0
        %2666 = vmatpush1.msra.mxu0 %v653
        %2667 = vmatprep.subr.mxu0 0.0
        %2668 = vmatpush1.msra.mxu0 %v656
        %2669 = vmatprep.subr.mxu0 0.0
        %2670 = vmatpush1.msra.mxu0 %v659
        %2671 = vmatprep.subr.mxu0 0.0
        %2672 = vmatpush1.msra.mxu0 %v662
        %2673 = vmatprep.subr.mxu0 0.0
        %2674 = vmatpush1.msra.mxu0 %v665
        %2675 = vmatprep.subr.mxu0 0.0
        %2676 = vmatpush1.msra.mxu0 %v668
        %2677 = vmatprep.subr.mxu0 0.0
        %2678 = vmatpush1.msra.mxu0 %v671
        %2679 = vmatprep.subr.mxu0 0.0
        %2680 = vmatpush1.msra.mxu0 %v674
        %2681 = vmatprep.subr.mxu0 0.0
        %2682 = vmatpush1.msra.mxu0 %v677
        %2683 = vmatprep.subr.mxu0 0.0
        %2684 = vmatpush1.msra.mxu0 %v680
        %2685 = vmatprep.subr.mxu0 0.0
        %2686 = vmatpush1.msra.mxu0 %v683
        %2687 = vmatprep.subr.mxu0 0.0
        %2688 = vmatpush1.msra.mxu0 %v686
        %2689 = vmatprep.subr.mxu0 0.0
        %2690 = vmatpush1.msra.mxu0 %v689
        %2691 = vmatprep.subr.mxu0 0.0
        %2692 = vmatpush1.msra.mxu0 %v692
        %2693 = vmatprep.subr.mxu0 0.0
        %2694 = vmatpush1.msra.mxu0 %v695
        %2695 = vmatprep.subr.mxu0 0.0
        %2696 = vmatpush1.msra.mxu0 %v698
        %2697 = vmatprep.mubr.f32.mxu0 %v274
        %2698 = vmatmul.mubr.f32.gmra.mrb[0].mxu0 %v273
        %v2699 = vpop.f32.mrb[0].mxu0
        %v2700 = vadd.f32 %v2625, %v2699
        %v2701 = vpop.f32.mrb[0].mxu0
        %2702 = vmatprep.mubr.f32.mxu0 %v298
        %2703 = vmatmul.mubr.f32.gmra.mrb[0].mxu0 %v297
        %v2704 = vpop.f32.mrb[0].mxu0
        %v2705 = vadd.f32 %v2630, %v2704
        %v2706 = vpop.f32.mrb[0].mxu0
        %2707 = vdwg.mxu0
        %2708 = vmatprep.subr.mxu0 0.0
        %2709 = vmatpush1.msra.mxu0 %v701
        %2710 = vmatprep.subr.mxu0 0.0
        %2711 = vmatpush1.msra.mxu0 %v704
        %2712 = vmatprep.subr.mxu0 0.0
        %2713 = vmatpush1.msra.mxu0 %v707
        %2714 = vmatprep.subr.mxu0 0.0
        %2715 = vmatpush1.msra.mxu0 %v710
        %2716 = vmatprep.subr.mxu0 0.0
        %2717 = vmatpush1.msra.mxu0 %v713
        %2718 = vmatprep.subr.mxu0 0.0
        %2719 = vmatpush1.msra.mxu0 %v716
        %2720 = vmatprep.subr.mxu0 0.0
        %2721 = vmatpush1.msra.mxu0 %v719
        %2722 = vmatprep.subr.mxu0 0.0
        %2723 = vmatpush1.msra.mxu0 %v722
        %2724 = vmatprep.subr.mxu0 0.0
        %2725 = vmatpush1.msra.mxu0 %v725
        %2726 = vmatprep.subr.mxu0 0.0
        %2727 = vmatpush1.msra.mxu0 %v728
        %2728 = vmatprep.subr.mxu0 0.0
        %2729 = vmatpush1.msra.mxu0 %v731
        %2730 = vmatprep.subr.mxu0 0.0
        %2731 = vmatpush1.msra.mxu0 %v734
        %2732 = vmatprep.subr.mxu0 0.0
        %2733 = vmatpush1.msra.mxu0 %v737
        %2734 = vmatprep.subr.mxu0 0.0
        %2735 = vmatpush1.msra.mxu0 %v740
        %2736 = vmatprep.subr.mxu0 0.0
        %2737 = vmatpush1.msra.mxu0 %v743
        %2738 = vmatprep.subr.mxu0 0.0
        %2739 = vmatpush1.msra.mxu0 %v746
        %2740 = vmatprep.subr.mxu0 0.0
        %2741 = vmatpush1.msra.mxu0 %v749
        %2742 = vmatprep.subr.mxu0 0.0
        %2743 = vmatpush1.msra.mxu0 %v752
        %2744 = vmatprep.subr.mxu0 0.0
        %2745 = vmatpush1.msra.mxu0 %v755
        %2746 = vmatprep.subr.mxu0 0.0
        %2747 = vmatpush1.msra.mxu0 %v758
        %2748 = vmatprep.subr.mxu0 0.0
        %2749 = vmatpush1.msra.mxu0 %v761
        %2750 = vmatprep.subr.mxu0 0.0
        %2751 = vmatpush1.msra.mxu0 %v764
        %2752 = vmatprep.subr.mxu0 0.0
        %2753 = vmatpush1.msra.mxu0 %v767
        %2754 = vmatprep.subr.mxu0 0.0
        %2755 = vmatpush1.msra.mxu0 %v770
        %2756 = vmatprep.subr.mxu0 0.0
        %2757 = vmatpush1.msra.mxu0 %v773
        %2758 = vmatprep.subr.mxu0 0.0
        %2759 = vmatpush1.msra.mxu0 %v776
        %2760 = vmatprep.subr.mxu0 0.0
        %2761 = vmatpush1.msra.mxu0 %v779
        %2762 = vmatprep.subr.mxu0 0.0
        %2763 = vmatpush1.msra.mxu0 %v782
        %2764 = vmatprep.subr.mxu0 0.0
        %2765 = vmatpush1.msra.mxu0 %v785
        %2766 = vmatprep.subr.mxu0 0.0
        %2767 = vmatpush1.msra.mxu0 %v788
        %2768 = vmatprep.subr.mxu0 0.0
        %2769 = vmatpush1.msra.mxu0 %v791
        %2770 = vmatprep.subr.mxu0 0.0
        %2771 = vmatpush1.msra.mxu0 %v794
        %2772 = vmatprep.mubr.f32.mxu0 %v276
        %2773 = vmatmul.mubr.f32.gmra.mrb[0].mxu0 %v275
        %v2774 = vpop.f32.mrb[0].mxu0
        %v2775 = vadd.f32 %v2700, %v2774
        %v2776 = vpop.f32.mrb[0].mxu0
        %2777 = vmatprep.mubr.f32.mxu0 %v300
        %2778 = vmatmul.mubr.f32.gmra.mrb[0].mxu0 %v299
        %v2779 = vpop.f32.mrb[0].mxu0
        %v2780 = vadd.f32 %v2705, %v2779
        %v2781 = vpop.f32.mrb[0].mxu0
        %2782 = vdwg.mxu0
        %2783 = vmatprep.subr.mxu0 0.0
        %2784 = vmatpush1.msra.mxu0 %v797
        %2785 = vmatprep.subr.mxu0 0.0
        %2786 = vmatpush1.msra.mxu0 %v800
        %2787 = vmatprep.subr.mxu0 0.0
        %2788 = vmatpush1.msra.mxu0 %v803
        %2789 = vmatprep.subr.mxu0 0.0
        %2790 = vmatpush1.msra.mxu0 %v806
        %2791 = vmatprep.subr.mxu0 0.0
        %2792 = vmatpush1.msra.mxu0 %v809
        %2793 = vmatprep.subr.mxu0 0.0
        %2794 = vmatpush1.msra.mxu0 %v812
        %2795 = vmatprep.subr.mxu0 0.0
        %2796 = vmatpush1.msra.mxu0 %v815
        %2797 = vmatprep.subr.mxu0 0.0
        %2798 = vmatpush1.msra.mxu0 %v818
        %2799 = vmatprep.subr.mxu0 0.0
        %2800 = vmatpush1.msra.mxu0 %v821
        %2801 = vmatprep.subr.mxu0 0.0
        %2802 = vmatpush1.msra.mxu0 %v824
        %2803 = vmatprep.subr.mxu0 0.0
        %2804 = vmatpush1.msra.mxu0 %v827
        %2805 = vmatprep.subr.mxu0 0.0
        %2806 = vmatpush1.msra.mxu0 %v830
        %2807 = vmatprep.subr.mxu0 0.0
        %2808 = vmatpush1.msra.mxu0 %v833
        %2809 = vmatprep.subr.mxu0 0.0
        %2810 = vmatpush1.msra.mxu0 %v836
        %2811 = vmatprep.subr.mxu0 0.0
        %2812 = vmatpush1.msra.mxu0 %v839
        %2813 = vmatprep.subr.mxu0 0.0
        %2814 = vmatpush1.msra.mxu0 %v842
        %2815 = vmatprep.subr.mxu0 0.0
        %2816 = vmatpush1.msra.mxu0 %v845
        %2817 = vmatprep.subr.mxu0 0.0
        %2818 = vmatpush1.msra.mxu0 %v848
        %2819 = vmatprep.subr.mxu0 0.0
        %2820 = vmatpush1.msra.mxu0 %v851
        %2821 = vmatprep.subr.mxu0 0.0
        %2822 = vmatpush1.msra.mxu0 %v854
        %2823 = vmatprep.subr.mxu0 0.0
        %2824 = vmatpush1.msra.mxu0 %v857
        %2825 = vmatprep.subr.mxu0 0.0
        %2826 = vmatpush1.msra.mxu0 %v860
        %2827 = vmatprep.subr.mxu0 0.0
        %2828 = vmatpush1.msra.mxu0 %v863
        %2829 = vmatprep.subr.mxu0 0.0
        %2830 = vmatpush1.msra.mxu0 %v866
        %2831 = vmatprep.subr.mxu0 0.0
        %2832 = vmatpush1.msra.mxu0 %v869
        %2833 = vmatprep.subr.mxu0 0.0
        %2834 = vmatpush1.msra.mxu0 %v872
        %2835 = vmatprep.subr.mxu0 0.0
        %2836 = vmatpush1.msra.mxu0 %v875
        %2837 = vmatprep.subr.mxu0 0.0
        %2838 = vmatpush1.msra.mxu0 %v878
        %2839 = vmatprep.subr.mxu0 0.0
        %2840 = vmatpush1.msra.mxu0 %v881
        %2841 = vmatprep.subr.mxu0 0.0
        %2842 = vmatpush1.msra.mxu0 %v884
        %2843 = vmatprep.subr.mxu0 0.0
        %2844 = vmatpush1.msra.mxu0 %v887
        %2845 = vmatprep.subr.mxu0 0.0
        %2846 = vmatpush1.msra.mxu0 %v890
        %2847 = vmatprep.mubr.f32.mxu0 %v278
        %2848 = vmatmul.mubr.f32.gmra.mrb[0].mxu0 %v277
        %v2849 = vpop.f32.mrb[0].mxu0
        %v2850 = vadd.f32 %v2775, %v2849
        %v2851 = vpop.f32.mrb[0].mxu0
        %2852 = vmatprep.mubr.f32.mxu0 %v302
        %2853 = vmatmul.mubr.f32.gmra.mrb[0].mxu0 %v301
        %v2854 = vpop.f32.mrb[0].mxu0
        %v2855 = vadd.f32 %v2780, %v2854
        %v2856 = vpop.f32.mrb[0].mxu0
        %2857 = vdwg.mxu0
        %2858 = vmatprep.subr.mxu0 0.0
        %2859 = vmatpush1.msra.mxu0 %v893
        %2860 = vmatprep.subr.mxu0 0.0
        %2861 = vmatpush1.msra.mxu0 %v896
        %2862 = vmatprep.subr.mxu0 0.0
        %2863 = vmatpush1.msra.mxu0 %v899
        %2864 = vmatprep.subr.mxu0 0.0
        %2865 = vmatpush1.msra.mxu0 %v902
        %2866 = vmatprep.subr.mxu0 0.0
        %2867 = vmatpush1.msra.mxu0 %v905
        %2868 = vmatprep.subr.mxu0 0.0
        %2869 = vmatpush1.msra.mxu0 %v908
        %2870 = vmatprep.subr.mxu0 0.0
        %2871 = vmatpush1.msra.mxu0 %v911
        %2872 = vmatprep.subr.mxu0 0.0
        %2873 = vmatpush1.msra.mxu0 %v914
        %2874 = vmatprep.subr.mxu0 0.0
        %2875 = vmatpush1.msra.mxu0 %v917
        %2876 = vmatprep.subr.mxu0 0.0
        %2877 = vmatpush1.msra.mxu0 %v920
        %2878 = vmatprep.subr.mxu0 0.0
        %2879 = vmatpush1.msra.mxu0 %v923
        %2880 = vmatprep.subr.mxu0 0.0
        %2881 = vmatpush1.msra.mxu0 %v926
        %2882 = vmatprep.subr.mxu0 0.0
        %2883 = vmatpush1.msra.mxu0 %v929
        %2884 = vmatprep.subr.mxu0 0.0
        %2885 = vmatpush1.msra.mxu0 %v932
        %2886 = vmatprep.subr.mxu0 0.0
        %2887 = vmatpush1.msra.mxu0 %v935
        %2888 = vmatprep.subr.mxu0 0.0
        %2889 = vmatpush1.msra.mxu0 %v938
        %2890 = vmatprep.subr.mxu0 0.0
        %2891 = vmatpush1.msra.mxu0 %v941
        %2892 = vmatprep.subr.mxu0 0.0
        %2893 = vmatpush1.msra.mxu0 %v944
        %2894 = vmatprep.subr.mxu0 0.0
        %2895 = vmatpush1.msra.mxu0 %v947
        %2896 = vmatprep.subr.mxu0 0.0
        %2897 = vmatpush1.msra.mxu0 %v950
        %2898 = vmatprep.subr.mxu0 0.0
        %2899 = vmatpush1.msra.mxu0 %v953
        %2900 = vmatprep.subr.mxu0 0.0
        %2901 = vmatpush1.msra.mxu0 %v956
        %2902 = vmatprep.subr.mxu0 0.0
        %2903 = vmatpush1.msra.mxu0 %v959
        %2904 = vmatprep.subr.mxu0 0.0
        %2905 = vmatpush1.msra.mxu0 %v962
        %2906 = vmatprep.subr.mxu0 0.0
        %2907 = vmatpush1.msra.mxu0 %v965
        %2908 = vmatprep.subr.mxu0 0.0
        %2909 = vmatpush1.msra.mxu0 %v968
        %2910 = vmatprep.subr.mxu0 0.0
        %2911 = vmatpush1.msra.mxu0 %v971
        %2912 = vmatprep.subr.mxu0 0.0
        %2913 = vmatpush1.msra.mxu0 %v974
        %2914 = vmatprep.subr.mxu0 0.0
        %2915 = vmatpush1.msra.mxu0 %v977
        %2916 = vmatprep.subr.mxu0 0.0
        %2917 = vmatpush1.msra.mxu0 %v980
        %2918 = vmatprep.subr.mxu0 0.0
        %2919 = vmatpush1.msra.mxu0 %v983
        %2920 = vmatprep.subr.mxu0 0.0
        %2921 = vmatpush1.msra.mxu0 %v986
        %2922 = vmatprep.mubr.f32.mxu0 %v280
        %2923 = vmatmul.mubr.f32.gmra.mrb[0].mxu0 %v279
        %v2924 = vpop.f32.mrb[0].mxu0
        %v2925 = vadd.f32 %v2850, %v2924
        %v2926 = vpop.f32.mrb[0].mxu0
        %2927 = vmatprep.mubr.f32.mxu0 %v304
        %2928 = vmatmul.mubr.f32.gmra.mrb[0].mxu0 %v303
        %v2929 = vpop.f32.mrb[0].mxu0
        %v2930 = vadd.f32 %v2855, %v2929
        %v2931 = vpop.f32.mrb[0].mxu0
        %2932 = vdwg.mxu0
        %2933 = vmatprep.subr.mxu0 0.0
        %2934 = vmatpush1.msra.mxu0 %v989
        %2935 = vmatprep.subr.mxu0 0.0
        %2936 = vmatpush1.msra.mxu0 %v992
        %2937 = vmatprep.subr.mxu0 0.0
        %2938 = vmatpush1.msra.mxu0 %v995
        %2939 = vmatprep.subr.mxu0 0.0
        %2940 = vmatpush1.msra.mxu0 %v998
        %2941 = vmatprep.subr.mxu0 0.0
        %2942 = vmatpush1.msra.mxu0 %v1001
        %2943 = vmatprep.subr.mxu0 0.0
        %2944 = vmatpush1.msra.mxu0 %v1004
        %2945 = vmatprep.subr.mxu0 0.0
        %2946 = vmatpush1.msra.mxu0 %v1007
        %2947 = vmatprep.subr.mxu0 0.0
        %2948 = vmatpush1.msra.mxu0 %v1010
        %2949 = vmatprep.subr.mxu0 0.0
        %2950 = vmatpush1.msra.mxu0 %v1013
        %2951 = vmatprep.subr.mxu0 0.0
        %2952 = vmatpush1.msra.mxu0 %v1016
        %2953 = vmatprep.subr.mxu0 0.0
        %2954 = vmatpush1.msra.mxu0 %v1019
        %2955 = vmatprep.subr.mxu0 0.0
        %2956 = vmatpush1.msra.mxu0 %v1022
        %2957 = vmatprep.subr.mxu0 0.0
        %2958 = vmatpush1.msra.mxu0 %v1025
        %2959 = vmatprep.subr.mxu0 0.0
        %2960 = vmatpush1.msra.mxu0 %v1028
        %2961 = vmatprep.subr.mxu0 0.0
        %2962 = vmatpush1.msra.mxu0 %v1031
        %2963 = vmatprep.subr.mxu0 0.0
        %2964 = vmatpush1.msra.mxu0 %v1034
        %2965 = vmatprep.subr.mxu0 0.0
        %2966 = vmatpush1.msra.mxu0 %v1037
        %2967 = vmatprep.subr.mxu0 0.0
        %2968 = vmatpush1.msra.mxu0 %v1040
        %2969 = vmatprep.subr.mxu0 0.0
        %2970 = vmatpush1.msra.mxu0 %v1043
        %2971 = vmatprep.subr.mxu0 0.0
        %2972 = vmatpush1.msra.mxu0 %v1046
        %2973 = vmatprep.subr.mxu0 0.0
        %2974 = vmatpush1.msra.mxu0 %v1049
        %2975 = vmatprep.subr.mxu0 0.0
        %2976 = vmatpush1.msra.mxu0 %v1052
        %2977 = vmatprep.subr.mxu0 0.0
        %2978 = vmatpush1.msra.mxu0 %v1055
        %2979 = vmatprep.subr.mxu0 0.0
        %2980 = vmatpush1.msra.mxu0 %v1058
        %2981 = vmatprep.subr.mxu0 0.0
        %2982 = vmatpush1.msra.mxu0 %v1061
        %2983 = vmatprep.subr.mxu0 0.0
        %2984 = vmatpush1.msra.mxu0 %v1064
        %2985 = vmatprep.subr.mxu0 0.0
        %2986 = vmatpush1.msra.mxu0 %v1067
        %2987 = vmatprep.subr.mxu0 0.0
        %2988 = vmatpush1.msra.mxu0 %v1070
        %2989 = vmatprep.subr.mxu0 0.0
        %2990 = vmatpush1.msra.mxu0 %v1073
        %2991 = vmatprep.subr.mxu0 0.0
        %2992 = vmatpush1.msra.mxu0 %v1076
        %2993 = vmatprep.subr.mxu0 0.0
        %2994 = vmatpush1.msra.mxu0 %v1079
        %2995 = vmatprep.subr.mxu0 0.0
        %2996 = vmatpush1.msra.mxu0 %v1082
        %2997 = vmatprep.mubr.f32.mxu0 %v282
        %2998 = vmatmul.mubr.f32.gmra.mrb[0].mxu0 %v281
        %v2999 = vpop.f32.mrb[0].mxu0
        %v3000 = vadd.f32 %v2925, %v2999
        %v3001 = vpop.f32.mrb[0].mxu0
        %3002 = vmatprep.mubr.f32.mxu0 %v306
        %3003 = vmatmul.mubr.f32.gmra.mrb[0].mxu0 %v305
        %v3004 = vpop.f32.mrb[0].mxu0
        %v3005 = vadd.f32 %v2930, %v3004
        %v3006 = vpop.f32.mrb[0].mxu0
        %3007 = vdwg.mxu0
        %3008 = vmatprep.subr.mxu0 0.0
        %3009 = vmatpush1.msra.mxu0 %v1085
        %3010 = vmatprep.subr.mxu0 0.0
        %3011 = vmatpush1.msra.mxu0 %v1088
        %3012 = vmatprep.subr.mxu0 0.0
        %3013 = vmatpush1.msra.mxu0 %v1091
        %3014 = vmatprep.subr.mxu0 0.0
        %3015 = vmatpush1.msra.mxu0 %v1094
        %3016 = vmatprep.subr.mxu0 0.0
        %3017 = vmatpush1.msra.mxu0 %v1097
        %3018 = vmatprep.subr.mxu0 0.0
        %3019 = vmatpush1.msra.mxu0 %v1100
        %3020 = vmatprep.subr.mxu0 0.0
        %3021 = vmatpush1.msra.mxu0 %v1103
        %3022 = vmatprep.subr.mxu0 0.0
        %3023 = vmatpush1.msra.mxu0 %v1106
        %3024 = vmatprep.subr.mxu0 0.0
        %3025 = vmatpush1.msra.mxu0 %v1109
        %3026 = vmatprep.subr.mxu0 0.0
        %3027 = vmatpush1.msra.mxu0 %v1112
        %3028 = vmatprep.subr.mxu0 0.0
        %3029 = vmatpush1.msra.mxu0 %v1115
        %3030 = vmatprep.subr.mxu0 0.0
        %3031 = vmatpush1.msra.mxu0 %v1118
        %3032 = vmatprep.subr.mxu0 0.0
        %3033 = vmatpush1.msra.mxu0 %v1121
        %3034 = vmatprep.subr.mxu0 0.0
        %3035 = vmatpush1.msra.mxu0 %v1124
        %3036 = vmatprep.subr.mxu0 0.0
        %3037 = vmatpush1.msra.mxu0 %v1127
        %3038 = vmatprep.subr.mxu0 0.0
        %3039 = vmatpush1.msra.mxu0 %v1130
        %3040 = vmatprep.subr.mxu0 0.0
        %3041 = vmatpush1.msra.mxu0 %v1133
        %3042 = vmatprep.subr.mxu0 0.0
        %3043 = vmatpush1.msra.mxu0 %v1136
        %3044 = vmatprep.subr.mxu0 0.0
        %3045 = vmatpush1.msra.mxu0 %v1139
        %3046 = vmatprep.subr.mxu0 0.0
        %3047 = vmatpush1.msra.mxu0 %v1142
        %3048 = vmatprep.subr.mxu0 0.0
        %3049 = vmatpush1.msra.mxu0 %v1145
        %3050 = vmatprep.subr.mxu0 0.0
        %3051 = vmatpush1.msra.mxu0 %v1148
        %3052 = vmatprep.subr.mxu0 0.0
        %3053 = vmatpush1.msra.mxu0 %v1151
        %3054 = vmatprep.subr.mxu0 0.0
        %3055 = vmatpush1.msra.mxu0 %v1154
        %3056 = vmatprep.subr.mxu0 0.0
        %3057 = vmatpush1.msra.mxu0 %v1157
        %3058 = vmatprep.subr.mxu0 0.0
        %3059 = vmatpush1.msra.mxu0 %v1160
        %3060 = vmatprep.subr.mxu0 0.0
        %3061 = vmatpush1.msra.mxu0 %v1163
        %3062 = vmatprep.subr.mxu0 0.0
        %3063 = vmatpush1.msra.mxu0 %v1166
        %3064 = vmatprep.subr.mxu0 0.0
        %3065 = vmatpush1.msra.mxu0 %v1169
        %3066 = vmatprep.subr.mxu0 0.0
        %3067 = vmatpush1.msra.mxu0 %v1172
        %3068 = vmatprep.subr.mxu0 0.0
        %3069 = vmatpush1.msra.mxu0 %v1175
        %3070 = vmatprep.subr.mxu0 0.0
        %3071 = vmatpush1.msra.mxu0 %v1178
        %3072 = vmatprep.mubr.f32.mxu0 %v284
        %3073 = vmatmul.mubr.f32.gmra.mrb[0].mxu0 %v283
        %v3074 = vpop.f32.mrb[0].mxu0
        %v3075 = vadd.f32 %v3000, %v3074
        %v3076 = vpop.f32.mrb[0].mxu0
        %3077 = vmatprep.mubr.f32.mxu0 %v308
        %3078 = vmatmul.mubr.f32.gmra.mrb[0].mxu0 %v307
        %v3079 = vpop.f32.mrb[0].mxu0
        %v3080 = vadd.f32 %v3005, %v3079
        %v3081 = vpop.f32.mrb[0].mxu0
        %3082 = vdwg.mxu0
        %3083 = vmatprep.subr.mxu0 0.0
        %3084 = vmatpush1.msra.mxu0 %v1181
        %3085 = vmatprep.subr.mxu0 0.0
        %3086 = vmatpush1.msra.mxu0 %v1184
        %3087 = vmatprep.subr.mxu0 0.0
        %3088 = vmatpush1.msra.mxu0 %v1187
        %3089 = vmatprep.subr.mxu0 0.0
        %3090 = vmatpush1.msra.mxu0 %v1190
        %3091 = vmatprep.subr.mxu0 0.0
        %3092 = vmatpush1.msra.mxu0 %v1193
        %3093 = vmatprep.subr.mxu0 0.0
        %3094 = vmatpush1.msra.mxu0 %v1196
        %3095 = vmatprep.subr.mxu0 0.0
        %3096 = vmatpush1.msra.mxu0 %v1199
        %3097 = vmatprep.subr.mxu0 0.0
        %3098 = vmatpush1.msra.mxu0 %v1202
        %3099 = vmatprep.subr.mxu0 0.0
        %3100 = vmatpush1.msra.mxu0 %v1205
        %3101 = vmatprep.subr.mxu0 0.0
        %3102 = vmatpush1.msra.mxu0 %v1208
        %3103 = vmatprep.subr.mxu0 0.0
        %3104 = vmatpush1.msra.mxu0 %v1211
        %3105 = vmatprep.subr.mxu0 0.0
        %3106 = vmatpush1.msra.mxu0 %v1214
        %3107 = vmatprep.subr.mxu0 0.0
        %3108 = vmatpush1.msra.mxu0 %v1217
        %3109 = vmatprep.subr.mxu0 0.0
        %3110 = vmatpush1.msra.mxu0 %v1220
        %3111 = vmatprep.subr.mxu0 0.0
        %3112 = vmatpush1.msra.mxu0 %v1223
        %3113 = vmatprep.subr.mxu0 0.0
        %3114 = vmatpush1.msra.mxu0 %v1226
        %3115 = vmatprep.subr.mxu0 0.0
        %3116 = vmatpush1.msra.mxu0 %v1229
        %3117 = vmatprep.subr.mxu0 0.0
        %3118 = vmatpush1.msra.mxu0 %v1232
        %3119 = vmatprep.subr.mxu0 0.0
        %3120 = vmatpush1.msra.mxu0 %v1235
        %3121 = vmatprep.subr.mxu0 0.0
        %3122 = vmatpush1.msra.mxu0 %v1238
        %3123 = vmatprep.subr.mxu0 0.0
        %3124 = vmatpush1.msra.mxu0 %v1241
        %3125 = vmatprep.subr.mxu0 0.0
        %3126 = vmatpush1.msra.mxu0 %v1244
        %3127 = vmatprep.subr.mxu0 0.0
        %3128 = vmatpush1.msra.mxu0 %v1247
        %3129 = vmatprep.subr.mxu0 0.0
        %3130 = vmatpush1.msra.mxu0 %v1250
        %3131 = vmatprep.subr.mxu0 0.0
        %3132 = vmatpush1.msra.mxu0 %v1253
        %3133 = vmatprep.subr.mxu0 0.0
        %3134 = vmatpush1.msra.mxu0 %v1256
        %3135 = vmatprep.subr.mxu0 0.0
        %3136 = vmatpush1.msra.mxu0 %v1259
        %3137 = vmatprep.subr.mxu0 0.0
        %3138 = vmatpush1.msra.mxu0 %v1262
        %3139 = vmatprep.subr.mxu0 0.0
        %3140 = vmatpush1.msra.mxu0 %v1265
        %3141 = vmatprep.subr.mxu0 0.0
        %3142 = vmatpush1.msra.mxu0 %v1268
        %3143 = vmatprep.subr.mxu0 0.0
        %3144 = vmatpush1.msra.mxu0 %v1271
        %3145 = vmatprep.subr.mxu0 0.0
        %3146 = vmatpush1.msra.mxu0 %v1274
        %3147 = vmatprep.mubr.f32.mxu0 %v286
        %3148 = vmatmul.mubr.f32.gmra.mrb[0].mxu0 %v285
        %v3149 = vpop.f32.mrb[0].mxu0
        %v3150 = vadd.f32 %v3075, %v3149
        %v3151 = vpop.f32.mrb[0].mxu0
        %3152 = vmatprep.mubr.f32.mxu0 %v310
        %3153 = vmatmul.mubr.f32.gmra.mrb[0].mxu0 %v309
        %v3154 = vpop.f32.mrb[0].mxu0
        %v3155 = vadd.f32 %v3080, %v3154
        %v3156 = vpop.f32.mrb[0].mxu0
        %3157 = vdwg.mxu0
        %3158 = vmatprep.subr.mxu0 0.0
        %3159 = vmatpush1.msra.mxu0 %v1277
        %3160 = vmatprep.subr.mxu0 0.0
        %3161 = vmatpush1.msra.mxu0 %v1280
        %3162 = vmatprep.subr.mxu0 0.0
        %3163 = vmatpush1.msra.mxu0 %v1283
        %3164 = vmatprep.subr.mxu0 0.0
        %3165 = vmatpush1.msra.mxu0 %v1286
        %3166 = vmatprep.subr.mxu0 0.0
        %3167 = vmatpush1.msra.mxu0 %v1289
        %3168 = vmatprep.subr.mxu0 0.0
        %3169 = vmatpush1.msra.mxu0 %v1292
        %3170 = vmatprep.subr.mxu0 0.0
        %3171 = vmatpush1.msra.mxu0 %v1295
        %3172 = vmatprep.subr.mxu0 0.0
        %3173 = vmatpush1.msra.mxu0 %v1298
        %3174 = vmatprep.subr.mxu0 0.0
        %3175 = vmatpush1.msra.mxu0 %v1301
        %3176 = vmatprep.subr.mxu0 0.0
        %3177 = vmatpush1.msra.mxu0 %v1304
        %3178 = vmatprep.subr.mxu0 0.0
        %3179 = vmatpush1.msra.mxu0 %v1307
        %3180 = vmatprep.subr.mxu0 0.0
        %3181 = vmatpush1.msra.mxu0 %v1310
        %3182 = vmatprep.subr.mxu0 0.0
        %3183 = vmatpush1.msra.mxu0 %v1313
        %3184 = vmatprep.subr.mxu0 0.0
        %3185 = vmatpush1.msra.mxu0 %v1316
        %3186 = vmatprep.subr.mxu0 0.0
        %3187 = vmatpush1.msra.mxu0 %v1319
        %3188 = vmatprep.subr.mxu0 0.0
        %3189 = vmatpush1.msra.mxu0 %v1322
        %3190 = vmatprep.subr.mxu0 0.0
        %3191 = vmatpush1.msra.mxu0 %v1325
        %3192 = vmatprep.subr.mxu0 0.0
        %3193 = vmatpush1.msra.mxu0 %v1328
        %3194 = vmatprep.subr.mxu0 0.0
        %3195 = vmatpush1.msra.mxu0 %v1331
        %3196 = vmatprep.subr.mxu0 0.0
        %3197 = vmatpush1.msra.mxu0 %v1334
        %3198 = vmatprep.subr.mxu0 0.0
        %3199 = vmatpush1.msra.mxu0 %v1337
        %3200 = vmatprep.subr.mxu0 0.0
        %3201 = vmatpush1.msra.mxu0 %v1340
        %3202 = vmatprep.subr.mxu0 0.0
        %3203 = vmatpush1.msra.mxu0 %v1343
        %3204 = vmatprep.subr.mxu0 0.0
        %3205 = vmatpush1.msra.mxu0 %v1346
        %3206 = vmatprep.subr.mxu0 0.0
        %3207 = vmatpush1.msra.mxu0 %v1349
        %3208 = vmatprep.subr.mxu0 0.0
        %3209 = vmatpush1.msra.mxu0 %v1352
        %3210 = vmatprep.subr.mxu0 0.0
        %3211 = vmatpush1.msra.mxu0 %v1355
        %3212 = vmatprep.subr.mxu0 0.0
        %3213 = vmatpush1.msra.mxu0 %v1358
        %3214 = vmatprep.subr.mxu0 0.0
        %3215 = vmatpush1.msra.mxu0 %v1361
        %3216 = vmatprep.subr.mxu0 0.0
        %3217 = vmatpush1.msra.mxu0 %v1364
        %3218 = vmatprep.subr.mxu0 0.0
        %3219 = vmatpush1.msra.mxu0 %v1367
        %3220 = vmatprep.subr.mxu0 0.0
        %3221 = vmatpush1.msra.mxu0 %v1370
        %3222 = vmatprep.mubr.f32.mxu0 %v288
        %3223 = vmatmul.mubr.f32.gmra.mrb[0].mxu0 %v287
        %v3224 = vpop.f32.mrb[0].mxu0
        %v3225 = vadd.f32 %v3150, %v3224
        %v3226 = vpop.f32.mrb[0].mxu0
        %3227 = vmatprep.mubr.f32.mxu0 %v312
        %3228 = vmatmul.mubr.f32.gmra.mrb[0].mxu0 %v311
        %v3229 = vpop.f32.mrb[0].mxu0
        %v3230 = vadd.f32 %v3155, %v3229
        %v3231 = vpop.f32.mrb[0].mxu0
        %3232 = vdwg.mxu0
        %3233 = vmatprep.subr.mxu0 0.0
        %3234 = vmatpush1.msra.mxu0 %v1373
        %3235 = vmatprep.subr.mxu0 0.0
        %3236 = vmatpush1.msra.mxu0 %v1376
        %3237 = vmatprep.subr.mxu0 0.0
        %3238 = vmatpush1.msra.mxu0 %v1379
        %3239 = vmatprep.subr.mxu0 0.0
        %3240 = vmatpush1.msra.mxu0 %v1382
        %3241 = vmatprep.subr.mxu0 0.0
        %3242 = vmatpush1.msra.mxu0 %v1385
        %3243 = vmatprep.subr.mxu0 0.0
        %3244 = vmatpush1.msra.mxu0 %v1388
        %3245 = vmatprep.subr.mxu0 0.0
        %3246 = vmatpush1.msra.mxu0 %v1391
        %3247 = vmatprep.subr.mxu0 0.0
        %3248 = vmatpush1.msra.mxu0 %v1394
        %3249 = vmatprep.subr.mxu0 0.0
        %3250 = vmatpush1.msra.mxu0 %v1397
        %3251 = vmatprep.subr.mxu0 0.0
        %3252 = vmatpush1.msra.mxu0 %v1400
        %3253 = vmatprep.subr.mxu0 0.0
        %3254 = vmatpush1.msra.mxu0 %v1403
        %3255 = vmatprep.subr.mxu0 0.0
        %3256 = vmatpush1.msra.mxu0 %v1406
        %3257 = vmatprep.subr.mxu0 0.0
        %3258 = vmatpush1.msra.mxu0 %v1409
        %3259 = vmatprep.subr.mxu0 0.0
        %3260 = vmatpush1.msra.mxu0 %v1412
        %3261 = vmatprep.subr.mxu0 0.0
        %3262 = vmatpush1.msra.mxu0 %v1415
        %3263 = vmatprep.subr.mxu0 0.0
        %3264 = vmatpush1.msra.mxu0 %v1418
        %3265 = vmatprep.subr.mxu0 0.0
        %3266 = vmatpush1.msra.mxu0 %v1421
        %3267 = vmatprep.subr.mxu0 0.0
        %3268 = vmatpush1.msra.mxu0 %v1424
        %3269 = vmatprep.subr.mxu0 0.0
        %3270 = vmatpush1.msra.mxu0 %v1427
        %3271 = vmatprep.subr.mxu0 0.0
        %3272 = vmatpush1.msra.mxu0 %v1430
        %3273 = vmatprep.subr.mxu0 0.0
        %3274 = vmatpush1.msra.mxu0 %v1433
        %3275 = vmatprep.subr.mxu0 0.0
        %3276 = vmatpush1.msra.mxu0 %v1436
        %3277 = vmatprep.subr.mxu0 0.0
        %3278 = vmatpush1.msra.mxu0 %v1439
        %3279 = vmatprep.subr.mxu0 0.0
        %3280 = vmatpush1.msra.mxu0 %v1442
        %3281 = vmatprep.subr.mxu0 0.0
        %3282 = vmatpush1.msra.mxu0 %v1445
        %3283 = vmatprep.subr.mxu0 0.0
        %3284 = vmatpush1.msra.mxu0 %v1448
        %3285 = vmatprep.subr.mxu0 0.0
        %3286 = vmatpush1.msra.mxu0 %v1451
        %3287 = vmatprep.subr.mxu0 0.0
        %3288 = vmatpush1.msra.mxu0 %v1454
        %3289 = vmatprep.subr.mxu0 0.0
        %3290 = vmatpush1.msra.mxu0 %v1457
        %3291 = vmatprep.subr.mxu0 0.0
        %3292 = vmatpush1.msra.mxu0 %v1460
        %3293 = vmatprep.subr.mxu0 0.0
        %3294 = vmatpush1.msra.mxu0 %v1463
        %3295 = vmatprep.subr.mxu0 0.0
        %3296 = vmatpush1.msra.mxu0 %v1466
        %3297 = vmatprep.mubr.f32.mxu0 %v290
        %3298 = vmatmul.mubr.f32.gmra.mrb[0].mxu0 %v289
        %v3299 = vpop.f32.mrb[0].mxu0
        %v3300 = vadd.f32 %v3225, %v3299
        %v3301 = vpop.f32.mrb[0].mxu0
        %3302 = vmatprep.mubr.f32.mxu0 %v314
        %3303 = vmatmul.mubr.f32.gmra.mrb[0].mxu0 %v313
        %v3304 = vpop.f32.mrb[0].mxu0
        %v3305 = vadd.f32 %v3230, %v3304
        %v3306 = vpop.f32.mrb[0].mxu0
        %3307 = vdwg.mxu0
        %3308 = vst [vmem:[%s261] sm:$0xff] %v2398
        %3309 = vst [vmem:[%s261 + $0x8] sm:$0xff] %v2400
        %3310 = vst [vmem:[%s261 + $0x10] sm:$0xff] %v3300
        %3311 = vst [vmem:[%s261 + $0x18] sm:$0xff] %v2404
        %3312 = vst [vmem:[%s261 + $0x20] sm:$0xff] %v2406
        %3313 = vst [vmem:[%s261 + $0x28] sm:$0xff] %v3305
        %s3314 = sand.u32 %s121, 1
        %s3315 = scalar_lea.sflag [#allocation4], %s3314
        %s3316 = sand.u32 %s121, 1
        %s3317 = smul.addr %s3316, 48
        %s3318 = scalar_lea.vmem [#allocation8], %s3317
        // Predicated region
        $region45: #{tpu_custom_call.1} parent=31 // pred_check
          %p3319 = pneg %p131
        $region46: #{tpu_custom_call.1} parent=31 // pred_check_branch
          %3321 = sbr.rel (%p3319) target = $region48
        $region47: #{tpu_custom_call.1} parent=31 // pred_region
          %s3322 = smul.u32 2, %s26
          %s3323 = smul.u32 3, %s25
          %s3325 = ssub.s32 768, 768
          %3326 = vsyncadd %s3315, %s3325
          %s3327 = smul.addr %s3322, 6
          %s3328 = sadd.s32 %s3323, %s3327
          %s3329 = smul.addr %s3328, 128
          %s3330 = scalar_lea.hbm %s3, %s3329
          %s3331 = sshll.u32 %s3318, 4
          %s3332 = int_to_ptr.vmem [resolvable:$true] %s3331
          %3337 = dma.vmem_to_hbm [thread:$0]  %s3332, 768, %s3330, %s3315, 384, 768, 24
        $region48: #{tpu_custom_call.1} parent=31 // pred_fallthru
          _
      $region32: #{tpu_custom_call.1} parent=5 // pred_fallthru
        _
      %p3338 = scmp.le.s32.totalorder 2, %s16
      // Predicated region
      $region49: #{tpu_custom_call.1} parent=5 // pred_check
        %p3339 = pneg %p3338
      $region50: #{tpu_custom_call.1} parent=5 // pred_check_branch
        %3341 = sbr.rel (%p3339) target = $region52
      $region51: #{tpu_custom_call.1} parent=5 // pred_region
        %s3342 = ssub.s32 %s16, 2
        // Predicated region
        $region53: #{tpu_custom_call.1} parent=51 // pred_check
          %p3343 = pneg %p137
        $region54: #{tpu_custom_call.1} parent=51 // pred_check_branch
          %3345 = sbr.rel (%p3343) target = $region56
        $region55: #{tpu_custom_call.1} parent=51 // pred_region
          %s3346 = sand.u32 %s122, 1
          %s3347 = scalar_lea.sflag [#allocation4], %s3346
          %s3348 = sand.u32 %s122, 1
          %s3349 = smul.addr %s3348, 48
          %s3350 = scalar_lea.vmem [#allocation8], %s3349
          %3351 = dma.done %s3347, 768
        $region56: #{tpu_custom_call.1} parent=51 // pred_fallthru
          _
      $region52: #{tpu_custom_call.1} parent=5 // pred_fallthru
        _
    $region6: #{tpu_custom_call.1} parent=1 // loop_footer
      %s20 = sadd.s32 1, %s16
    $region7: #{tpu_custom_call.1} parent=1 // loop_footer_branch
      %15 = sbr.rel target = $region3
    $region8: #{tpu_custom_call.1} parent=1 // loop_exit
      _
    %3352 = vsyncpa [#allocation3], 1
    %s3353 = scalar_lea.sflag [#allocation3], 1
    %3354 = vsyncpa %s3353, 1
    %3355 = vsyncpa [#allocation6], 1
    %s3356 = scalar_lea.sflag [#allocation6], 1
    %3357 = vsyncpa %s3356, 1
    %3358 = vsyncpa [#allocation4], 1
    %s3359 = scalar_lea.sflag [#allocation4], 1
    %3360 = vsyncpa %s3359, 1

</llo_original>
